<compile_context>
chip_gen: v6e
topology: v6e:2x2x1
jax: 0.10.0
libtpu: 0.0.40
codegen_flags: <defaults>
</compile_context>

<pallas_src>
import functools
import math

import jax
import jax.numpy as jnp
from jax.experimental import pallas as pl
from jax.experimental.pallas import tpu as pltpu

NEG_INF = -1e30            # finite stand-in for -inf (exp underflows to 0, avoids NaN rows)
LN_EPS = 1e-5              # nn.TransformerDecoderLayer default layer_norm_eps
COMPUTE_DTYPE = jnp.bfloat16   # MXU operand dtype; accumulation stays f32

# Inputs split along the batch dim by grid axis 0; per-layer stacks indexed by grid axis 1.
_BATCH_SPLIT = frozenset({"target_embedding", "pe_slice", "z", "tgt_pad", "mem_pad"})
_LAYER_SPLIT = frozenset({"self_wqkv", "self_bqkv", "self_wo", "cross_wq", "cross_wkv",
                          "cross_bkv", "cross_wo", "ff_w1", "ff_b1", "ff_w2", "vecs_d"})


# ----------------------------- in-kernel helpers -----------------------------

def _dot(a, w):
    """MXU matmul: bf16 operands, f32 accumulation."""
    return jnp.dot(a.astype(COMPUTE_DTYPE), w.astype(COMPUTE_DTYPE),
                   preferred_element_type=jnp.float32)


def _erf(x):
    """Polynomial erf (Abramowitz & Stegun 7.1.26), |err| <= 1.5e-7 (~f32 eps)."""
    ax = jnp.abs(x)
    t = 1.0 / (1.0 + 0.3275911 * ax)
    poly = t * (0.254829592 + t * (-0.284496736 + t * (1.421413741
               + t * (-1.453152027 + t * 1.061405429))))
    e = 1.0 - poly * jnp.exp(-ax * ax)
    return jnp.where(x >= 0.0, e, -e)


def _gelu(x):
    # erf-based GELU, matching nn.GELU(); polynomial erf keeps lowering portable.
    return 0.5 * x * (1.0 + _erf(x * 0.7071067811865476))


def _layer_norm(v, g, b):
    """LayerNorm over the last dim (f32). v:(M,D), g,b:(1,D)."""
    mean = jnp.mean(v, axis=-1, keepdims=True)
    var = jnp.mean((v - mean) ** 2, axis=-1, keepdims=True)
    return (v - mean) * jax.lax.rsqrt(var + LN_EPS) * g + b


def _attend(q, k, v, mask_add, wo, bo, *, batch, tq, tk, nhead):
    """MHA core on already-projected q/k/v (q pre-scaled by 1/sqrt(Dh) at pack time).

    q:(batch*tq, D), k/v:(batch*tk, D), mask_add:(batch,tq,tk) additive f32.
    Heads are split by in-register slicing; output projection is ONE (M,D)x(D,D) matmul.
    """
    D = q.shape[-1]
    dh = D // nhead
    outs = []
    # TODO(synk): switch this unrolled head loop to lax.fori_loop for large nhead.
    for h in range(nhead):
        qh = q[:, h * dh:(h + 1) * dh].reshape(batch, tq, dh)
        kh = k[:, h * dh:(h + 1) * dh].reshape(batch, tk, dh)
        vh = v[:, h * dh:(h + 1) * dh].reshape(batch, tk, dh)
        s = jnp.einsum("bqd,bkd->bqk", qh.astype(COMPUTE_DTYPE), kh.astype(COMPUTE_DTYPE),
                       preferred_element_type=jnp.float32) + mask_add
        mx = jnp.max(s, axis=-1, keepdims=True)
        p = jnp.exp(s - mx)
        p = p / jnp.sum(p, axis=-1, keepdims=True)          # exact softmax, f32
        o = jnp.einsum("bqk,bkd->bqd", p.astype(COMPUTE_DTYPE), vh.astype(COMPUTE_DTYPE),
                       preferred_element_type=jnp.float32)
        outs.append(o.reshape(batch * tq, dh))
    concat = jnp.concatenate(outs, axis=-1)                  # (batch*tq, D) head concat
    return _dot(concat, wo) + bo                             # single fused output projection


# ----------------------------- the fused kernel -----------------------------

def _forward_kernel(*refs, names, nhead, num_layers, vae_setting):
    n_in = len(names)
    a = dict(zip(names, refs[:n_in]))
    out_ref = refs[n_in]
    x_sc = refs[n_in + 1]        # (Bb, T, D) activation carried across layer steps
    mem_sc = refs[n_in + 2]      # (Bb, S, D) decoder memory (VAE hidden or z)

    layer = pl.program_id(1)

    # ---- first layer step of each batch block: positional encoding + memory ----
    @pl.when(layer == 0)
    def _init():
        # TODO(synk): positionalEncoding's nn.Dropout(p=0.1) is identity in eval mode.
        x_sc[...] = a["target_embedding"][...] + a["pe_slice"][...]
        z = a["z"][...]
        if vae_setting:
            Bb, S, Zd = z.shape
            zf = z.reshape(Bb * S, Zd)
            h = _gelu(_dot(zf, a["lh1_w"][...]) + a["lh1_b"][...])
            mem = _dot(h, a["lh2_w"][...]) + a["lh2_b"][...]
            mem_sc[...] = mem.reshape(mem_sc.shape)
        else:
            mem_sc[...] = z

    # ---- additive masks: float attn mask + (-inf on padded keys); cheap per-step VPU work
    tgt_add = (a["tgt_mask"][...][None, :, :]
               + jnp.where(a["tgt_pad"][...] > 0.5, NEG_INF, 0.0))
    mem_add = (a["mem_mask"][...][None, :, :]
               + jnp.where(a["mem_pad"][...] > 0.5, NEG_INF, 0.0))

    x = x_sc[...]
    memory = mem_sc[...]
    Bb, T, D = x.shape
    S = memory.shape[1]
    x2 = x.reshape(Bb * T, D)
    m2 = memory.reshape(Bb * S, memory.shape[2])

    vd = a["vecs_d"][0]   # (10, D): [cross_bq*s, self_bo, cross_bo, ff_b2, n1g,n1b,n2g,n2b,n3g,n3b]

    # ---- self-attention: fused (D,3D) QKV projection (q pre-scaled at pack time) ----
    qkv = _dot(x2, a["self_wqkv"][0]) + a["self_bqkv"][0]              # (Bb*T, 3D)
    sa = _attend(qkv[:, :D], qkv[:, D:2 * D], qkv[:, 2 * D:],
                 tgt_add, a["self_wo"][0], vd[1:2],
                 batch=Bb, tq=T, tk=T, nhead=nhead)
    x2 = _layer_norm(x2 + sa, vd[4:5], vd[5:6])

    # ---- cross-attention: (D,D) q on x, fused (D,2D) KV on memory ----
    q = _dot(x2, a["cross_wq"][0]) + vd[0:1]                           # pre-scaled q
    kv = _dot(m2, a["cross_wkv"][0]) + a["cross_bkv"][0]               # (Bb*S, 2D)
    ca = _attend(q, kv[:, :D], kv[:, D:],
                 mem_add, a["cross_wo"][0], vd[2:3],
                 batch=Bb, tq=T, tk=S, nhead=nhead)
    x2 = _layer_norm(x2 + ca, vd[6:7], vd[7:8])

    # ---- feed-forward (relu, dim_feedforward = 4*D) ----
    h = jnp.maximum(_dot(x2, a["ff_w1"][0]) + a["ff_b1"][0], 0.0)
    h = _dot(h, a["ff_w2"][0]) + vd[3:4]
    x2 = _layer_norm(x2 + h, vd[8:9], vd[9:10])

    x_sc[...] = x2.reshape(Bb, T, D)

    # ---- last layer step: vocab head + log_softmax (lane-dense padded vocab) ----
    @pl.when(layer == num_layers - 1)
    def _final():
        if vae_setting:
            g = _gelu(_dot(x2, a["lv1_w"][...]) + a["lv1_b"][...])
            logits = _dot(g, a["lv2_w"][...]) + a["lv2_b"][...]        # (Bb*T, Vp)
            mx = jnp.max(logits, axis=-1, keepdims=True)
            sh = logits - mx
            lse = jnp.log(jnp.sum(jnp.exp(sh), axis=-1, keepdims=True))
            out_ref[...] = (sh - lse).reshape(Bb, T, logits.shape[-1]).astype(out_ref.dtype)
        else:
            out_ref[...] = x2.reshape(Bb, T, D).astype(out_ref.dtype)


# ----------------------------- host-side wrapper -----------------------------

def decoder_transformer_forward(packed_params, z, target_embedding, tgt_mask, mem_mask,
                                tgt_pad_mask, mem_pad_mask, timestamp, *,
                                nhead, vae_setting=True, batch_block=None):
    """Fused Pallas forward of decoderTransformer.forward (eval mode)."""
    B, T, D = target_embedding.shape
    S = z.shape[1]
    num_layers = packed_params["ff_w1"].shape[0]
    if batch_block is None:
        batch_block = B                      # whole batch per step -> matmul M = B*T rows
    if B % batch_block:
        raise ValueError("batch size must be divisible by batch_block")

    ts_len = timestamp.shape[0]
    pe_slice = packed_params["pe"][:ts_len]                  # (ts_len, 1, D)
    if pe_slice.shape[0] == 1:
        pe_slice = jnp.broadcast_to(pe_slice, (B, 1, D))
    elif pe_slice.shape[0] != B:
        raise ValueError("PyTorch quirk: pe[:len(timestamp)] must broadcast over batch "
                         "(len(timestamp) must equal the batch size).")

    inputs = {
        "target_embedding": target_embedding.astype(jnp.float32),
        "pe_slice": pe_slice.astype(jnp.float32),
        "z": z.astype(jnp.float32),
        "tgt_mask": tgt_mask.astype(jnp.float32),
        "mem_mask": mem_mask.astype(jnp.float32),
        "tgt_pad": tgt_pad_mask.reshape(B, 1, T).astype(jnp.float32),
        "mem_pad": mem_pad_mask.reshape(B, 1, S).astype(jnp.float32),
    }
    for k, v in packed_params.items():
        if k == "pe":
            continue
        if not vae_setting and (k.startswith("lh") or k.startswith("lv")):
            continue
        inputs[k] = v

    if vae_setting:
        vocab = packed_params["lv2_w"].shape[1]
        out_dim = ((vocab + 127) // 128) * 128               # lane-dense logits / output store
        if out_dim != vocab:
            inputs["lv2_w"] = jnp.pad(inputs["lv2_w"], ((0, 0), (0, out_dim - vocab)))
            inputs["lv2_b"] = jnp.pad(inputs["lv2_b"], ((0, 0), (0, out_dim - vocab)),
                                      constant_values=NEG_INF)   # padded logits -> prob 0
    else:
        vocab = out_dim = D

    names = tuple(sorted(inputs.keys()))
    leaves = [inputs[k] for k in names]

    def spec_for(name, arr):
        nd = arr.ndim
        shape = tuple(arr.shape)
        if name in _BATCH_SPLIT:
            return pl.BlockSpec((batch_block,) + shape[1:],
                                lambda b, l, _n=nd: (b,) + (0,) * (_n - 1))
        if name in _LAYER_SPLIT:
            # one layer of weights per grid step: bounds VMEM residency (v7x 64 MiB) and
            # overlaps the next layer's weight DMA with this layer's compute.
            return pl.BlockSpec((1,) + shape[1:],
                                lambda b, l, _n=nd: (l,) + (0,) * (_n - 1))
        # shared weights: constant block index -> fetched once, stays VMEM-resident.
        return pl.BlockSpec(shape, lambda b, l, _n=nd: (0,) * _n)

    in_specs = [spec_for(k, inputs[k]) for k in names]
    out_specs = pl.BlockSpec((batch_block, T, out_dim), lambda b, l: (b, 0, 0))
    mem_dim = D if vae_setting else z.shape[2]

    kernel = functools.partial(_forward_kernel, names=names, nhead=nhead,
                               num_layers=num_layers, vae_setting=vae_setting)
    out = pl.pallas_call(
        kernel,
        out_shape=jax.ShapeDtypeStruct((B, T, out_dim), jnp.float32),
        grid=(B // batch_block, num_layers),
        in_specs=in_specs,
        out_specs=out_specs,
        scratch_shapes=[
            pltpu.VMEM((batch_block, T, D), jnp.float32),        # x carried across layers
            pltpu.VMEM((batch_block, S, mem_dim), jnp.float32),  # decoder memory
        ],
        compiler_params=pltpu.CompilerParams(
            # TODO(synk): on v7x, pltpu.CORE_PARALLEL on the batch axis would shard across
            # the two TensorCores; plain "parallel" keeps this portable across generations.
            dimension_semantics=("parallel", "arbitrary"),
            vmem_limit_bytes=32 * 1024 * 1024,
        ),
    )(*leaves)
    return out[..., :vocab] if (vae_setting and out_dim != vocab) else out


# ----------------------------- parameters -----------------------------

def init_params(key, d_model, nhead, latent, vocab, num_layers, max_len=64):
    """PyTorch-layout parameters: weights stored (in, out), y = x @ w + b."""
    keys = iter(jax.random.split(key, 256))

    def w(shape, scale=0.05):
        return scale * jax.random.normal(next(keys), shape, jnp.float32)

    def b(shape):
        return 0.01 * jax.random.normal(next(keys), shape, jnp.float32)

    params = {}
    position = jnp.arange(max_len, dtype=jnp.float32)[:, None]
    div_term = jnp.exp(jnp.arange(0, d_model, 2, dtype=jnp.float32)
                       * (-math.log(10000.0) / d_model))
    pe = jnp.zeros((max_len, d_model), jnp.float32)
    pe = pe.at[:, 0::2].set(jnp.sin(position * div_term))
    pe = pe.at[:, 1::2].set(jnp.cos(position * div_term))
    params["pe"] = pe[:, None, :]                                  # (max_len, 1, d_model)

    params["lh1_w"] = w((latent, d_model // 8)); params["lh1_b"] = b((d_model // 8,))
    params["lh2_w"] = w((d_model // 8, d_model)); params["lh2_b"] = b((d_model,))
    params["lv1_w"] = w((d_model, vocab // 8)); params["lv1_b"] = b((vocab // 8,))
    params["lv2_w"] = w((vocab // 8, vocab)); params["lv2_b"] = b((vocab,))

    layers = []
    for _ in range(num_layers):
        lp = {}
        for name in ("self", "cross"):
            for proj in ("q", "k", "v", "o"):
                lp[f"{name}_w{proj}"] = w((d_model, d_model))
                lp[f"{name}_b{proj}"] = b((d_model,))
        lp["ff_w1"] = w((d_model, 4 * d_model)); lp["ff_b1"] = b((4 * d_model,))
        lp["ff_w2"] = w((4 * d_model, d_model)); lp["ff_b2"] = b((d_model,))
        for n in ("norm1", "norm2", "norm3"):
            lp[f"{n}_g"] = jnp.ones((d_model,), jnp.float32)
            lp[f"{n}_b"] = jnp.zeros((d_model,), jnp.float32)
        layers.append(lp)
    params["layers"] = layers
    return params


def pack_params(params, nhead):
    """One-time host layout transform: fused QKV / KV weights (q pre-scaled by 1/sqrt(Dh)),
    bf16 matmul weights, per-layer stacks for layer streaming, and all (D,)-wide per-layer
    vectors packed into one lane-dense (L, 10, D) slab."""
    layers = params["layers"]
    d_model = layers[0]["self_wq"].shape[0]
    dh = d_model // nhead
    scale = 1.0 / math.sqrt(dh)
    wdt = jnp.bfloat16

    packed = {"pe": params["pe"]}
    for k in ("lh1", "lh2", "lv1", "lv2"):
        packed[f"{k}_w"] = params[f"{k}_w"].astype(wdt)
        packed[f"{k}_b"] = params[f"{k}_b"][None, :].astype(jnp.float32)

    def per_layer(fn):
        return jnp.stack([fn(lp) for lp in layers], axis=0)

    packed["self_wqkv"] = per_layer(lambda lp: jnp.concatenate(
        [lp["self_wq"] * scale, lp["self_wk"], lp["self_wv"]], axis=1)).astype(wdt)
    packed["self_bqkv"] = per_layer(lambda lp: jnp.concatenate(
        [lp["self_bq"] * scale, lp["self_bk"], lp["self_bv"]])[None, :])
    packed["self_wo"] = per_layer(lambda lp: lp["self_wo"]).astype(wdt)
    packed["cross_wq"] = per_layer(lambda lp: lp["cross_wq"] * scale).astype(wdt)
    packed["cross_wkv"] = per_layer(lambda lp: jnp.concatenate(
        [lp["cross_wk"], lp["cross_wv"]], axis=1)).astype(wdt)
    packed["cross_bkv"] = per_layer(lambda lp: jnp.concatenate(
        [lp["cross_bk"], lp["cross_bv"]])[None, :])
    packed["cross_wo"] = per_layer(lambda lp: lp["cross_wo"]).astype(wdt)
    packed["ff_w1"] = per_layer(lambda lp: lp["ff_w1"]).astype(wdt)
    packed["ff_b1"] = per_layer(lambda lp: lp["ff_b1"][None, :])
    packed["ff_w2"] = per_layer(lambda lp: lp["ff_w2"]).astype(wdt)
    packed["vecs_d"] = per_layer(lambda lp: jnp.stack(
        [lp["cross_bq"] * scale, lp["self_bo"], lp["cross_bo"], lp["ff_b2"],
         lp["norm1_g"], lp["norm1_b"], lp["norm2_g"], lp["norm2_b"],
         lp["norm3_g"], lp["norm3_b"]], axis=0))
    return packed


def square_subsequent_mask(sz):
    """Matches generate_square_subsequent_mask: 0 on/below diagonal, -inf above."""
    allowed = jnp.tril(jnp.ones((sz, sz), dtype=bool))
    return jnp.where(allowed, 0.0, NEG_INF).astype(jnp.float32)


# ----------------------------- main -----------------------------

if __name__ == "__main__":
    B, T, S = 2, 8, 8
    d_model, nhead, latent, vocab, num_layers = 32, 4, 16, 64, 2

    key = jax.random.PRNGKey(0)
    kp, kz, kt = jax.random.split(key, 3)
    params = init_params(kp, d_model, nhead, latent, vocab, num_layers)
    packed = pack_params(params, nhead)          # one-time host-side layout transform

    z = jax.random.normal(kz, (B, S, latent), jnp.float32)
    target_embedding = jax.random.normal(kt, (B, T, d_model), jnp.float32)
    tgt_mask = square_subsequent_mask(T)                    # (T, T) additive float mask
    mem_mask = jnp.zeros((T, S), jnp.float32)               # no memory masking
    tgt_pad_mask = jnp.zeros((B, T), dtype=bool)            # no padding
    mem_pad_mask = jnp.zeros((B, S), dtype=bool)            # no padding
    # only timestamp.size(0) is used; it must equal B for the PyTorch pe broadcast quirk
    timestamp = jnp.arange(B)

    fwd = jax.jit(functools.partial(decoder_transformer_forward,
                                    nhead=nhead, vae_setting=True))
    out = fwd(packed, z, target_embedding, tgt_mask, mem_mask,
              tgt_pad_mask, mem_pad_mask, timestamp)
    out = jax.block_until_ready(out)

    assert out.shape == (B, T, vocab), out.shape
    assert bool(jnp.all(jnp.isfinite(out)))
    # log_softmax rows should sum to ~1 in probability space
    assert bool(jnp.allclose(jnp.sum(jnp.exp(out), axis=-1), 1.0, atol=1e-4))
    print("KERNEL_OK")
</pallas_src>

<mosaic_0001>
module attributes {stable_mosaic.version = 11 : i64} {
  func.func @_forward_kernel(%arg0: i32, %arg1: i32, %arg2: memref<1x1x64xf32, #tpu.memory_space<vmem>>, %arg3: memref<1x32x64xbf16, #tpu.memory_space<vmem>>, %arg4: memref<1x32x32xbf16, #tpu.memory_space<vmem>>, %arg5: memref<1x32x32xbf16, #tpu.memory_space<vmem>>, %arg6: memref<1x1x128xf32, #tpu.memory_space<vmem>>, %arg7: memref<1x32x128xbf16, #tpu.memory_space<vmem>>, %arg8: memref<1x128x32xbf16, #tpu.memory_space<vmem>>, %arg9: memref<1x4xf32, #tpu.memory_space<vmem>>, %arg10: memref<16x4xbf16, #tpu.memory_space<vmem>>, %arg11: memref<1x32xf32, #tpu.memory_space<vmem>>, %arg12: memref<4x32xbf16, #tpu.memory_space<vmem>>, %arg13: memref<1x8xf32, #tpu.memory_space<vmem>>, %arg14: memref<32x8xbf16, #tpu.memory_space<vmem>>, %arg15: memref<1x128xf32, #tpu.memory_space<vmem>>, %arg16: memref<8x128xbf16, #tpu.memory_space<vmem>>, %arg17: memref<8x8xf32, #tpu.memory_space<vmem>>, %arg18: memref<2x1x8xf32, #tpu.memory_space<vmem>>, %arg19: memref<2x1x32xf32, #tpu.memory_space<vmem>>, %arg20: memref<1x1x96xf32, #tpu.memory_space<vmem>>, %arg21: memref<1x32x32xbf16, #tpu.memory_space<vmem>>, %arg22: memref<1x32x96xbf16, #tpu.memory_space<vmem>>, %arg23: memref<2x8x32xf32, #tpu.memory_space<vmem>>, %arg24: memref<8x8xf32, #tpu.memory_space<vmem>>, %arg25: memref<2x1x8xf32, #tpu.memory_space<vmem>>, %arg26: memref<1x10x32xf32, #tpu.memory_space<vmem>>, %arg27: memref<2x8x16xf32, #tpu.memory_space<vmem>>, %arg28: memref<2x8x128xf32, #tpu.memory_space<vmem>>, %arg29: memref<2x8x32xf32, #tpu.memory_space<vmem>>, %arg30: memref<2x8x32xf32, #tpu.memory_space<vmem>>) attributes {dimension_semantics = [#tpu.dimension_semantics<parallel>, #tpu.dimension_semantics<arbitrary>], iteration_bounds = array<i64: 1, 2>, scalar_prefetch = 0 : i64, scratch_operands = 2 : i64, tpu.core_type = #tpu.core_type<tc>, window_params = [{transform_indices = @transform_0, window_bounds = array<i64: 1, 1, 64>}, {transform_indices = @transform_1, window_bounds = array<i64: 1, 32, 64>}, {transform_indices = @transform_2, window_bounds = array<i64: 1, 32, 32>}, {transform_indices = @transform_3, window_bounds = array<i64: 1, 32, 32>}, {transform_indices = @transform_4, window_bounds = array<i64: 1, 1, 128>}, {transform_indices = @transform_5, window_bounds = array<i64: 1, 32, 128>}, {transform_indices = @transform_6, window_bounds = array<i64: 1, 128, 32>}, {pipeline_mode = #tpu.pipeline_mode<synchronous>, transform_indices = @transform_7, window_bounds = array<i64: 1, 4>}, {pipeline_mode = #tpu.pipeline_mode<synchronous>, transform_indices = @transform_8, window_bounds = array<i64: 16, 4>}, {pipeline_mode = #tpu.pipeline_mode<synchronous>, transform_indices = @transform_9, window_bounds = array<i64: 1, 32>}, {pipeline_mode = #tpu.pipeline_mode<synchronous>, transform_indices = @transform_10, window_bounds = array<i64: 4, 32>}, {pipeline_mode = #tpu.pipeline_mode<synchronous>, transform_indices = @transform_11, window_bounds = array<i64: 1, 8>}, {pipeline_mode = #tpu.pipeline_mode<synchronous>, transform_indices = @transform_12, window_bounds = array<i64: 32, 8>}, {pipeline_mode = #tpu.pipeline_mode<synchronous>, transform_indices = @transform_13, window_bounds = array<i64: 1, 128>}, {pipeline_mode = #tpu.pipeline_mode<synchronous>, transform_indices = @transform_14, window_bounds = array<i64: 8, 128>}, {pipeline_mode = #tpu.pipeline_mode<synchronous>, transform_indices = @transform_15, window_bounds = array<i64: 8, 8>}, {transform_indices = @transform_16, window_bounds = array<i64: 2, 1, 8>}, {transform_indices = @transform_17, window_bounds = array<i64: 2, 1, 32>}, {transform_indices = @transform_18, window_bounds = array<i64: 1, 1, 96>}, {transform_indices = @transform_19, window_bounds = array<i64: 1, 32, 32>}, {transform_indices = @transform_20, window_bounds = array<i64: 1, 32, 96>}, {transform_indices = @transform_21, window_bounds = array<i64: 2, 8, 32>}, {pipeline_mode = #tpu.pipeline_mode<synchronous>, transform_indices = @transform_22, window_bounds = array<i64: 8, 8>}, {transform_indices = @transform_23, window_bounds = array<i64: 2, 1, 8>}, {transform_indices = @transform_24, window_bounds = array<i64: 1, 10, 32>}, {transform_indices = @transform_25, window_bounds = array<i64: 2, 8, 16>}, {transform_indices = @transform_26, window_bounds = array<i64: 2, 8, 128>}]} {
    %c0_i32 = arith.constant 0 : i32
    %0 = arith.cmpi eq, %arg1, %c0_i32 : i32
    %1 = arith.extui %0 : i1 to i32
    %c0_i32_0 = arith.constant 0 : i32
    %2 = arith.cmpi ne, %1, %c0_i32_0 : i32
    scf.if %2 {
      %c0_113 = arith.constant 0 : index
      %c0_114 = arith.constant 0 : index
      %c0_115 = arith.constant 0 : index
      %356 = vector.load %arg23[%c0_113, %c0_114, %c0_115] : memref<2x8x32xf32, #tpu.memory_space<vmem>>, vector<2x8x32xf32>
      %c0_116 = arith.constant 0 : index
      %c0_117 = arith.constant 0 : index
      %c0_118 = arith.constant 0 : index
      %357 = vector.load %arg19[%c0_116, %c0_117, %c0_118] : memref<2x1x32xf32, #tpu.memory_space<vmem>>, vector<2x1x32xf32>
      %358 = vector.broadcast %357 : vector<2x1x32xf32> to vector<2x8x32xf32>
      %359 = arith.addf %356, %358 : vector<2x8x32xf32>
      %c0_119 = arith.constant 0 : index
      %c0_120 = arith.constant 0 : index
      %c0_121 = arith.constant 0 : index
      %360 = vector.load %arg29[%c0_119, %c0_120, %c0_121] : memref<2x8x32xf32, #tpu.memory_space<vmem>>, vector<2x8x32xf32>
      tpu.vector_store %arg29[%c0_119, %c0_120, %c0_121], %359 {strides = array<i32>} : memref<2x8x32xf32, #tpu.memory_space<vmem>>, vector<2x8x32xf32>,
      %c0_122 = arith.constant 0 : index
      %c0_123 = arith.constant 0 : index
      %c0_124 = arith.constant 0 : index
      %361 = vector.load %arg27[%c0_122, %c0_123, %c0_124] : memref<2x8x16xf32, #tpu.memory_space<vmem>>, vector<2x8x16xf32>
      %362 = vector.shape_cast %361 : vector<2x8x16xf32> to vector<16x16xf32>
      %c0_125 = arith.constant 0 : index
      %c0_126 = arith.constant 0 : index
      %363 = vector.load %arg10[%c0_125, %c0_126] : memref<16x4xbf16, #tpu.memory_space<vmem>>, vector<16x4xbf16>
      %364 = arith.truncf %362 : vector<16x16xf32> to vector<16x16xbf16>
      %cst_127 = arith.constant dense<0.000000e+00> : vector<16x4xf32>
      %365 = tpu.matmul %364, %363, %cst_127 {dimension_numbers = #tpu.dot_dimension_numbers<[1], [0], [0], [1], [0, 0, 1, 1], [], []>} : vector<16x16xbf16>, vector<16x4xbf16>, vector<16x4xf32> -> vector<16x4xf32>
      %c0_128 = arith.constant 0 : index
      %c0_129 = arith.constant 0 : index
      %366 = vector.load %arg9[%c0_128, %c0_129] : memref<1x4xf32, #tpu.memory_space<vmem>>, vector<1x4xf32>
      %367 = vector.broadcast %366 : vector<1x4xf32> to vector<16x4xf32>
      %368 = arith.addf %365, %367 : vector<16x4xf32>
      %cst_130 = arith.constant 5.000000e-01 : f32
      %369 = vector.broadcast %cst_130 : f32 to vector<16x4xf32>
      %370 = arith.mulf %369, %368 : vector<16x4xf32>
      %cst_131 = arith.constant 0.707106769 : f32
      %371 = vector.broadcast %cst_131 : f32 to vector<16x4xf32>
      %372 = arith.mulf %368, %371 : vector<16x4xf32>
      %373 = math.absf %372 : vector<16x4xf32>
      %cst_132 = arith.constant 0.327591091 : f32
      %374 = vector.broadcast %cst_132 : f32 to vector<16x4xf32>
      %375 = arith.mulf %374, %373 : vector<16x4xf32>
      %cst_133 = arith.constant 1.000000e+00 : f32
      %376 = vector.broadcast %cst_133 : f32 to vector<16x4xf32>
      %377 = arith.addf %376, %375 : vector<16x4xf32>
      %cst_134 = arith.constant 1.000000e+00 : f32
      %378 = vector.broadcast %cst_134 : f32 to vector<16x4xf32>
      %379 = arith.divf %378, %377 : vector<16x4xf32>
      %cst_135 = arith.constant 1.06140542 : f32
      %380 = vector.broadcast %cst_135 : f32 to vector<16x4xf32>
      %381 = arith.mulf %379, %380 : vector<16x4xf32>
      %cst_136 = arith.constant -1.45315206 : f32
      %382 = vector.broadcast %cst_136 : f32 to vector<16x4xf32>
      %383 = arith.addf %382, %381 : vector<16x4xf32>
      %384 = arith.mulf %379, %383 : vector<16x4xf32>
      %cst_137 = arith.constant 1.42141378 : f32
      %385 = vector.broadcast %cst_137 : f32 to vector<16x4xf32>
      %386 = arith.addf %385, %384 : vector<16x4xf32>
      %387 = arith.mulf %379, %386 : vector<16x4xf32>
      %cst_138 = arith.constant -0.284496725 : f32
      %388 = vector.broadcast %cst_138 : f32 to vector<16x4xf32>
      %389 = arith.addf %388, %387 : vector<16x4xf32>
      %390 = arith.mulf %379, %389 : vector<16x4xf32>
      %cst_139 = arith.constant 0.254829586 : f32
      %391 = vector.broadcast %cst_139 : f32 to vector<16x4xf32>
      %392 = arith.addf %391, %390 : vector<16x4xf32>
      %393 = arith.mulf %379, %392 : vector<16x4xf32>
      %cst_140 = arith.constant 0.000000e+00 : f32
      %394 = vector.broadcast %cst_140 : f32 to vector<16x4xf32>
      %395 = arith.subf %394, %373 : vector<16x4xf32>
      %396 = arith.mulf %395, %373 : vector<16x4xf32>
      %397 = math.exp %396 : vector<16x4xf32>
      %398 = arith.mulf %393, %397 : vector<16x4xf32>
      %cst_141 = arith.constant 1.000000e+00 : f32
      %399 = vector.broadcast %cst_141 : f32 to vector<16x4xf32>
      %400 = arith.subf %399, %398 : vector<16x4xf32>
      %cst_142 = arith.constant 0.000000e+00 : f32
      %401 = vector.broadcast %cst_142 : f32 to vector<16x4xf32>
      %402 = arith.cmpf oge, %372, %401 : vector<16x4xf32>
      %cst_143 = arith.constant 0.000000e+00 : f32
      %403 = vector.broadcast %cst_143 : f32 to vector<16x4xf32>
      %404 = arith.subf %403, %400 : vector<16x4xf32>
      %405 = arith.select %402, %400, %404 : vector<16x4xi1>, vector<16x4xf32>
      %cst_144 = arith.constant 1.000000e+00 : f32
      %406 = vector.broadcast %cst_144 : f32 to vector<16x4xf32>
      %407 = arith.addf %406, %405 : vector<16x4xf32>
      %408 = arith.mulf %370, %407 : vector<16x4xf32>
      %c0_145 = arith.constant 0 : index
      %c0_146 = arith.constant 0 : index
      %409 = vector.load %arg12[%c0_145, %c0_146] : memref<4x32xbf16, #tpu.memory_space<vmem>>, vector<4x32xbf16>
      %410 = arith.truncf %408 : vector<16x4xf32> to vector<16x4xbf16>
      %cst_147 = arith.constant dense<0.000000e+00> : vector<16x32xf32>
      %411 = tpu.matmul %410, %409, %cst_147 {dimension_numbers = #tpu.dot_dimension_numbers<[1], [0], [0], [1], [0, 0, 1, 1], [], []>} : vector<16x4xbf16>, vector<4x32xbf16>, vector<16x32xf32> -> vector<16x32xf32>
      %c0_148 = arith.constant 0 : index
      %c0_149 = arith.constant 0 : index
      %412 = vector.load %arg11[%c0_148, %c0_149] : memref<1x32xf32, #tpu.memory_space<vmem>>, vector<1x32xf32>
      %413 = vector.broadcast %412 : vector<1x32xf32> to vector<16x32xf32>
      %414 = arith.addf %411, %413 : vector<16x32xf32>
      %415 = vector.shape_cast %414 : vector<16x32xf32> to vector<2x8x32xf32>
      %c0_150 = arith.constant 0 : index
      %c0_151 = arith.constant 0 : index
      %c0_152 = arith.constant 0 : index
      %416 = vector.load %arg30[%c0_150, %c0_151, %c0_152] : memref<2x8x32xf32, #tpu.memory_space<vmem>>, vector<2x8x32xf32>
      tpu.vector_store %arg30[%c0_150, %c0_151, %c0_152], %415 {strides = array<i32>} : memref<2x8x32xf32, #tpu.memory_space<vmem>>, vector<2x8x32xf32>,
    } else {
    }
    %c0 = arith.constant 0 : index
    %c0_1 = arith.constant 0 : index
    %3 = vector.load %arg24[%c0, %c0_1] : memref<8x8xf32, #tpu.memory_space<vmem>>, vector<8x8xf32>
    %4 = vector.shape_cast %3 : vector<8x8xf32> to vector<1x8x8xf32>
    %c0_2 = arith.constant 0 : index
    %c0_3 = arith.constant 0 : index
    %c0_4 = arith.constant 0 : index
    %5 = vector.load %arg25[%c0_2, %c0_3, %c0_4] : memref<2x1x8xf32, #tpu.memory_space<vmem>>, vector<2x1x8xf32>
    %cst = arith.constant 5.000000e-01 : f32
    %6 = vector.broadcast %cst : f32 to vector<2x1x8xf32>
    %7 = arith.cmpf ogt, %5, %6 : vector<2x1x8xf32>
    %cst_5 = arith.constant -1.000000e+30 : f32
    %cst_6 = arith.constant 0.000000e+00 : f32
    %8 = vector.broadcast %cst_5 : f32 to vector<2x1x8xf32>
    %9 = vector.broadcast %cst_6 : f32 to vector<2x1x8xf32>
    %10 = arith.select %7, %8, %9 : vector<2x1x8xi1>, vector<2x1x8xf32>
    %11 = vector.broadcast %4 : vector<1x8x8xf32> to vector<2x8x8xf32>
    %12 = vector.broadcast %10 : vector<2x1x8xf32> to vector<2x8x8xf32>
    %13 = arith.addf %11, %12 : vector<2x8x8xf32>
    %c0_7 = arith.constant 0 : index
    %c0_8 = arith.constant 0 : index
    %14 = vector.load %arg17[%c0_7, %c0_8] : memref<8x8xf32, #tpu.memory_space<vmem>>, vector<8x8xf32>
    %15 = vector.shape_cast %14 : vector<8x8xf32> to vector<1x8x8xf32>
    %c0_9 = arith.constant 0 : index
    %c0_10 = arith.constant 0 : index
    %c0_11 = arith.constant 0 : index
    %16 = vector.load %arg18[%c0_9, %c0_10, %c0_11] : memref<2x1x8xf32, #tpu.memory_space<vmem>>, vector<2x1x8xf32>
    %cst_12 = arith.constant 5.000000e-01 : f32
    %17 = vector.broadcast %cst_12 : f32 to vector<2x1x8xf32>
    %18 = arith.cmpf ogt, %16, %17 : vector<2x1x8xf32>
    %cst_13 = arith.constant -1.000000e+30 : f32
    %cst_14 = arith.constant 0.000000e+00 : f32
    %19 = vector.broadcast %cst_13 : f32 to vector<2x1x8xf32>
    %20 = vector.broadcast %cst_14 : f32 to vector<2x1x8xf32>
    %21 = arith.select %18, %19, %20 : vector<2x1x8xi1>, vector<2x1x8xf32>
    %22 = vector.broadcast %15 : vector<1x8x8xf32> to vector<2x8x8xf32>
    %23 = vector.broadcast %21 : vector<2x1x8xf32> to vector<2x8x8xf32>
    %24 = arith.addf %22, %23 : vector<2x8x8xf32>
    %c0_15 = arith.constant 0 : index
    %c0_16 = arith.constant 0 : index
    %c0_17 = arith.constant 0 : index
    %25 = vector.load %arg29[%c0_15, %c0_16, %c0_17] : memref<2x8x32xf32, #tpu.memory_space<vmem>>, vector<2x8x32xf32>
    %c0_18 = arith.constant 0 : index
    %c0_19 = arith.constant 0 : index
    %c0_20 = arith.constant 0 : index
    %26 = vector.load %arg30[%c0_18, %c0_19, %c0_20] : memref<2x8x32xf32, #tpu.memory_space<vmem>>, vector<2x8x32xf32>
    %27 = vector.shape_cast %25 : vector<2x8x32xf32> to vector<16x32xf32>
    %28 = vector.shape_cast %26 : vector<2x8x32xf32> to vector<16x32xf32>
    %c0_21 = arith.constant 0 : index
    %c0_22 = arith.constant 0 : index
    %c0_23 = arith.constant 0 : index
    %29 = vector.load %arg26[%c0_21, %c0_22, %c0_23] : memref<1x10x32xf32, #tpu.memory_space<vmem>>, vector<1x10x32xf32>
    %30 = vector.shape_cast %29 : vector<1x10x32xf32> to vector<10x32xf32>
    %c0_24 = arith.constant 0 : index
    %c0_25 = arith.constant 0 : index
    %c0_26 = arith.constant 0 : index
    %31 = vector.load %arg22[%c0_24, %c0_25, %c0_26] : memref<1x32x96xbf16, #tpu.memory_space<vmem>>, vector<1x32x96xbf16>
    %32 = vector.shape_cast %31 : vector<1x32x96xbf16> to vector<32x96xbf16>
    %33 = arith.truncf %27 : vector<16x32xf32> to vector<16x32xbf16>
    %cst_27 = arith.constant dense<0.000000e+00> : vector<16x96xf32>
    %34 = tpu.matmul %33, %32, %cst_27 {dimension_numbers = #tpu.dot_dimension_numbers<[1], [0], [0], [1], [0, 0, 1, 1], [], []>} : vector<16x32xbf16>, vector<32x96xbf16>, vector<16x96xf32> -> vector<16x96xf32>
    %c0_28 = arith.constant 0 : index
    %c0_29 = arith.constant 0 : index
    %c0_30 = arith.constant 0 : index
    %35 = vector.load %arg20[%c0_28, %c0_29, %c0_30] : memref<1x1x96xf32, #tpu.memory_space<vmem>>, vector<1x1x96xf32>
    %36 = vector.shape_cast %35 : vector<1x1x96xf32> to vector<1x96xf32>
    %37 = vector.broadcast %36 : vector<1x96xf32> to vector<16x96xf32>
    %38 = arith.addf %34, %37 : vector<16x96xf32>
    %39 = vector.extract_strided_slice %38 {offsets = [0, 0], sizes = [16, 32], strides = [1, 1]} : vector<16x96xf32> to vector<16x32xf32>
    %40 = vector.extract_strided_slice %38 {offsets = [0, 32], sizes = [16, 32], strides = [1, 1]} : vector<16x96xf32> to vector<16x32xf32>
    %41 = vector.extract_strided_slice %38 {offsets = [0, 64], sizes = [16, 32], strides = [1, 1]} : vector<16x96xf32> to vector<16x32xf32>
    %c0_31 = arith.constant 0 : index
    %c0_32 = arith.constant 0 : index
    %c0_33 = arith.constant 0 : index
    %42 = vector.load %arg21[%c0_31, %c0_32, %c0_33] : memref<1x32x32xbf16, #tpu.memory_space<vmem>>, vector<1x32x32xbf16>
    %43 = vector.shape_cast %42 : vector<1x32x32xbf16> to vector<32x32xbf16>
    %44 = vector.extract_strided_slice %30 {offsets = [1, 0], sizes = [1, 32], strides = [1, 1]} : vector<10x32xf32> to vector<1x32xf32>
    %45 = vector.extract_strided_slice %39 {offsets = [0, 0], sizes = [16, 8], strides = [1, 1]} : vector<16x32xf32> to vector<16x8xf32>
    %46 = vector.shape_cast %45 : vector<16x8xf32> to vector<2x8x8xf32>
    %47 = vector.extract_strided_slice %40 {offsets = [0, 0], sizes = [16, 8], strides = [1, 1]} : vector<16x32xf32> to vector<16x8xf32>
    %48 = vector.shape_cast %47 : vector<16x8xf32> to vector<2x8x8xf32>
    %49 = vector.extract_strided_slice %41 {offsets = [0, 0], sizes = [16, 8], strides = [1, 1]} : vector<16x32xf32> to vector<16x8xf32>
    %50 = vector.shape_cast %49 : vector<16x8xf32> to vector<2x8x8xf32>
    %51 = arith.truncf %46 : vector<2x8x8xf32> to vector<2x8x8xbf16>
    %52 = arith.truncf %48 : vector<2x8x8xf32> to vector<2x8x8xbf16>
    "tpu.trace_start"() <{level = 10 : i32, message = "bqd,bkd->bqk"}> : () -> ()
    %cst_34 = arith.constant dense<0.000000e+00> : vector<2x8x8xf32>
    %53 = tpu.matmul %51, %52, %cst_34 {dimension_numbers = #tpu.dot_dimension_numbers<[2], [2], [1], [1], [0, 0, 0, 1, 1, 1], [0], [0]>} : vector<2x8x8xbf16>, vector<2x8x8xbf16>, vector<2x8x8xf32> -> vector<2x8x8xf32>
    "tpu.trace_stop"() : () -> ()
    %54 = arith.addf %53, %13 : vector<2x8x8xf32>
    %cst_35 = arith.constant dense<0xFF800000> : vector<2x8xf32>
    %55 = vector.multi_reduction <maximumf>, %54, %cst_35 [2] : vector<2x8x8xf32> to vector<2x8xf32>
    %56 = vector.shape_cast %55 : vector<2x8xf32> to vector<2x8x1xf32>
    %57 = vector.broadcast %56 : vector<2x8x1xf32> to vector<2x8x8xf32>
    %58 = arith.subf %54, %57 : vector<2x8x8xf32>
    %59 = math.exp %58 : vector<2x8x8xf32>
    %cst_36 = arith.constant dense<0.000000e+00> : vector<2x8xf32>
    %60 = vector.multi_reduction <add>, %59, %cst_36 [2] : vector<2x8x8xf32> to vector<2x8xf32>
    %61 = vector.shape_cast %60 : vector<2x8xf32> to vector<2x8x1xf32>
    %62 = vector.broadcast %61 : vector<2x8x1xf32> to vector<2x8x8xf32>
    %63 = arith.divf %59, %62 : vector<2x8x8xf32>
    %64 = arith.truncf %63 : vector<2x8x8xf32> to vector<2x8x8xbf16>
    %65 = arith.truncf %50 : vector<2x8x8xf32> to vector<2x8x8xbf16>
    "tpu.trace_start"() <{level = 10 : i32, message = "bqk,bkd->bqd"}> : () -> ()
    %cst_37 = arith.constant dense<0.000000e+00> : vector<2x8x8xf32>
    %66 = tpu.matmul %64, %65, %cst_37 {dimension_numbers = #tpu.dot_dimension_numbers<[2], [1], [1], [2], [0, 0, 0, 1, 1, 2], [0], [0]>} : vector<2x8x8xbf16>, vector<2x8x8xbf16>, vector<2x8x8xf32> -> vector<2x8x8xf32>
    "tpu.trace_stop"() : () -> ()
    %67 = vector.shape_cast %66 : vector<2x8x8xf32> to vector<16x8xf32>
    %68 = vector.extract_strided_slice %39 {offsets = [0, 8], sizes = [16, 8], strides = [1, 1]} : vector<16x32xf32> to vector<16x8xf32>
    %69 = vector.shape_cast %68 : vector<16x8xf32> to vector<2x8x8xf32>
    %70 = vector.extract_strided_slice %40 {offsets = [0, 8], sizes = [16, 8], strides = [1, 1]} : vector<16x32xf32> to vector<16x8xf32>
    %71 = vector.shape_cast %70 : vector<16x8xf32> to vector<2x8x8xf32>
    %72 = vector.extract_strided_slice %41 {offsets = [0, 8], sizes = [16, 8], strides = [1, 1]} : vector<16x32xf32> to vector<16x8xf32>
    %73 = vector.shape_cast %72 : vector<16x8xf32> to vector<2x8x8xf32>
    %74 = arith.truncf %69 : vector<2x8x8xf32> to vector<2x8x8xbf16>
    %75 = arith.truncf %71 : vector<2x8x8xf32> to vector<2x8x8xbf16>
    "tpu.trace_start"() <{level = 10 : i32, message = "bqd,bkd->bqk"}> : () -> ()
    %cst_38 = arith.constant dense<0.000000e+00> : vector<2x8x8xf32>
    %76 = tpu.matmul %74, %75, %cst_38 {dimension_numbers = #tpu.dot_dimension_numbers<[2], [2], [1], [1], [0, 0, 0, 1, 1, 1], [0], [0]>} : vector<2x8x8xbf16>, vector<2x8x8xbf16>, vector<2x8x8xf32> -> vector<2x8x8xf32>
    "tpu.trace_stop"() : () -> ()
    %77 = arith.addf %76, %13 : vector<2x8x8xf32>
    %cst_39 = arith.constant dense<0xFF800000> : vector<2x8xf32>
    %78 = vector.multi_reduction <maximumf>, %77, %cst_39 [2] : vector<2x8x8xf32> to vector<2x8xf32>
    %79 = vector.shape_cast %78 : vector<2x8xf32> to vector<2x8x1xf32>
    %80 = vector.broadcast %79 : vector<2x8x1xf32> to vector<2x8x8xf32>
    %81 = arith.subf %77, %80 : vector<2x8x8xf32>
    %82 = math.exp %81 : vector<2x8x8xf32>
    %cst_40 = arith.constant dense<0.000000e+00> : vector<2x8xf32>
    %83 = vector.multi_reduction <add>, %82, %cst_40 [2] : vector<2x8x8xf32> to vector<2x8xf32>
    %84 = vector.shape_cast %83 : vector<2x8xf32> to vector<2x8x1xf32>
    %85 = vector.broadcast %84 : vector<2x8x1xf32> to vector<2x8x8xf32>
    %86 = arith.divf %82, %85 : vector<2x8x8xf32>
    %87 = arith.truncf %86 : vector<2x8x8xf32> to vector<2x8x8xbf16>
    %88 = arith.truncf %73 : vector<2x8x8xf32> to vector<2x8x8xbf16>
    "tpu.trace_start"() <{level = 10 : i32, message = "bqk,bkd->bqd"}> : () -> ()
    %cst_41 = arith.constant dense<0.000000e+00> : vector<2x8x8xf32>
    %89 = tpu.matmul %87, %88, %cst_41 {dimension_numbers = #tpu.dot_dimension_numbers<[2], [1], [1], [2], [0, 0, 0, 1, 1, 2], [0], [0]>} : vector<2x8x8xbf16>, vector<2x8x8xbf16>, vector<2x8x8xf32> -> vector<2x8x8xf32>
    "tpu.trace_stop"() : () -> ()
    %90 = vector.shape_cast %89 : vector<2x8x8xf32> to vector<16x8xf32>
    %91 = vector.extract_strided_slice %39 {offsets = [0, 16], sizes = [16, 8], strides = [1, 1]} : vector<16x32xf32> to vector<16x8xf32>
    %92 = vector.shape_cast %91 : vector<16x8xf32> to vector<2x8x8xf32>
    %93 = vector.extract_strided_slice %40 {offsets = [0, 16], sizes = [16, 8], strides = [1, 1]} : vector<16x32xf32> to vector<16x8xf32>
    %94 = vector.shape_cast %93 : vector<16x8xf32> to vector<2x8x8xf32>
    %95 = vector.extract_strided_slice %41 {offsets = [0, 16], sizes = [16, 8], strides = [1, 1]} : vector<16x32xf32> to vector<16x8xf32>
    %96 = vector.shape_cast %95 : vector<16x8xf32> to vector<2x8x8xf32>
    %97 = arith.truncf %92 : vector<2x8x8xf32> to vector<2x8x8xbf16>
    %98 = arith.truncf %94 : vector<2x8x8xf32> to vector<2x8x8xbf16>
    "tpu.trace_start"() <{level = 10 : i32, message = "bqd,bkd->bqk"}> : () -> ()
    %cst_42 = arith.constant dense<0.000000e+00> : vector<2x8x8xf32>
    %99 = tpu.matmul %97, %98, %cst_42 {dimension_numbers = #tpu.dot_dimension_numbers<[2], [2], [1], [1], [0, 0, 0, 1, 1, 1], [0], [0]>} : vector<2x8x8xbf16>, vector<2x8x8xbf16>, vector<2x8x8xf32> -> vector<2x8x8xf32>
    "tpu.trace_stop"() : () -> ()
    %100 = arith.addf %99, %13 : vector<2x8x8xf32>
    %cst_43 = arith.constant dense<0xFF800000> : vector<2x8xf32>
    %101 = vector.multi_reduction <maximumf>, %100, %cst_43 [2] : vector<2x8x8xf32> to vector<2x8xf32>
    %102 = vector.shape_cast %101 : vector<2x8xf32> to vector<2x8x1xf32>
    %103 = vector.broadcast %102 : vector<2x8x1xf32> to vector<2x8x8xf32>
    %104 = arith.subf %100, %103 : vector<2x8x8xf32>
    %105 = math.exp %104 : vector<2x8x8xf32>
    %cst_44 = arith.constant dense<0.000000e+00> : vector<2x8xf32>
    %106 = vector.multi_reduction <add>, %105, %cst_44 [2] : vector<2x8x8xf32> to vector<2x8xf32>
    %107 = vector.shape_cast %106 : vector<2x8xf32> to vector<2x8x1xf32>
    %108 = vector.broadcast %107 : vector<2x8x1xf32> to vector<2x8x8xf32>
    %109 = arith.divf %105, %108 : vector<2x8x8xf32>
    %110 = arith.truncf %109 : vector<2x8x8xf32> to vector<2x8x8xbf16>
    %111 = arith.truncf %96 : vector<2x8x8xf32> to vector<2x8x8xbf16>
    "tpu.trace_start"() <{level = 10 : i32, message = "bqk,bkd->bqd"}> : () -> ()
    %cst_45 = arith.constant dense<0.000000e+00> : vector<2x8x8xf32>
    %112 = tpu.matmul %110, %111, %cst_45 {dimension_numbers = #tpu.dot_dimension_numbers<[2], [1], [1], [2], [0, 0, 0, 1, 1, 2], [0], [0]>} : vector<2x8x8xbf16>, vector<2x8x8xbf16>, vector<2x8x8xf32> -> vector<2x8x8xf32>
    "tpu.trace_stop"() : () -> ()
    %113 = vector.shape_cast %112 : vector<2x8x8xf32> to vector<16x8xf32>
    %114 = vector.extract_strided_slice %39 {offsets = [0, 24], sizes = [16, 8], strides = [1, 1]} : vector<16x32xf32> to vector<16x8xf32>
    %115 = vector.shape_cast %114 : vector<16x8xf32> to vector<2x8x8xf32>
    %116 = vector.extract_strided_slice %40 {offsets = [0, 24], sizes = [16, 8], strides = [1, 1]} : vector<16x32xf32> to vector<16x8xf32>
    %117 = vector.shape_cast %116 : vector<16x8xf32> to vector<2x8x8xf32>
    %118 = vector.extract_strided_slice %41 {offsets = [0, 24], sizes = [16, 8], strides = [1, 1]} : vector<16x32xf32> to vector<16x8xf32>
    %119 = vector.shape_cast %118 : vector<16x8xf32> to vector<2x8x8xf32>
    %120 = arith.truncf %115 : vector<2x8x8xf32> to vector<2x8x8xbf16>
    %121 = arith.truncf %117 : vector<2x8x8xf32> to vector<2x8x8xbf16>
    "tpu.trace_start"() <{level = 10 : i32, message = "bqd,bkd->bqk"}> : () -> ()
    %cst_46 = arith.constant dense<0.000000e+00> : vector<2x8x8xf32>
    %122 = tpu.matmul %120, %121, %cst_46 {dimension_numbers = #tpu.dot_dimension_numbers<[2], [2], [1], [1], [0, 0, 0, 1, 1, 1], [0], [0]>} : vector<2x8x8xbf16>, vector<2x8x8xbf16>, vector<2x8x8xf32> -> vector<2x8x8xf32>
    "tpu.trace_stop"() : () -> ()
    %123 = arith.addf %122, %13 : vector<2x8x8xf32>
    %cst_47 = arith.constant dense<0xFF800000> : vector<2x8xf32>
    %124 = vector.multi_reduction <maximumf>, %123, %cst_47 [2] : vector<2x8x8xf32> to vector<2x8xf32>
    %125 = vector.shape_cast %124 : vector<2x8xf32> to vector<2x8x1xf32>
    %126 = vector.broadcast %125 : vector<2x8x1xf32> to vector<2x8x8xf32>
    %127 = arith.subf %123, %126 : vector<2x8x8xf32>
    %128 = math.exp %127 : vector<2x8x8xf32>
    %cst_48 = arith.constant dense<0.000000e+00> : vector<2x8xf32>
    %129 = vector.multi_reduction <add>, %128, %cst_48 [2] : vector<2x8x8xf32> to vector<2x8xf32>
    %130 = vector.shape_cast %129 : vector<2x8xf32> to vector<2x8x1xf32>
    %131 = vector.broadcast %130 : vector<2x8x1xf32> to vector<2x8x8xf32>
    %132 = arith.divf %128, %131 : vector<2x8x8xf32>
    %133 = arith.truncf %132 : vector<2x8x8xf32> to vector<2x8x8xbf16>
    %134 = arith.truncf %119 : vector<2x8x8xf32> to vector<2x8x8xbf16>
    "tpu.trace_start"() <{level = 10 : i32, message = "bqk,bkd->bqd"}> : () -> ()
    %cst_49 = arith.constant dense<0.000000e+00> : vector<2x8x8xf32>
    %135 = tpu.matmul %133, %134, %cst_49 {dimension_numbers = #tpu.dot_dimension_numbers<[2], [1], [1], [2], [0, 0, 0, 1, 1, 2], [0], [0]>} : vector<2x8x8xbf16>, vector<2x8x8xbf16>, vector<2x8x8xf32> -> vector<2x8x8xf32>
    "tpu.trace_stop"() : () -> ()
    %136 = vector.shape_cast %135 : vector<2x8x8xf32> to vector<16x8xf32>
    %137 = tpu.concatenate %67, %90, %113, %136 in 1 : vector<16x8xf32>, vector<16x8xf32>, vector<16x8xf32>, vector<16x8xf32> -> vector<16x32xf32>
    %138 = arith.truncf %137 : vector<16x32xf32> to vector<16x32xbf16>
    %cst_50 = arith.constant dense<0.000000e+00> : vector<16x32xf32>
    %139 = tpu.matmul %138, %43, %cst_50 {dimension_numbers = #tpu.dot_dimension_numbers<[1], [0], [0], [1], [0, 0, 1, 1], [], []>} : vector<16x32xbf16>, vector<32x32xbf16>, vector<16x32xf32> -> vector<16x32xf32>
    %140 = vector.broadcast %44 : vector<1x32xf32> to vector<16x32xf32>
    %141 = arith.addf %139, %140 : vector<16x32xf32>
    %142 = arith.addf %27, %141 : vector<16x32xf32>
    %143 = vector.extract_strided_slice %30 {offsets = [4, 0], sizes = [1, 32], strides = [1, 1]} : vector<10x32xf32> to vector<1x32xf32>
    %144 = vector.extract_strided_slice %30 {offsets = [5, 0], sizes = [1, 32], strides = [1, 1]} : vector<10x32xf32> to vector<1x32xf32>
    %cst_51 = arith.constant dense<0.000000e+00> : vector<16xf32>
    %145 = vector.multi_reduction <add>, %142, %cst_51 [1] : vector<16x32xf32> to vector<16xf32>
    %146 = vector.shape_cast %145 : vector<16xf32> to vector<16x1xf32>
    %cst_52 = arith.constant 3.200000e+01 : f32
    %147 = vector.broadcast %cst_52 : f32 to vector<16x1xf32>
    %148 = arith.divf %146, %147 : vector<16x1xf32>
    %149 = vector.broadcast %148 : vector<16x1xf32> to vector<16x32xf32>
    %150 = arith.subf %142, %149 : vector<16x32xf32>
    %151 = arith.mulf %150, %150 : vector<16x32xf32>
    %cst_53 = arith.constant dense<0.000000e+00> : vector<16xf32>
    %152 = vector.multi_reduction <add>, %151, %cst_53 [1] : vector<16x32xf32> to vector<16xf32>
    %153 = vector.shape_cast %152 : vector<16xf32> to vector<16x1xf32>
    %cst_54 = arith.constant 3.200000e+01 : f32
    %154 = vector.broadcast %cst_54 : f32 to vector<16x1xf32>
    %155 = arith.divf %153, %154 : vector<16x1xf32>
    %156 = vector.broadcast %148 : vector<16x1xf32> to vector<16x32xf32>
    %157 = arith.subf %142, %156 : vector<16x32xf32>
    %cst_55 = arith.constant 9.99999974E-6 : f32
    %158 = vector.broadcast %cst_55 : f32 to vector<16x1xf32>
    %159 = arith.addf %155, %158 : vector<16x1xf32>
    %160 = math.rsqrt %159 : vector<16x1xf32>
    %161 = vector.broadcast %160 : vector<16x1xf32> to vector<16x32xf32>
    %162 = arith.mulf %157, %161 : vector<16x32xf32>
    %163 = vector.broadcast %143 : vector<1x32xf32> to vector<16x32xf32>
    %164 = arith.mulf %162, %163 : vector<16x32xf32>
    %165 = vector.broadcast %144 : vector<1x32xf32> to vector<16x32xf32>
    %166 = arith.addf %164, %165 : vector<16x32xf32>
    %c0_56 = arith.constant 0 : index
    %c0_57 = arith.constant 0 : index
    %c0_58 = arith.constant 0 : index
    %167 = vector.load %arg5[%c0_56, %c0_57, %c0_58] : memref<1x32x32xbf16, #tpu.memory_space<vmem>>, vector<1x32x32xbf16>
    %168 = vector.shape_cast %167 : vector<1x32x32xbf16> to vector<32x32xbf16>
    %169 = arith.truncf %166 : vector<16x32xf32> to vector<16x32xbf16>
    %cst_59 = arith.constant dense<0.000000e+00> : vector<16x32xf32>
    %170 = tpu.matmul %169, %168, %cst_59 {dimension_numbers = #tpu.dot_dimension_numbers<[1], [0], [0], [1], [0, 0, 1, 1], [], []>} : vector<16x32xbf16>, vector<32x32xbf16>, vector<16x32xf32> -> vector<16x32xf32>
    %171 = vector.extract_strided_slice %30 {offsets = [0, 0], sizes = [1, 32], strides = [1, 1]} : vector<10x32xf32> to vector<1x32xf32>
    %172 = vector.broadcast %171 : vector<1x32xf32> to vector<16x32xf32>
    %173 = arith.addf %170, %172 : vector<16x32xf32>
    %c0_60 = arith.constant 0 : index
    %c0_61 = arith.constant 0 : index
    %c0_62 = arith.constant 0 : index
    %174 = vector.load %arg3[%c0_60, %c0_61, %c0_62] : memref<1x32x64xbf16, #tpu.memory_space<vmem>>, vector<1x32x64xbf16>
    %175 = vector.shape_cast %174 : vector<1x32x64xbf16> to vector<32x64xbf16>
    %176 = arith.truncf %28 : vector<16x32xf32> to vector<16x32xbf16>
    %cst_63 = arith.constant dense<0.000000e+00> : vector<16x64xf32>
    %177 = tpu.matmul %176, %175, %cst_63 {dimension_numbers = #tpu.dot_dimension_numbers<[1], [0], [0], [1], [0, 0, 1, 1], [], []>} : vector<16x32xbf16>, vector<32x64xbf16>, vector<16x64xf32> -> vector<16x64xf32>
    %c0_64 = arith.constant 0 : index
    %c0_65 = arith.constant 0 : index
    %c0_66 = arith.constant 0 : index
    %178 = vector.load %arg2[%c0_64, %c0_65, %c0_66] : memref<1x1x64xf32, #tpu.memory_space<vmem>>, vector<1x1x64xf32>
    %179 = vector.shape_cast %178 : vector<1x1x64xf32> to vector<1x64xf32>
    %180 = vector.broadcast %179 : vector<1x64xf32> to vector<16x64xf32>
    %181 = arith.addf %177, %180 : vector<16x64xf32>
    %182 = vector.extract_strided_slice %181 {offsets = [0, 0], sizes = [16, 32], strides = [1, 1]} : vector<16x64xf32> to vector<16x32xf32>
    %183 = vector.extract_strided_slice %181 {offsets = [0, 32], sizes = [16, 32], strides = [1, 1]} : vector<16x64xf32> to vector<16x32xf32>
    %c0_67 = arith.constant 0 : index
    %c0_68 = arith.constant 0 : index
    %c0_69 = arith.constant 0 : index
    %184 = vector.load %arg4[%c0_67, %c0_68, %c0_69] : memref<1x32x32xbf16, #tpu.memory_space<vmem>>, vector<1x32x32xbf16>
    %185 = vector.shape_cast %184 : vector<1x32x32xbf16> to vector<32x32xbf16>
    %186 = vector.extract_strided_slice %30 {offsets = [2, 0], sizes = [1, 32], strides = [1, 1]} : vector<10x32xf32> to vector<1x32xf32>
    %187 = vector.extract_strided_slice %173 {offsets = [0, 0], sizes = [16, 8], strides = [1, 1]} : vector<16x32xf32> to vector<16x8xf32>
    %188 = vector.shape_cast %187 : vector<16x8xf32> to vector<2x8x8xf32>
    %189 = vector.extract_strided_slice %182 {offsets = [0, 0], sizes = [16, 8], strides = [1, 1]} : vector<16x32xf32> to vector<16x8xf32>
    %190 = vector.shape_cast %189 : vector<16x8xf32> to vector<2x8x8xf32>
    %191 = vector.extract_strided_slice %183 {offsets = [0, 0], sizes = [16, 8], strides = [1, 1]} : vector<16x32xf32> to vector<16x8xf32>
    %192 = vector.shape_cast %191 : vector<16x8xf32> to vector<2x8x8xf32>
    %193 = arith.truncf %188 : vector<2x8x8xf32> to vector<2x8x8xbf16>
    %194 = arith.truncf %190 : vector<2x8x8xf32> to vector<2x8x8xbf16>
    "tpu.trace_start"() <{level = 10 : i32, message = "bqd,bkd->bqk"}> : () -> ()
    %cst_70 = arith.constant dense<0.000000e+00> : vector<2x8x8xf32>
    %195 = tpu.matmul %193, %194, %cst_70 {dimension_numbers = #tpu.dot_dimension_numbers<[2], [2], [1], [1], [0, 0, 0, 1, 1, 1], [0], [0]>} : vector<2x8x8xbf16>, vector<2x8x8xbf16>, vector<2x8x8xf32> -> vector<2x8x8xf32>
    "tpu.trace_stop"() : () -> ()
    %196 = arith.addf %195, %24 : vector<2x8x8xf32>
    %cst_71 = arith.constant dense<0xFF800000> : vector<2x8xf32>
    %197 = vector.multi_reduction <maximumf>, %196, %cst_71 [2] : vector<2x8x8xf32> to vector<2x8xf32>
    %198 = vector.shape_cast %197 : vector<2x8xf32> to vector<2x8x1xf32>
    %199 = vector.broadcast %198 : vector<2x8x1xf32> to vector<2x8x8xf32>
    %200 = arith.subf %196, %199 : vector<2x8x8xf32>
    %201 = math.exp %200 : vector<2x8x8xf32>
    %cst_72 = arith.constant dense<0.000000e+00> : vector<2x8xf32>
    %202 = vector.multi_reduction <add>, %201, %cst_72 [2] : vector<2x8x8xf32> to vector<2x8xf32>
    %203 = vector.shape_cast %202 : vector<2x8xf32> to vector<2x8x1xf32>
    %204 = vector.broadcast %203 : vector<2x8x1xf32> to vector<2x8x8xf32>
    %205 = arith.divf %201, %204 : vector<2x8x8xf32>
    %206 = arith.truncf %205 : vector<2x8x8xf32> to vector<2x8x8xbf16>
    %207 = arith.truncf %192 : vector<2x8x8xf32> to vector<2x8x8xbf16>
    "tpu.trace_start"() <{level = 10 : i32, message = "bqk,bkd->bqd"}> : () -> ()
    %cst_73 = arith.constant dense<0.000000e+00> : vector<2x8x8xf32>
    %208 = tpu.matmul %206, %207, %cst_73 {dimension_numbers = #tpu.dot_dimension_numbers<[2], [1], [1], [2], [0, 0, 0, 1, 1, 2], [0], [0]>} : vector<2x8x8xbf16>, vector<2x8x8xbf16>, vector<2x8x8xf32> -> vector<2x8x8xf32>
    "tpu.trace_stop"() : () -> ()
    %209 = vector.shape_cast %208 : vector<2x8x8xf32> to vector<16x8xf32>
    %210 = vector.extract_strided_slice %173 {offsets = [0, 8], sizes = [16, 8], strides = [1, 1]} : vector<16x32xf32> to vector<16x8xf32>
    %211 = vector.shape_cast %210 : vector<16x8xf32> to vector<2x8x8xf32>
    %212 = vector.extract_strided_slice %182 {offsets = [0, 8], sizes = [16, 8], strides = [1, 1]} : vector<16x32xf32> to vector<16x8xf32>
    %213 = vector.shape_cast %212 : vector<16x8xf32> to vector<2x8x8xf32>
    %214 = vector.extract_strided_slice %183 {offsets = [0, 8], sizes = [16, 8], strides = [1, 1]} : vector<16x32xf32> to vector<16x8xf32>
    %215 = vector.shape_cast %214 : vector<16x8xf32> to vector<2x8x8xf32>
    %216 = arith.truncf %211 : vector<2x8x8xf32> to vector<2x8x8xbf16>
    %217 = arith.truncf %213 : vector<2x8x8xf32> to vector<2x8x8xbf16>
    "tpu.trace_start"() <{level = 10 : i32, message = "bqd,bkd->bqk"}> : () -> ()
    %cst_74 = arith.constant dense<0.000000e+00> : vector<2x8x8xf32>
    %218 = tpu.matmul %216, %217, %cst_74 {dimension_numbers = #tpu.dot_dimension_numbers<[2], [2], [1], [1], [0, 0, 0, 1, 1, 1], [0], [0]>} : vector<2x8x8xbf16>, vector<2x8x8xbf16>, vector<2x8x8xf32> -> vector<2x8x8xf32>
    "tpu.trace_stop"() : () -> ()
    %219 = arith.addf %218, %24 : vector<2x8x8xf32>
    %cst_75 = arith.constant dense<0xFF800000> : vector<2x8xf32>
    %220 = vector.multi_reduction <maximumf>, %219, %cst_75 [2] : vector<2x8x8xf32> to vector<2x8xf32>
    %221 = vector.shape_cast %220 : vector<2x8xf32> to vector<2x8x1xf32>
    %222 = vector.broadcast %221 : vector<2x8x1xf32> to vector<2x8x8xf32>
    %223 = arith.subf %219, %222 : vector<2x8x8xf32>
    %224 = math.exp %223 : vector<2x8x8xf32>
    %cst_76 = arith.constant dense<0.000000e+00> : vector<2x8xf32>
    %225 = vector.multi_reduction <add>, %224, %cst_76 [2] : vector<2x8x8xf32> to vector<2x8xf32>
    %226 = vector.shape_cast %225 : vector<2x8xf32> to vector<2x8x1xf32>
    %227 = vector.broadcast %226 : vector<2x8x1xf32> to vector<2x8x8xf32>
    %228 = arith.divf %224, %227 : vector<2x8x8xf32>
    %229 = arith.truncf %228 : vector<2x8x8xf32> to vector<2x8x8xbf16>
    %230 = arith.truncf %215 : vector<2x8x8xf32> to vector<2x8x8xbf16>
    "tpu.trace_start"() <{level = 10 : i32, message = "bqk,bkd->bqd"}> : () -> ()
    %cst_77 = arith.constant dense<0.000000e+00> : vector<2x8x8xf32>
    %231 = tpu.matmul %229, %230, %cst_77 {dimension_numbers = #tpu.dot_dimension_numbers<[2], [1], [1], [2], [0, 0, 0, 1, 1, 2], [0], [0]>} : vector<2x8x8xbf16>, vector<2x8x8xbf16>, vector<2x8x8xf32> -> vector<2x8x8xf32>
    "tpu.trace_stop"() : () -> ()
    %232 = vector.shape_cast %231 : vector<2x8x8xf32> to vector<16x8xf32>
    %233 = vector.extract_strided_slice %173 {offsets = [0, 16], sizes = [16, 8], strides = [1, 1]} : vector<16x32xf32> to vector<16x8xf32>
    %234 = vector.shape_cast %233 : vector<16x8xf32> to vector<2x8x8xf32>
    %235 = vector.extract_strided_slice %182 {offsets = [0, 16], sizes = [16, 8], strides = [1, 1]} : vector<16x32xf32> to vector<16x8xf32>
    %236 = vector.shape_cast %235 : vector<16x8xf32> to vector<2x8x8xf32>
    %237 = vector.extract_strided_slice %183 {offsets = [0, 16], sizes = [16, 8], strides = [1, 1]} : vector<16x32xf32> to vector<16x8xf32>
    %238 = vector.shape_cast %237 : vector<16x8xf32> to vector<2x8x8xf32>
    %239 = arith.truncf %234 : vector<2x8x8xf32> to vector<2x8x8xbf16>
    %240 = arith.truncf %236 : vector<2x8x8xf32> to vector<2x8x8xbf16>
    "tpu.trace_start"() <{level = 10 : i32, message = "bqd,bkd->bqk"}> : () -> ()
    %cst_78 = arith.constant dense<0.000000e+00> : vector<2x8x8xf32>
    %241 = tpu.matmul %239, %240, %cst_78 {dimension_numbers = #tpu.dot_dimension_numbers<[2], [2], [1], [1], [0, 0, 0, 1, 1, 1], [0], [0]>} : vector<2x8x8xbf16>, vector<2x8x8xbf16>, vector<2x8x8xf32> -> vector<2x8x8xf32>
    "tpu.trace_stop"() : () -> ()
    %242 = arith.addf %241, %24 : vector<2x8x8xf32>
    %cst_79 = arith.constant dense<0xFF800000> : vector<2x8xf32>
    %243 = vector.multi_reduction <maximumf>, %242, %cst_79 [2] : vector<2x8x8xf32> to vector<2x8xf32>
    %244 = vector.shape_cast %243 : vector<2x8xf32> to vector<2x8x1xf32>
    %245 = vector.broadcast %244 : vector<2x8x1xf32> to vector<2x8x8xf32>
    %246 = arith.subf %242, %245 : vector<2x8x8xf32>
    %247 = math.exp %246 : vector<2x8x8xf32>
    %cst_80 = arith.constant dense<0.000000e+00> : vector<2x8xf32>
    %248 = vector.multi_reduction <add>, %247, %cst_80 [2] : vector<2x8x8xf32> to vector<2x8xf32>
    %249 = vector.shape_cast %248 : vector<2x8xf32> to vector<2x8x1xf32>
    %250 = vector.broadcast %249 : vector<2x8x1xf32> to vector<2x8x8xf32>
    %251 = arith.divf %247, %250 : vector<2x8x8xf32>
    %252 = arith.truncf %251 : vector<2x8x8xf32> to vector<2x8x8xbf16>
    %253 = arith.truncf %238 : vector<2x8x8xf32> to vector<2x8x8xbf16>
    "tpu.trace_start"() <{level = 10 : i32, message = "bqk,bkd->bqd"}> : () -> ()
    %cst_81 = arith.constant dense<0.000000e+00> : vector<2x8x8xf32>
    %254 = tpu.matmul %252, %253, %cst_81 {dimension_numbers = #tpu.dot_dimension_numbers<[2], [1], [1], [2], [0, 0, 0, 1, 1, 2], [0], [0]>} : vector<2x8x8xbf16>, vector<2x8x8xbf16>, vector<2x8x8xf32> -> vector<2x8x8xf32>
    "tpu.trace_stop"() : () -> ()
    %255 = vector.shape_cast %254 : vector<2x8x8xf32> to vector<16x8xf32>
    %256 = vector.extract_strided_slice %173 {offsets = [0, 24], sizes = [16, 8], strides = [1, 1]} : vector<16x32xf32> to vector<16x8xf32>
    %257 = vector.shape_cast %256 : vector<16x8xf32> to vector<2x8x8xf32>
    %258 = vector.extract_strided_slice %182 {offsets = [0, 24], sizes = [16, 8], strides = [1, 1]} : vector<16x32xf32> to vector<16x8xf32>
    %259 = vector.shape_cast %258 : vector<16x8xf32> to vector<2x8x8xf32>
    %260 = vector.extract_strided_slice %183 {offsets = [0, 24], sizes = [16, 8], strides = [1, 1]} : vector<16x32xf32> to vector<16x8xf32>
    %261 = vector.shape_cast %260 : vector<16x8xf32> to vector<2x8x8xf32>
    %262 = arith.truncf %257 : vector<2x8x8xf32> to vector<2x8x8xbf16>
    %263 = arith.truncf %259 : vector<2x8x8xf32> to vector<2x8x8xbf16>
    "tpu.trace_start"() <{level = 10 : i32, message = "bqd,bkd->bqk"}> : () -> ()
    %cst_82 = arith.constant dense<0.000000e+00> : vector<2x8x8xf32>
    %264 = tpu.matmul %262, %263, %cst_82 {dimension_numbers = #tpu.dot_dimension_numbers<[2], [2], [1], [1], [0, 0, 0, 1, 1, 1], [0], [0]>} : vector<2x8x8xbf16>, vector<2x8x8xbf16>, vector<2x8x8xf32> -> vector<2x8x8xf32>
    "tpu.trace_stop"() : () -> ()
    %265 = arith.addf %264, %24 : vector<2x8x8xf32>
    %cst_83 = arith.constant dense<0xFF800000> : vector<2x8xf32>
    %266 = vector.multi_reduction <maximumf>, %265, %cst_83 [2] : vector<2x8x8xf32> to vector<2x8xf32>
    %267 = vector.shape_cast %266 : vector<2x8xf32> to vector<2x8x1xf32>
    %268 = vector.broadcast %267 : vector<2x8x1xf32> to vector<2x8x8xf32>
    %269 = arith.subf %265, %268 : vector<2x8x8xf32>
    %270 = math.exp %269 : vector<2x8x8xf32>
    %cst_84 = arith.constant dense<0.000000e+00> : vector<2x8xf32>
    %271 = vector.multi_reduction <add>, %270, %cst_84 [2] : vector<2x8x8xf32> to vector<2x8xf32>
    %272 = vector.shape_cast %271 : vector<2x8xf32> to vector<2x8x1xf32>
    %273 = vector.broadcast %272 : vector<2x8x1xf32> to vector<2x8x8xf32>
    %274 = arith.divf %270, %273 : vector<2x8x8xf32>
    %275 = arith.truncf %274 : vector<2x8x8xf32> to vector<2x8x8xbf16>
    %276 = arith.truncf %261 : vector<2x8x8xf32> to vector<2x8x8xbf16>
    "tpu.trace_start"() <{level = 10 : i32, message = "bqk,bkd->bqd"}> : () -> ()
    %cst_85 = arith.constant dense<0.000000e+00> : vector<2x8x8xf32>
    %277 = tpu.matmul %275, %276, %cst_85 {dimension_numbers = #tpu.dot_dimension_numbers<[2], [1], [1], [2], [0, 0, 0, 1, 1, 2], [0], [0]>} : vector<2x8x8xbf16>, vector<2x8x8xbf16>, vector<2x8x8xf32> -> vector<2x8x8xf32>
    "tpu.trace_stop"() : () -> ()
    %278 = vector.shape_cast %277 : vector<2x8x8xf32> to vector<16x8xf32>
    %279 = tpu.concatenate %209, %232, %255, %278 in 1 : vector<16x8xf32>, vector<16x8xf32>, vector<16x8xf32>, vector<16x8xf32> -> vector<16x32xf32>
    %280 = arith.truncf %279 : vector<16x32xf32> to vector<16x32xbf16>
    %cst_86 = arith.constant dense<0.000000e+00> : vector<16x32xf32>
    %281 = tpu.matmul %280, %185, %cst_86 {dimension_numbers = #tpu.dot_dimension_numbers<[1], [0], [0], [1], [0, 0, 1, 1], [], []>} : vector<16x32xbf16>, vector<32x32xbf16>, vector<16x32xf32> -> vector<16x32xf32>
    %282 = vector.broadcast %186 : vector<1x32xf32> to vector<16x32xf32>
    %283 = arith.addf %281, %282 : vector<16x32xf32>
    %284 = arith.addf %166, %283 : vector<16x32xf32>
    %285 = vector.extract_strided_slice %30 {offsets = [6, 0], sizes = [1, 32], strides = [1, 1]} : vector<10x32xf32> to vector<1x32xf32>
    %286 = vector.extract_strided_slice %30 {offsets = [7, 0], sizes = [1, 32], strides = [1, 1]} : vector<10x32xf32> to vector<1x32xf32>
    %cst_87 = arith.constant dense<0.000000e+00> : vector<16xf32>
    %287 = vector.multi_reduction <add>, %284, %cst_87 [1] : vector<16x32xf32> to vector<16xf32>
    %288 = vector.shape_cast %287 : vector<16xf32> to vector<16x1xf32>
    %cst_88 = arith.constant 3.200000e+01 : f32
    %289 = vector.broadcast %cst_88 : f32 to vector<16x1xf32>
    %290 = arith.divf %288, %289 : vector<16x1xf32>
    %291 = vector.broadcast %290 : vector<16x1xf32> to vector<16x32xf32>
    %292 = arith.subf %284, %291 : vector<16x32xf32>
    %293 = arith.mulf %292, %292 : vector<16x32xf32>
    %cst_89 = arith.constant dense<0.000000e+00> : vector<16xf32>
    %294 = vector.multi_reduction <add>, %293, %cst_89 [1] : vector<16x32xf32> to vector<16xf32>
    %295 = vector.shape_cast %294 : vector<16xf32> to vector<16x1xf32>
    %cst_90 = arith.constant 3.200000e+01 : f32
    %296 = vector.broadcast %cst_90 : f32 to vector<16x1xf32>
    %297 = arith.divf %295, %296 : vector<16x1xf32>
    %298 = vector.broadcast %290 : vector<16x1xf32> to vector<16x32xf32>
    %299 = arith.subf %284, %298 : vector<16x32xf32>
    %cst_91 = arith.constant 9.99999974E-6 : f32
    %300 = vector.broadcast %cst_91 : f32 to vector<16x1xf32>
    %301 = arith.addf %297, %300 : vector<16x1xf32>
    %302 = math.rsqrt %301 : vector<16x1xf32>
    %303 = vector.broadcast %302 : vector<16x1xf32> to vector<16x32xf32>
    %304 = arith.mulf %299, %303 : vector<16x32xf32>
    %305 = vector.broadcast %285 : vector<1x32xf32> to vector<16x32xf32>
    %306 = arith.mulf %304, %305 : vector<16x32xf32>
    %307 = vector.broadcast %286 : vector<1x32xf32> to vector<16x32xf32>
    %308 = arith.addf %306, %307 : vector<16x32xf32>
    %c0_92 = arith.constant 0 : index
    %c0_93 = arith.constant 0 : index
    %c0_94 = arith.constant 0 : index
    %309 = vector.load %arg7[%c0_92, %c0_93, %c0_94] : memref<1x32x128xbf16, #tpu.memory_space<vmem>>, vector<1x32x128xbf16>
    %310 = vector.shape_cast %309 : vector<1x32x128xbf16> to vector<32x128xbf16>
    %311 = arith.truncf %308 : vector<16x32xf32> to vector<16x32xbf16>
    %cst_95 = arith.constant dense<0.000000e+00> : vector<16x128xf32>
    %312 = tpu.matmul %311, %310, %cst_95 {dimension_numbers = #tpu.dot_dimension_numbers<[1], [0], [0], [1], [0, 0, 1, 1], [], []>} : vector<16x32xbf16>, vector<32x128xbf16>, vector<16x128xf32> -> vector<16x128xf32>
    %c0_96 = arith.constant 0 : index
    %c0_97 = arith.constant 0 : index
    %c0_98 = arith.constant 0 : index
    %313 = vector.load %arg6[%c0_96, %c0_97, %c0_98] : memref<1x1x128xf32, #tpu.memory_space<vmem>>, vector<1x1x128xf32>
    %314 = vector.shape_cast %313 : vector<1x1x128xf32> to vector<1x128xf32>
    %315 = vector.broadcast %314 : vector<1x128xf32> to vector<16x128xf32>
    %316 = arith.addf %312, %315 : vector<16x128xf32>
    %cst_99 = arith.constant 0.000000e+00 : f32
    %317 = vector.broadcast %cst_99 : f32 to vector<16x128xf32>
    %318 = arith.maximumf %316, %317 : vector<16x128xf32>
    %c0_100 = arith.constant 0 : index
    %c0_101 = arith.constant 0 : index
    %c0_102 = arith.constant 0 : index
    %319 = vector.load %arg8[%c0_100, %c0_101, %c0_102] : memref<1x128x32xbf16, #tpu.memory_space<vmem>>, vector<1x128x32xbf16>
    %320 = vector.shape_cast %319 : vector<1x128x32xbf16> to vector<128x32xbf16>
    %321 = arith.truncf %318 : vector<16x128xf32> to vector<16x128xbf16>
    %cst_103 = arith.constant dense<0.000000e+00> : vector<16x32xf32>
    %322 = tpu.matmul %321, %320, %cst_103 {dimension_numbers = #tpu.dot_dimension_numbers<[1], [0], [0], [1], [0, 0, 1, 1], [], []>} : vector<16x128xbf16>, vector<128x32xbf16>, vector<16x32xf32> -> vector<16x32xf32>
    %323 = vector.extract_strided_slice %30 {offsets = [3, 0], sizes = [1, 32], strides = [1, 1]} : vector<10x32xf32> to vector<1x32xf32>
    %324 = vector.broadcast %323 : vector<1x32xf32> to vector<16x32xf32>
    %325 = arith.addf %322, %324 : vector<16x32xf32>
    %326 = arith.addf %308, %325 : vector<16x32xf32>
    %327 = vector.extract_strided_slice %30 {offsets = [8, 0], sizes = [1, 32], strides = [1, 1]} : vector<10x32xf32> to vector<1x32xf32>
    %328 = vector.extract_strided_slice %30 {offsets = [9, 0], sizes = [1, 32], strides = [1, 1]} : vector<10x32xf32> to vector<1x32xf32>
    %cst_104 = arith.constant dense<0.000000e+00> : vector<16xf32>
    %329 = vector.multi_reduction <add>, %326, %cst_104 [1] : vector<16x32xf32> to vector<16xf32>
    %330 = vector.shape_cast %329 : vector<16xf32> to vector<16x1xf32>
    %cst_105 = arith.constant 3.200000e+01 : f32
    %331 = vector.broadcast %cst_105 : f32 to vector<16x1xf32>
    %332 = arith.divf %330, %331 : vector<16x1xf32>
    %333 = vector.broadcast %332 : vector<16x1xf32> to vector<16x32xf32>
    %334 = arith.subf %326, %333 : vector<16x32xf32>
    %335 = arith.mulf %334, %334 : vector<16x32xf32>
    %cst_106 = arith.constant dense<0.000000e+00> : vector<16xf32>
    %336 = vector.multi_reduction <add>, %335, %cst_106 [1] : vector<16x32xf32> to vector<16xf32>
    %337 = vector.shape_cast %336 : vector<16xf32> to vector<16x1xf32>
    %cst_107 = arith.constant 3.200000e+01 : f32
    %338 = vector.broadcast %cst_107 : f32 to vector<16x1xf32>
    %339 = arith.divf %337, %338 : vector<16x1xf32>
    %340 = vector.broadcast %332 : vector<16x1xf32> to vector<16x32xf32>
    %341 = arith.subf %326, %340 : vector<16x32xf32>
    %cst_108 = arith.constant 9.99999974E-6 : f32
    %342 = vector.broadcast %cst_108 : f32 to vector<16x1xf32>
    %343 = arith.addf %339, %342 : vector<16x1xf32>
    %344 = math.rsqrt %343 : vector<16x1xf32>
    %345 = vector.broadcast %344 : vector<16x1xf32> to vector<16x32xf32>
    %346 = arith.mulf %341, %345 : vector<16x32xf32>
    %347 = vector.broadcast %327 : vector<1x32xf32> to vector<16x32xf32>
    %348 = arith.mulf %346, %347 : vector<16x32xf32>
    %349 = vector.broadcast %328 : vector<1x32xf32> to vector<16x32xf32>
    %350 = arith.addf %348, %349 : vector<16x32xf32>
    %351 = vector.shape_cast %350 : vector<16x32xf32> to vector<2x8x32xf32>
    %c0_109 = arith.constant 0 : index
    %c0_110 = arith.constant 0 : index
    %c0_111 = arith.constant 0 : index
    %352 = vector.load %arg29[%c0_109, %c0_110, %c0_111] : memref<2x8x32xf32, #tpu.memory_space<vmem>>, vector<2x8x32xf32>
    tpu.vector_store %arg29[%c0_109, %c0_110, %c0_111], %351 {strides = array<i32>} : memref<2x8x32xf32, #tpu.memory_space<vmem>>, vector<2x8x32xf32>,
    %c1_i32 = arith.constant 1 : i32
    %353 = arith.cmpi eq, %arg1, %c1_i32 : i32
    %354 = arith.extui %353 : i1 to i32
    %c0_i32_112 = arith.constant 0 : i32
    %355 = arith.cmpi ne, %354, %c0_i32_112 : i32
    scf.if %355 {
      %c0_113 = arith.constant 0 : index
      %c0_114 = arith.constant 0 : index
      %356 = vector.load %arg14[%c0_113, %c0_114] : memref<32x8xbf16, #tpu.memory_space<vmem>>, vector<32x8xbf16>
      %357 = arith.truncf %350 : vector<16x32xf32> to vector<16x32xbf16>
      %cst_115 = arith.constant dense<0.000000e+00> : vector<16x8xf32>
      %358 = tpu.matmul %357, %356, %cst_115 {dimension_numbers = #tpu.dot_dimension_numbers<[1], [0], [0], [1], [0, 0, 1, 1], [], []>} : vector<16x32xbf16>, vector<32x8xbf16>, vector<16x8xf32> -> vector<16x8xf32>
      %c0_116 = arith.constant 0 : index
      %c0_117 = arith.constant 0 : index
      %359 = vector.load %arg13[%c0_116, %c0_117] : memref<1x8xf32, #tpu.memory_space<vmem>>, vector<1x8xf32>
      %360 = vector.broadcast %359 : vector<1x8xf32> to vector<16x8xf32>
      %361 = arith.addf %358, %360 : vector<16x8xf32>
      %cst_118 = arith.constant 5.000000e-01 : f32
      %362 = vector.broadcast %cst_118 : f32 to vector<16x8xf32>
      %363 = arith.mulf %362, %361 : vector<16x8xf32>
      %cst_119 = arith.constant 0.707106769 : f32
      %364 = vector.broadcast %cst_119 : f32 to vector<16x8xf32>
      %365 = arith.mulf %361, %364 : vector<16x8xf32>
      %366 = math.absf %365 : vector<16x8xf32>
      %cst_120 = arith.constant 0.327591091 : f32
      %367 = vector.broadcast %cst_120 : f32 to vector<16x8xf32>
      %368 = arith.mulf %367, %366 : vector<16x8xf32>
      %cst_121 = arith.constant 1.000000e+00 : f32
      %369 = vector.broadcast %cst_121 : f32 to vector<16x8xf32>
      %370 = arith.addf %369, %368 : vector<16x8xf32>
      %cst_122 = arith.constant 1.000000e+00 : f32
      %371 = vector.broadcast %cst_122 : f32 to vector<16x8xf32>
      %372 = arith.divf %371, %370 : vector<16x8xf32>
      %cst_123 = arith.constant 1.06140542 : f32
      %373 = vector.broadcast %cst_123 : f32 to vector<16x8xf32>
      %374 = arith.mulf %372, %373 : vector<16x8xf32>
      %cst_124 = arith.constant -1.45315206 : f32
      %375 = vector.broadcast %cst_124 : f32 to vector<16x8xf32>
      %376 = arith.addf %375, %374 : vector<16x8xf32>
      %377 = arith.mulf %372, %376 : vector<16x8xf32>
      %cst_125 = arith.constant 1.42141378 : f32
      %378 = vector.broadcast %cst_125 : f32 to vector<16x8xf32>
      %379 = arith.addf %378, %377 : vector<16x8xf32>
      %380 = arith.mulf %372, %379 : vector<16x8xf32>
      %cst_126 = arith.constant -0.284496725 : f32
      %381 = vector.broadcast %cst_126 : f32 to vector<16x8xf32>
      %382 = arith.addf %381, %380 : vector<16x8xf32>
      %383 = arith.mulf %372, %382 : vector<16x8xf32>
      %cst_127 = arith.constant 0.254829586 : f32
      %384 = vector.broadcast %cst_127 : f32 to vector<16x8xf32>
      %385 = arith.addf %384, %383 : vector<16x8xf32>
      %386 = arith.mulf %372, %385 : vector<16x8xf32>
      %cst_128 = arith.constant 0.000000e+00 : f32
      %387 = vector.broadcast %cst_128 : f32 to vector<16x8xf32>
      %388 = arith.subf %387, %366 : vector<16x8xf32>
      %389 = arith.mulf %388, %366 : vector<16x8xf32>
      %390 = math.exp %389 : vector<16x8xf32>
      %391 = arith.mulf %386, %390 : vector<16x8xf32>
      %cst_129 = arith.constant 1.000000e+00 : f32
      %392 = vector.broadcast %cst_129 : f32 to vector<16x8xf32>
      %393 = arith.subf %392, %391 : vector<16x8xf32>
      %cst_130 = arith.constant 0.000000e+00 : f32
      %394 = vector.broadcast %cst_130 : f32 to vector<16x8xf32>
      %395 = arith.cmpf oge, %365, %394 : vector<16x8xf32>
      %cst_131 = arith.constant 0.000000e+00 : f32
      %396 = vector.broadcast %cst_131 : f32 to vector<16x8xf32>
      %397 = arith.subf %396, %393 : vector<16x8xf32>
      %398 = arith.select %395, %393, %397 : vector<16x8xi1>, vector<16x8xf32>
      %cst_132 = arith.constant 1.000000e+00 : f32
      %399 = vector.broadcast %cst_132 : f32 to vector<16x8xf32>
      %400 = arith.addf %399, %398 : vector<16x8xf32>
      %401 = arith.mulf %363, %400 : vector<16x8xf32>
      %c0_133 = arith.constant 0 : index
      %c0_134 = arith.constant 0 : index
      %402 = vector.load %arg16[%c0_133, %c0_134] : memref<8x128xbf16, #tpu.memory_space<vmem>>, vector<8x128xbf16>
      %403 = arith.truncf %401 : vector<16x8xf32> to vector<16x8xbf16>
      %cst_135 = arith.constant dense<0.000000e+00> : vector<16x128xf32>
      %404 = tpu.matmul %403, %402, %cst_135 {dimension_numbers = #tpu.dot_dimension_numbers<[1], [0], [0], [1], [0, 0, 1, 1], [], []>} : vector<16x8xbf16>, vector<8x128xbf16>, vector<16x128xf32> -> vector<16x128xf32>
      %c0_136 = arith.constant 0 : index
      %c0_137 = arith.constant 0 : index
      %405 = vector.load %arg15[%c0_136, %c0_137] : memref<1x128xf32, #tpu.memory_space<vmem>>, vector<1x128xf32>
      %406 = vector.broadcast %405 : vector<1x128xf32> to vector<16x128xf32>
      %407 = arith.addf %404, %406 : vector<16x128xf32>
      %cst_138 = arith.constant dense<0xFF800000> : vector<16xf32>
      %408 = vector.multi_reduction <maximumf>, %407, %cst_138 [1] : vector<16x128xf32> to vector<16xf32>
      %409 = vector.shape_cast %408 : vector<16xf32> to vector<16x1xf32>
      %410 = vector.broadcast %409 : vector<16x1xf32> to vector<16x128xf32>
      %411 = arith.subf %407, %410 : vector<16x128xf32>
      %412 = math.exp %411 : vector<16x128xf32>
      %cst_139 = arith.constant dense<0.000000e+00> : vector<16xf32>
      %413 = vector.multi_reduction <add>, %412, %cst_139 [1] : vector<16x128xf32> to vector<16xf32>
      %414 = vector.shape_cast %413 : vector<16xf32> to vector<16x1xf32>
      %415 = math.log %414 : vector<16x1xf32>
      %416 = vector.broadcast %415 : vector<16x1xf32> to vector<16x128xf32>
      %417 = arith.subf %411, %416 : vector<16x128xf32>
      %418 = vector.shape_cast %417 : vector<16x128xf32> to vector<2x8x128xf32>
      %c0_140 = arith.constant 0 : index
      %c0_141 = arith.constant 0 : index
      %c0_142 = arith.constant 0 : index
      %419 = vector.load %arg28[%c0_140, %c0_141, %c0_142] : memref<2x8x128xf32, #tpu.memory_space<vmem>>, vector<2x8x128xf32>
      tpu.vector_store %arg28[%c0_140, %c0_141, %c0_142], %418 {strides = array<i32>} : memref<2x8x128xf32, #tpu.memory_space<vmem>>, vector<2x8x128xf32>,
    } else {
    }
    return
  }
  func.func @transform_0(%arg0: i32, %arg1: i32) -> (i32, i32, i32) {
    %c0_i32 = arith.constant 0 : i32
    %c0_i32_0 = arith.constant 0 : i32
    %c0_i32_1 = arith.constant 0 : i32
    return %arg1, %c0_i32, %c0_i32_0 : i32, i32, i32
  }
  func.func @transform_1(%arg0: i32, %arg1: i32) -> (i32, i32, i32) {
    %c0_i32 = arith.constant 0 : i32
    %c0_i32_0 = arith.constant 0 : i32
    %c0_i32_1 = arith.constant 0 : i32
    return %arg1, %c0_i32, %c0_i32_0 : i32, i32, i32
  }
  func.func @transform_2(%arg0: i32, %arg1: i32) -> (i32, i32, i32) {
    %c0_i32 = arith.constant 0 : i32
    %c0_i32_0 = arith.constant 0 : i32
    %c0_i32_1 = arith.constant 0 : i32
    return %arg1, %c0_i32, %c0_i32_0 : i32, i32, i32
  }
  func.func @transform_3(%arg0: i32, %arg1: i32) -> (i32, i32, i32) {
    %c0_i32 = arith.constant 0 : i32
    %c0_i32_0 = arith.constant 0 : i32
    %c0_i32_1 = arith.constant 0 : i32
    return %arg1, %c0_i32, %c0_i32_0 : i32, i32, i32
  }
  func.func @transform_4(%arg0: i32, %arg1: i32) -> (i32, i32, i32) {
    %c0_i32 = arith.constant 0 : i32
    %c0_i32_0 = arith.constant 0 : i32
    %c0_i32_1 = arith.constant 0 : i32
    return %arg1, %c0_i32, %c0_i32_0 : i32, i32, i32
  }
  func.func @transform_5(%arg0: i32, %arg1: i32) -> (i32, i32, i32) {
    %c0_i32 = arith.constant 0 : i32
    %c0_i32_0 = arith.constant 0 : i32
    %c0_i32_1 = arith.constant 0 : i32
    return %arg1, %c0_i32, %c0_i32_0 : i32, i32, i32
  }
  func.func @transform_6(%arg0: i32, %arg1: i32) -> (i32, i32, i32) {
    %c0_i32 = arith.constant 0 : i32
    %c0_i32_0 = arith.constant 0 : i32
    %c0_i32_1 = arith.constant 0 : i32
    return %arg1, %c0_i32, %c0_i32_0 : i32, i32, i32
  }
  func.func @transform_7(%arg0: i32, %arg1: i32) -> (i32, i32) {
    %c0_i32 = arith.constant 0 : i32
    %c0_i32_0 = arith.constant 0 : i32
    %c0_i32_1 = arith.constant 0 : i32
    return %c0_i32, %c0_i32_0 : i32, i32
  }
  func.func @transform_8(%arg0: i32, %arg1: i32) -> (i32, i32) {
    %c0_i32 = arith.constant 0 : i32
    %c0_i32_0 = arith.constant 0 : i32
    %c0_i32_1 = arith.constant 0 : i32
    return %c0_i32, %c0_i32_0 : i32, i32
  }
  func.func @transform_9(%arg0: i32, %arg1: i32) -> (i32, i32) {
    %c0_i32 = arith.constant 0 : i32
    %c0_i32_0 = arith.constant 0 : i32
    %c0_i32_1 = arith.constant 0 : i32
    return %c0_i32, %c0_i32_0 : i32, i32
  }
  func.func @transform_10(%arg0: i32, %arg1: i32) -> (i32, i32) {
    %c0_i32 = arith.constant 0 : i32
    %c0_i32_0 = arith.constant 0 : i32
    %c0_i32_1 = arith.constant 0 : i32
    return %c0_i32, %c0_i32_0 : i32, i32
  }
  func.func @transform_11(%arg0: i32, %arg1: i32) -> (i32, i32) {
    %c0_i32 = arith.constant 0 : i32
    %c0_i32_0 = arith.constant 0 : i32
    %c0_i32_1 = arith.constant 0 : i32
    return %c0_i32, %c0_i32_0 : i32, i32
  }
  func.func @transform_12(%arg0: i32, %arg1: i32) -> (i32, i32) {
    %c0_i32 = arith.constant 0 : i32
    %c0_i32_0 = arith.constant 0 : i32
    %c0_i32_1 = arith.constant 0 : i32
    return %c0_i32, %c0_i32_0 : i32, i32
  }
  func.func @transform_13(%arg0: i32, %arg1: i32) -> (i32, i32) {
    %c0_i32 = arith.constant 0 : i32
    %c0_i32_0 = arith.constant 0 : i32
    %c0_i32_1 = arith.constant 0 : i32
    return %c0_i32, %c0_i32_0 : i32, i32
  }
  func.func @transform_14(%arg0: i32, %arg1: i32) -> (i32, i32) {
    %c0_i32 = arith.constant 0 : i32
    %c0_i32_0 = arith.constant 0 : i32
    %c0_i32_1 = arith.constant 0 : i32
    return %c0_i32, %c0_i32_0 : i32, i32
  }
  func.func @transform_15(%arg0: i32, %arg1: i32) -> (i32, i32) {
    %c0_i32 = arith.constant 0 : i32
    %c0_i32_0 = arith.constant 0 : i32
    %c0_i32_1 = arith.constant 0 : i32
    return %c0_i32, %c0_i32_0 : i32, i32
  }
  func.func @transform_16(%arg0: i32, %arg1: i32) -> (i32, i32, i32) {
    %c0_i32 = arith.constant 0 : i32
    %c0_i32_0 = arith.constant 0 : i32
    %c0_i32_1 = arith.constant 0 : i32
    return %arg0, %c0_i32, %c0_i32_0 : i32, i32, i32
  }
  func.func @transform_17(%arg0: i32, %arg1: i32) -> (i32, i32, i32) {
    %c0_i32 = arith.constant 0 : i32
    %c0_i32_0 = arith.constant 0 : i32
    %c0_i32_1 = arith.constant 0 : i32
    return %arg0, %c0_i32, %c0_i32_0 : i32, i32, i32
  }
  func.func @transform_18(%arg0: i32, %arg1: i32) -> (i32, i32, i32) {
    %c0_i32 = arith.constant 0 : i32
    %c0_i32_0 = arith.constant 0 : i32
    %c0_i32_1 = arith.constant 0 : i32
    return %arg1, %c0_i32, %c0_i32_0 : i32, i32, i32
  }
  func.func @transform_19(%arg0: i32, %arg1: i32) -> (i32, i32, i32) {
    %c0_i32 = arith.constant 0 : i32
    %c0_i32_0 = arith.constant 0 : i32
    %c0_i32_1 = arith.constant 0 : i32
    return %arg1, %c0_i32, %c0_i32_0 : i32, i32, i32
  }
  func.func @transform_20(%arg0: i32, %arg1: i32) -> (i32, i32, i32) {
    %c0_i32 = arith.constant 0 : i32
    %c0_i32_0 = arith.constant 0 : i32
    %c0_i32_1 = arith.constant 0 : i32
    return %arg1, %c0_i32, %c0_i32_0 : i32, i32, i32
  }
  func.func @transform_21(%arg0: i32, %arg1: i32) -> (i32, i32, i32) {
    %c0_i32 = arith.constant 0 : i32
    %c0_i32_0 = arith.constant 0 : i32
    %c0_i32_1 = arith.constant 0 : i32
    return %arg0, %c0_i32, %c0_i32_0 : i32, i32, i32
  }
  func.func @transform_22(%arg0: i32, %arg1: i32) -> (i32, i32) {
    %c0_i32 = arith.constant 0 : i32
    %c0_i32_0 = arith.constant 0 : i32
    %c0_i32_1 = arith.constant 0 : i32
    return %c0_i32, %c0_i32_0 : i32, i32
  }
  func.func @transform_23(%arg0: i32, %arg1: i32) -> (i32, i32, i32) {
    %c0_i32 = arith.constant 0 : i32
    %c0_i32_0 = arith.constant 0 : i32
    %c0_i32_1 = arith.constant 0 : i32
    return %arg0, %c0_i32, %c0_i32_0 : i32, i32, i32
  }
  func.func @transform_24(%arg0: i32, %arg1: i32) -> (i32, i32, i32) {
    %c0_i32 = arith.constant 0 : i32
    %c0_i32_0 = arith.constant 0 : i32
    %c0_i32_1 = arith.constant 0 : i32
    return %arg1, %c0_i32, %c0_i32_0 : i32, i32, i32
  }
  func.func @transform_25(%arg0: i32, %arg1: i32) -> (i32, i32, i32) {
    %c0_i32 = arith.constant 0 : i32
    %c0_i32_0 = arith.constant 0 : i32
    %c0_i32_1 = arith.constant 0 : i32
    return %arg0, %c0_i32, %c0_i32_0 : i32, i32, i32
  }
  func.func @transform_26(%arg0: i32, %arg1: i32) -> (i32, i32, i32) {
    %c0_i32 = arith.constant 0 : i32
    %c0_i32_0 = arith.constant 0 : i32
    %c0_i32_1 = arith.constant 0 : i32
    return %arg0, %c0_i32, %c0_i32_0 : i32, i32, i32
  }
}

</mosaic_0001>

<llo_original>
// kernel: decoder_transformer_forward.1
$region0: #{decoder_transformer_forward.1}
  #allocation0 [shape = 'u32[]', space=smem, size = 0x4, offset = 0x4, fixed_abs, tag = 'smem constant byte address 0x4 - core index']
  #allocation1 [shape = 'u32[144,128]{1,0:T(1,128)}', space=vmem, size = 0x12000, scoped, tag = 'internal scratch']
  #allocation2 [shape = 'f32[2,8,32]{2,1,0:T(8,128)}', space=vmem, size = 0x2000, scoped, tag = 'scratch operand']
  #allocation3 [shape = 'f32[2,8,32]{2,1,0:T(8,128)}', space=vmem, size = 0x2000, scoped, tag = 'scratch operand']
  %s0 = inlined_call_operand.hbm [shape: f32[2,1,64], index: 0, kind: input, shape index: {}]
  %s1 = inlined_call_operand.vmem [shape: bf16[2,32,64], index: 1, kind: input, shape index: {}]
  %s2 = inlined_call_operand.vmem [shape: bf16[2,32,32], index: 2, kind: input, shape index: {}]
  %s3 = inlined_call_operand.vmem [shape: bf16[2,32,32], index: 3, kind: input, shape index: {}]
  %s4 = inlined_call_operand.hbm [shape: f32[2,1,128], index: 4, kind: input, shape index: {}]
  %s5 = inlined_call_operand.vmem [shape: bf16[2,32,128], index: 5, kind: input, shape index: {}]
  %s6 = inlined_call_operand.vmem [shape: bf16[2,128,32], index: 6, kind: input, shape index: {}]
  %s7 = inlined_call_operand.hbm [shape: f32[1,4], index: 7, kind: input, shape index: {}]
  %s8 = inlined_call_operand.vmem [shape: bf16[16,4], index: 8, kind: input, shape index: {}]
  %s9 = inlined_call_operand.hbm [shape: f32[1,32], index: 9, kind: input, shape index: {}]
  %s10 = inlined_call_operand.hbm [shape: bf16[4,32], index: 10, kind: input, shape index: {}]
  %s11 = inlined_call_operand.hbm [shape: f32[1,8], index: 11, kind: input, shape index: {}]
  %s12 = inlined_call_operand.vmem [shape: bf16[32,8], index: 12, kind: input, shape index: {}]
  %s13 = inlined_call_operand.vmem [shape: f32[1,128], index: 13, kind: input, shape index: {}]
  %s14 = inlined_call_operand.vmem [shape: bf16[8,128], index: 14, kind: input, shape index: {}]
  %s15 = inlined_call_operand.vmem [shape: f32[8,8], index: 15, kind: input, shape index: {}]
  %s16 = inlined_call_operand.vmem [shape: f32[2,1,8], index: 16, kind: input, shape index: {}]
  %s17 = inlined_call_operand.vmem [shape: f32[2,1,32], index: 17, kind: input, shape index: {}]
  %s18 = inlined_call_operand.vmem [shape: f32[2,1,96], index: 18, kind: input, shape index: {}]
  %s19 = inlined_call_operand.vmem [shape: bf16[2,32,32], index: 19, kind: input, shape index: {}]
  %s20 = inlined_call_operand.vmem [shape: bf16[2,32,96], index: 20, kind: input, shape index: {}]
  %s21 = inlined_call_operand.vmem [shape: f32[2,8,32], index: 21, kind: input, shape index: {}]
  %s22 = inlined_call_operand.vmem [shape: f32[8,8], index: 22, kind: input, shape index: {}]
  %s23 = inlined_call_operand.vmem [shape: f32[2,1,8], index: 23, kind: input, shape index: {}]
  %s24 = inlined_call_operand.vmem [shape: f32[2,10,32], index: 24, kind: input, shape index: {}]
  %s25 = inlined_call_operand.vmem [shape: f32[2,8,16], index: 25, kind: input, shape index: {}]
  %s26 = inlined_call_operand.hbm [shape: f32[2,8,128], index: 26, kind: output, shape index: {}]
  %s27 = sld [smem:[#allocation0]]
  $region169: #{decoder_transformer_forward.1} parent=0
    _
  %s29 = ssub.s32 1, %s27
  %s30 = scalar_select 0, %s29, %s27
  $region1: #{decoder_transformer_forward.1} parent=0
    #allocation4 [shape = 'u8[1024]{0}', space=vmem, size = 0x400, scoped, tag = 'input window, operand 0']
    #allocation5 [shape = 's32[2]{0}', space=sflag, size = 0x8, scoped, tag = 'scoped memory for decoder_transformer_forward.1']
    #allocation6 [shape = 's32[2]{0}', space=sflag, size = 0x8, scoped, tag = 'scoped memory for decoder_transformer_forward.1']
    #allocation7 [shape = 'u8[1024]{0}', space=vmem, size = 0x400, scoped, tag = 'input window, operand 4']
    #allocation8 [shape = 's32[2]{0}', space=sflag, size = 0x8, scoped, tag = 'scoped memory for decoder_transformer_forward.1']
    #allocation9 [shape = 'u8[512]{0}', space=vmem, size = 0x400, scoped, tag = 'input window, operand 7, single buffered']
    #allocation10 [shape = 'u8[512]{0}', space=vmem, size = 0x400, scoped, tag = 'input window, operand 9, single buffered']
    #allocation11 [shape = 's32[1]{0}', space=sflag, size = 0x4, scoped, tag = 'scoped memory for decoder_transformer_forward.1']
    #allocation12 [shape = 'u8[1024]{0}', space=vmem, size = 0x400, scoped, tag = 'input window, operand 10, single buffered']
    #allocation13 [shape = 'u8[512]{0}', space=vmem, size = 0x400, scoped, tag = 'input window, operand 11, single buffered']
    #allocation14 [shape = 's32[1]{0}', space=sflag, size = 0x4, scoped, tag = 'scoped memory for decoder_transformer_forward.1']
    #allocation15 [shape = 'u8[8192]{0}', space=vmem, size = 0x2000, scoped, tag = 'output window, operand 0, single buffered']
    %31 = vsyncpa [#allocation5], 0
    %s32 = scalar_lea.sflag [#allocation5], 1
    %33 = vsyncpa %s32, 0
    %34 = vsyncpa [#allocation8], 0
    %s35 = scalar_lea.sflag [#allocation8], 1
    %36 = vsyncpa %s35, 0
    %37 = vsyncpa [#allocation11], 0
    %38 = vsyncpa [#allocation14], 0
    %39 = vsyncpa [#allocation6], 0
    loop: start=0, step=1, limit=4
    $region2: #{decoder_transformer_forward.1} parent=1 // loop_pre_header
      _
    $region3: #{decoder_transformer_forward.1} parent=1 // loop_header
      %s41 = sphi 0, %s45
      %p42 = scmp.ge.s32.totalorder %s41, 4
      %s48 = sphi 0, %s60
      %s49 = sphi 0, %s56
      %s50 = sphi 0, %s48
      %s51 = sphi 0, %s49
      %s52 = sphi 0, %s50
      %s53 = sphi 0, %s51
      %s63 = sphi 0, %s65
      %s66 = sphi 0, %s63
      %s67 = sphi 0, %s66
      %s83 = sphi 0, %s67
      %s89 = sphi 0, %s91
      %s92 = sphi 0, %s89
      %s93 = sphi 0, %s92
      %s109 = sphi 0, %s93
      %s115 = sphi 0, %s117
      %s118 = sphi 0, %s115
      %s119 = sphi 0, %s118
      %s135 = sphi 0, %s119
      %s141 = sphi 0, %s143
      %s144 = sphi 0, %s141
      %s145 = sphi 0, %s144
      %s161 = sphi 0, %s145
      %s167 = sphi 0, %s169
      %s170 = sphi 0, %s167
      %s171 = sphi 0, %s170
      %s187 = sphi 0, %s171
      %s193 = sphi 0, %s195
      %s196 = sphi 0, %s193
      %s197 = sphi 0, %s196
      %s213 = sphi 0, %s197
      %s219 = sphi 0, %s221
      %s222 = sphi 0, %s219
      %s223 = sphi 0, %s222
      %s239 = sphi 0, %s223
      %s243 = sphi 0, %s243
      %s245 = sphi 0, %s243
      %s246 = sphi 0, %s245
      %s260 = sphi 0, %s246
      %s264 = sphi 0, %s264
      %s266 = sphi 0, %s264
      %s267 = sphi 0, %s266
      %s281 = sphi 0, %s267
      %s285 = sphi 0, %s285
      %s287 = sphi 0, %s285
      %s288 = sphi 0, %s287
      %s302 = sphi 0, %s288
      %s306 = sphi 0, %s306
      %s308 = sphi 0, %s306
      %s309 = sphi 0, %s308
      %s323 = sphi 0, %s309
      %s327 = sphi 0, %s327
      %s329 = sphi 0, %s327
      %s330 = sphi 0, %s329
      %s344 = sphi 0, %s330
      %s348 = sphi 0, %s348
      %s350 = sphi 0, %s348
      %s351 = sphi 0, %s350
      %s365 = sphi 0, %s351
      %s369 = sphi 0, %s369
      %s371 = sphi 0, %s369
      %s372 = sphi 0, %s371
      %s386 = sphi 0, %s372
      %s390 = sphi 0, %s390
      %s392 = sphi 0, %s390
      %s393 = sphi 0, %s392
      %s407 = sphi 0, %s393
      %s411 = sphi 0, %s411
      %s413 = sphi 0, %s411
      %s414 = sphi 0, %s413
      %s428 = sphi 0, %s414
      %s434 = sphi 0, %s436
      %s437 = sphi 0, %s434
      %s438 = sphi 0, %s437
      %s454 = sphi 0, %s438
      %s460 = sphi 0, %s462
      %s463 = sphi 0, %s460
      %s464 = sphi 0, %s463
      %s480 = sphi 0, %s464
      %s486 = sphi 0, %s488
      %s489 = sphi 0, %s486
      %s490 = sphi 0, %s489
      %s506 = sphi 0, %s490
      %s512 = sphi 0, %s514
      %s515 = sphi 0, %s512
      %s516 = sphi 0, %s515
      %s532 = sphi 0, %s516
      %s538 = sphi 0, %s540
      %s541 = sphi 0, %s538
      %s542 = sphi 0, %s541
      %s558 = sphi 0, %s542
      %s564 = sphi 0, %s566
      %s567 = sphi 0, %s564
      %s568 = sphi 0, %s567
      %s584 = sphi 0, %s568
      %s588 = sphi 0, %s588
      %s590 = sphi 0, %s588
      %s591 = sphi 0, %s590
      %s605 = sphi 0, %s591
      %s611 = sphi 0, %s613
      %s614 = sphi 0, %s611
      %s615 = sphi 0, %s614
      %s631 = sphi 0, %s615
      %s637 = sphi 0, %s639
      %s640 = sphi 0, %s637
      %s641 = sphi 0, %s640
      %s657 = sphi 0, %s641
      %s663 = sphi 0, %s665
      %s666 = sphi 0, %s663
      %s667 = sphi 0, %s666
      %s683 = sphi 0, %s667
      %s689 = sphi 0, %s691
      %s692 = sphi 0, %s689
      %s693 = sphi 0, %s692
      %s709 = sphi 0, %s693
    $region4: #{decoder_transformer_forward.1} parent=1 // loop_header_branch
      %44 = sbr.rel (%p42) target = $region8
    $region5: #{decoder_transformer_forward.1} parent=1 // loop_body
      %s46 = ssub.s32 %s41, 1
      %s47 = ssub.s32 %s41, 2
      %s54 = sadd.s32 1, %s49
      %p55 = scmp.ge.s32.totalorder %s54, 2
      %s56 = scalar_select %p55, 0, %s54
      %s57 = sadd.s32 1, %s48
      %s58 = scalar_select %p55, %s57, %s48
      %p59 = scmp.ge.s32.totalorder %s58, 1
      %s60 = scalar_select %p59, 0, %s58
      %s61 = ssub.s32 %s49, %s56
      %p62 = scmp.eq.s32.totalorder %s61, 0
      %s64 = sadd.s32 %s63, 1
      %s65 = scalar_select %p62, %s63, %s64
      %p68 = pneg %p62
      %p69 = scmp.eq.s32.totalorder %s41, 1
      %p70 = por %p68, %p69
      %p71 = scmp.ne.s32.totalorder %s63, %s66
      %p72 = scmp.eq.s32.totalorder %s41, 0
      %p73 = por %p71, %p72
      %p74 = scmp.ne.s32.totalorder %s63, %s66
      %p75 = scmp.eq.s32.totalorder %s46, 1
      %p76 = por %p74, %p75
      %p77 = scmp.ne.s32.totalorder %s66, %s67
      %p78 = scmp.eq.s32.totalorder %s46, 0
      %p79 = por %p77, %p78
      %p80 = scmp.ne.s32.totalorder %s66, %s67
      %p81 = scmp.eq.s32.totalorder %s47, 1
      %p82 = por %p80, %p81
      %p84 = scmp.ne.s32.totalorder %s67, %s83
      %p85 = scmp.eq.s32.totalorder %s47, 0
      %p86 = por %p84, %p85
      %s87 = ssub.s32 %s49, %s56
      %p88 = scmp.eq.s32.totalorder %s87, 0
      %s90 = sadd.s32 %s89, 1
      %s91 = scalar_select %p88, %s89, %s90
      %p94 = pneg %p88
      %p95 = scmp.eq.s32.totalorder %s41, 1
      %p96 = por %p94, %p95
      %p97 = scmp.ne.s32.totalorder %s89, %s92
      %p98 = scmp.eq.s32.totalorder %s41, 0
      %p99 = por %p97, %p98
      %p100 = scmp.ne.s32.totalorder %s89, %s92
      %p101 = scmp.eq.s32.totalorder %s46, 1
      %p102 = por %p100, %p101
      %p103 = scmp.ne.s32.totalorder %s92, %s93
      %p104 = scmp.eq.s32.totalorder %s46, 0
      %p105 = por %p103, %p104
      %p106 = scmp.ne.s32.totalorder %s92, %s93
      %p107 = scmp.eq.s32.totalorder %s47, 1
      %p108 = por %p106, %p107
      %p110 = scmp.ne.s32.totalorder %s93, %s109
      %p111 = scmp.eq.s32.totalorder %s47, 0
      %p112 = por %p110, %p111
      %s113 = ssub.s32 %s49, %s56
      %p114 = scmp.eq.s32.totalorder %s113, 0
      %s116 = sadd.s32 %s115, 1
      %s117 = scalar_select %p114, %s115, %s116
      %p120 = pneg %p114
      %p121 = scmp.eq.s32.totalorder %s41, 1
      %p122 = por %p120, %p121
      %p123 = scmp.ne.s32.totalorder %s115, %s118
      %p124 = scmp.eq.s32.totalorder %s41, 0
      %p125 = por %p123, %p124
      %p126 = scmp.ne.s32.totalorder %s115, %s118
      %p127 = scmp.eq.s32.totalorder %s46, 1
      %p128 = por %p126, %p127
      %p129 = scmp.ne.s32.totalorder %s118, %s119
      %p130 = scmp.eq.s32.totalorder %s46, 0
      %p131 = por %p129, %p130
      %p132 = scmp.ne.s32.totalorder %s118, %s119
      %p133 = scmp.eq.s32.totalorder %s47, 1
      %p134 = por %p132, %p133
      %p136 = scmp.ne.s32.totalorder %s119, %s135
      %p137 = scmp.eq.s32.totalorder %s47, 0
      %p138 = por %p136, %p137
      %s139 = ssub.s32 %s49, %s56
      %p140 = scmp.eq.s32.totalorder %s139, 0
      %s142 = sadd.s32 %s141, 1
      %s143 = scalar_select %p140, %s141, %s142
      %p146 = pneg %p140
      %p147 = scmp.eq.s32.totalorder %s41, 1
      %p148 = por %p146, %p147
      %p149 = scmp.ne.s32.totalorder %s141, %s144
      %p150 = scmp.eq.s32.totalorder %s41, 0
      %p151 = por %p149, %p150
      %p152 = scmp.ne.s32.totalorder %s141, %s144
      %p153 = scmp.eq.s32.totalorder %s46, 1
      %p154 = por %p152, %p153
      %p155 = scmp.ne.s32.totalorder %s144, %s145
      %p156 = scmp.eq.s32.totalorder %s46, 0
      %p157 = por %p155, %p156
      %p158 = scmp.ne.s32.totalorder %s144, %s145
      %p159 = scmp.eq.s32.totalorder %s47, 1
      %p160 = por %p158, %p159
      %p162 = scmp.ne.s32.totalorder %s145, %s161
      %p163 = scmp.eq.s32.totalorder %s47, 0
      %p164 = por %p162, %p163
      %s165 = ssub.s32 %s49, %s56
      %p166 = scmp.eq.s32.totalorder %s165, 0
      %s168 = sadd.s32 %s167, 1
      %s169 = scalar_select %p166, %s167, %s168
      %p172 = pneg %p166
      %p173 = scmp.eq.s32.totalorder %s41, 1
      %p174 = por %p172, %p173
      %p175 = scmp.ne.s32.totalorder %s167, %s170
      %p176 = scmp.eq.s32.totalorder %s41, 0
      %p177 = por %p175, %p176
      %p178 = scmp.ne.s32.totalorder %s167, %s170
      %p179 = scmp.eq.s32.totalorder %s46, 1
      %p180 = por %p178, %p179
      %p181 = scmp.ne.s32.totalorder %s170, %s171
      %p182 = scmp.eq.s32.totalorder %s46, 0
      %p183 = por %p181, %p182
      %p184 = scmp.ne.s32.totalorder %s170, %s171
      %p185 = scmp.eq.s32.totalorder %s47, 1
      %p186 = por %p184, %p185
      %p188 = scmp.ne.s32.totalorder %s171, %s187
      %p189 = scmp.eq.s32.totalorder %s47, 0
      %p190 = por %p188, %p189
      %s191 = ssub.s32 %s49, %s56
      %p192 = scmp.eq.s32.totalorder %s191, 0
      %s194 = sadd.s32 %s193, 1
      %s195 = scalar_select %p192, %s193, %s194
      %p198 = pneg %p192
      %p199 = scmp.eq.s32.totalorder %s41, 1
      %p200 = por %p198, %p199
      %p201 = scmp.ne.s32.totalorder %s193, %s196
      %p202 = scmp.eq.s32.totalorder %s41, 0
      %p203 = por %p201, %p202
      %p204 = scmp.ne.s32.totalorder %s193, %s196
      %p205 = scmp.eq.s32.totalorder %s46, 1
      %p206 = por %p204, %p205
      %p207 = scmp.ne.s32.totalorder %s196, %s197
      %p208 = scmp.eq.s32.totalorder %s46, 0
      %p209 = por %p207, %p208
      %p210 = scmp.ne.s32.totalorder %s196, %s197
      %p211 = scmp.eq.s32.totalorder %s47, 1
      %p212 = por %p210, %p211
      %p214 = scmp.ne.s32.totalorder %s197, %s213
      %p215 = scmp.eq.s32.totalorder %s47, 0
      %p216 = por %p214, %p215
      %s217 = ssub.s32 %s49, %s56
      %p218 = scmp.eq.s32.totalorder %s217, 0
      %s220 = sadd.s32 %s219, 1
      %s221 = scalar_select %p218, %s219, %s220
      %p224 = pneg %p218
      %p225 = scmp.eq.s32.totalorder %s41, 1
      %p226 = por %p224, %p225
      %p227 = scmp.ne.s32.totalorder %s219, %s222
      %p228 = scmp.eq.s32.totalorder %s41, 0
      %p229 = por %p227, %p228
      %p230 = scmp.ne.s32.totalorder %s219, %s222
      %p231 = scmp.eq.s32.totalorder %s46, 1
      %p232 = por %p230, %p231
      %p233 = scmp.ne.s32.totalorder %s222, %s223
      %p234 = scmp.eq.s32.totalorder %s46, 0
      %p235 = por %p233, %p234
      %p236 = scmp.ne.s32.totalorder %s222, %s223
      %p237 = scmp.eq.s32.totalorder %s47, 1
      %p238 = por %p236, %p237
      %p240 = scmp.ne.s32.totalorder %s223, %s239
      %p241 = scmp.eq.s32.totalorder %s47, 0
      %p242 = por %p240, %p241
      %s244 = sadd.s32 %s243, 1
      %p247 = scmp.eq.s32.totalorder %s41, 1
      %p248 = scmp.ne.s32.totalorder %s243, %s245
      %p249 = scmp.eq.s32.totalorder %s41, 0
      %p250 = por %p248, %p249
      %p251 = scmp.ne.s32.totalorder %s243, %s245
      %p252 = scmp.eq.s32.totalorder %s46, 1
      %p253 = por %p251, %p252
      %p254 = scmp.ne.s32.totalorder %s245, %s246
      %p255 = scmp.eq.s32.totalorder %s46, 0
      %p256 = por %p254, %p255
      %p257 = scmp.ne.s32.totalorder %s245, %s246
      %p258 = scmp.eq.s32.totalorder %s47, 1
      %p259 = por %p257, %p258
      %p261 = scmp.ne.s32.totalorder %s246, %s260
      %p262 = scmp.eq.s32.totalorder %s47, 0
      %p263 = por %p261, %p262
      %s265 = sadd.s32 %s264, 1
      %p268 = scmp.eq.s32.totalorder %s41, 1
      %p269 = scmp.ne.s32.totalorder %s264, %s266
      %p270 = scmp.eq.s32.totalorder %s41, 0
      %p271 = por %p269, %p270
      %p272 = scmp.ne.s32.totalorder %s264, %s266
      %p273 = scmp.eq.s32.totalorder %s46, 1
      %p274 = por %p272, %p273
      %p275 = scmp.ne.s32.totalorder %s266, %s267
      %p276 = scmp.eq.s32.totalorder %s46, 0
      %p277 = por %p275, %p276
      %p278 = scmp.ne.s32.totalorder %s266, %s267
      %p279 = scmp.eq.s32.totalorder %s47, 1
      %p280 = por %p278, %p279
      %p282 = scmp.ne.s32.totalorder %s267, %s281
      %p283 = scmp.eq.s32.totalorder %s47, 0
      %p284 = por %p282, %p283
      %s286 = sadd.s32 %s285, 1
      %p289 = scmp.eq.s32.totalorder %s41, 1
      %p290 = scmp.ne.s32.totalorder %s285, %s287
      %p291 = scmp.eq.s32.totalorder %s41, 0
      %p292 = por %p290, %p291
      %p293 = scmp.ne.s32.totalorder %s285, %s287
      %p294 = scmp.eq.s32.totalorder %s46, 1
      %p295 = por %p293, %p294
      %p296 = scmp.ne.s32.totalorder %s287, %s288
      %p297 = scmp.eq.s32.totalorder %s46, 0
      %p298 = por %p296, %p297
      %p299 = scmp.ne.s32.totalorder %s287, %s288
      %p300 = scmp.eq.s32.totalorder %s47, 1
      %p301 = por %p299, %p300
      %p303 = scmp.ne.s32.totalorder %s288, %s302
      %p304 = scmp.eq.s32.totalorder %s47, 0
      %p305 = por %p303, %p304
      %s307 = sadd.s32 %s306, 1
      %p310 = scmp.eq.s32.totalorder %s41, 1
      %p311 = scmp.ne.s32.totalorder %s306, %s308
      %p312 = scmp.eq.s32.totalorder %s41, 0
      %p313 = por %p311, %p312
      %p314 = scmp.ne.s32.totalorder %s306, %s308
      %p315 = scmp.eq.s32.totalorder %s46, 1
      %p316 = por %p314, %p315
      %p317 = scmp.ne.s32.totalorder %s308, %s309
      %p318 = scmp.eq.s32.totalorder %s46, 0
      %p319 = por %p317, %p318
      %p320 = scmp.ne.s32.totalorder %s308, %s309
      %p321 = scmp.eq.s32.totalorder %s47, 1
      %p322 = por %p320, %p321
      %p324 = scmp.ne.s32.totalorder %s309, %s323
      %p325 = scmp.eq.s32.totalorder %s47, 0
      %p326 = por %p324, %p325
      %s328 = sadd.s32 %s327, 1
      %p331 = scmp.eq.s32.totalorder %s41, 1
      %p332 = scmp.ne.s32.totalorder %s327, %s329
      %p333 = scmp.eq.s32.totalorder %s41, 0
      %p334 = por %p332, %p333
      %p335 = scmp.ne.s32.totalorder %s327, %s329
      %p336 = scmp.eq.s32.totalorder %s46, 1
      %p337 = por %p335, %p336
      %p338 = scmp.ne.s32.totalorder %s329, %s330
      %p339 = scmp.eq.s32.totalorder %s46, 0
      %p340 = por %p338, %p339
      %p341 = scmp.ne.s32.totalorder %s329, %s330
      %p342 = scmp.eq.s32.totalorder %s47, 1
      %p343 = por %p341, %p342
      %p345 = scmp.ne.s32.totalorder %s330, %s344
      %p346 = scmp.eq.s32.totalorder %s47, 0
      %p347 = por %p345, %p346
      %s349 = sadd.s32 %s348, 1
      %p352 = scmp.eq.s32.totalorder %s41, 1
      %p353 = scmp.ne.s32.totalorder %s348, %s350
      %p354 = scmp.eq.s32.totalorder %s41, 0
      %p355 = por %p353, %p354
      %p356 = scmp.ne.s32.totalorder %s348, %s350
      %p357 = scmp.eq.s32.totalorder %s46, 1
      %p358 = por %p356, %p357
      %p359 = scmp.ne.s32.totalorder %s350, %s351
      %p360 = scmp.eq.s32.totalorder %s46, 0
      %p361 = por %p359, %p360
      %p362 = scmp.ne.s32.totalorder %s350, %s351
      %p363 = scmp.eq.s32.totalorder %s47, 1
      %p364 = por %p362, %p363
      %p366 = scmp.ne.s32.totalorder %s351, %s365
      %p367 = scmp.eq.s32.totalorder %s47, 0
      %p368 = por %p366, %p367
      %s370 = sadd.s32 %s369, 1
      %p373 = scmp.eq.s32.totalorder %s41, 1
      %p374 = scmp.ne.s32.totalorder %s369, %s371
      %p375 = scmp.eq.s32.totalorder %s41, 0
      %p376 = por %p374, %p375
      %p377 = scmp.ne.s32.totalorder %s369, %s371
      %p378 = scmp.eq.s32.totalorder %s46, 1
      %p379 = por %p377, %p378
      %p380 = scmp.ne.s32.totalorder %s371, %s372
      %p381 = scmp.eq.s32.totalorder %s46, 0
      %p382 = por %p380, %p381
      %p383 = scmp.ne.s32.totalorder %s371, %s372
      %p384 = scmp.eq.s32.totalorder %s47, 1
      %p385 = por %p383, %p384
      %p387 = scmp.ne.s32.totalorder %s372, %s386
      %p388 = scmp.eq.s32.totalorder %s47, 0
      %p389 = por %p387, %p388
      %s391 = sadd.s32 %s390, 1
      %p394 = scmp.eq.s32.totalorder %s41, 1
      %p395 = scmp.ne.s32.totalorder %s390, %s392
      %p396 = scmp.eq.s32.totalorder %s41, 0
      %p397 = por %p395, %p396
      %p398 = scmp.ne.s32.totalorder %s390, %s392
      %p399 = scmp.eq.s32.totalorder %s46, 1
      %p400 = por %p398, %p399
      %p401 = scmp.ne.s32.totalorder %s392, %s393
      %p402 = scmp.eq.s32.totalorder %s46, 0
      %p403 = por %p401, %p402
      %p404 = scmp.ne.s32.totalorder %s392, %s393
      %p405 = scmp.eq.s32.totalorder %s47, 1
      %p406 = por %p404, %p405
      %p408 = scmp.ne.s32.totalorder %s393, %s407
      %p409 = scmp.eq.s32.totalorder %s47, 0
      %p410 = por %p408, %p409
      %s412 = sadd.s32 %s411, 1
      %p415 = scmp.eq.s32.totalorder %s41, 1
      %p416 = scmp.ne.s32.totalorder %s411, %s413
      %p417 = scmp.eq.s32.totalorder %s41, 0
      %p418 = por %p416, %p417
      %p419 = scmp.ne.s32.totalorder %s411, %s413
      %p420 = scmp.eq.s32.totalorder %s46, 1
      %p421 = por %p419, %p420
      %p422 = scmp.ne.s32.totalorder %s413, %s414
      %p423 = scmp.eq.s32.totalorder %s46, 0
      %p424 = por %p422, %p423
      %p425 = scmp.ne.s32.totalorder %s413, %s414
      %p426 = scmp.eq.s32.totalorder %s47, 1
      %p427 = por %p425, %p426
      %p429 = scmp.ne.s32.totalorder %s414, %s428
      %p430 = scmp.eq.s32.totalorder %s47, 0
      %p431 = por %p429, %p430
      %s432 = ssub.s32 %s48, %s60
      %p433 = scmp.eq.s32.totalorder %s432, 0
      %s435 = sadd.s32 %s434, 1
      %s436 = scalar_select %p433, %s434, %s435
      %p439 = pneg %p433
      %p440 = scmp.eq.s32.totalorder %s41, 1
      %p441 = por %p439, %p440
      %p442 = scmp.ne.s32.totalorder %s434, %s437
      %p443 = scmp.eq.s32.totalorder %s41, 0
      %p444 = por %p442, %p443
      %p445 = scmp.ne.s32.totalorder %s434, %s437
      %p446 = scmp.eq.s32.totalorder %s46, 1
      %p447 = por %p445, %p446
      %p448 = scmp.ne.s32.totalorder %s437, %s438
      %p449 = scmp.eq.s32.totalorder %s46, 0
      %p450 = por %p448, %p449
      %p451 = scmp.ne.s32.totalorder %s437, %s438
      %p452 = scmp.eq.s32.totalorder %s47, 1
      %p453 = por %p451, %p452
      %p455 = scmp.ne.s32.totalorder %s438, %s454
      %p456 = scmp.eq.s32.totalorder %s47, 0
      %p457 = por %p455, %p456
      %s458 = ssub.s32 %s48, %s60
      %p459 = scmp.eq.s32.totalorder %s458, 0
      %s461 = sadd.s32 %s460, 1
      %s462 = scalar_select %p459, %s460, %s461
      %p465 = pneg %p459
      %p466 = scmp.eq.s32.totalorder %s41, 1
      %p467 = por %p465, %p466
      %p468 = scmp.ne.s32.totalorder %s460, %s463
      %p469 = scmp.eq.s32.totalorder %s41, 0
      %p470 = por %p468, %p469
      %p471 = scmp.ne.s32.totalorder %s460, %s463
      %p472 = scmp.eq.s32.totalorder %s46, 1
      %p473 = por %p471, %p472
      %p474 = scmp.ne.s32.totalorder %s463, %s464
      %p475 = scmp.eq.s32.totalorder %s46, 0
      %p476 = por %p474, %p475
      %p477 = scmp.ne.s32.totalorder %s463, %s464
      %p478 = scmp.eq.s32.totalorder %s47, 1
      %p479 = por %p477, %p478
      %p481 = scmp.ne.s32.totalorder %s464, %s480
      %p482 = scmp.eq.s32.totalorder %s47, 0
      %p483 = por %p481, %p482
      %s484 = ssub.s32 %s49, %s56
      %p485 = scmp.eq.s32.totalorder %s484, 0
      %s487 = sadd.s32 %s486, 1
      %s488 = scalar_select %p485, %s486, %s487
      %p491 = pneg %p485
      %p492 = scmp.eq.s32.totalorder %s41, 1
      %p493 = por %p491, %p492
      %p494 = scmp.ne.s32.totalorder %s486, %s489
      %p495 = scmp.eq.s32.totalorder %s41, 0
      %p496 = por %p494, %p495
      %p497 = scmp.ne.s32.totalorder %s486, %s489
      %p498 = scmp.eq.s32.totalorder %s46, 1
      %p499 = por %p497, %p498
      %p500 = scmp.ne.s32.totalorder %s489, %s490
      %p501 = scmp.eq.s32.totalorder %s46, 0
      %p502 = por %p500, %p501
      %p503 = scmp.ne.s32.totalorder %s489, %s490
      %p504 = scmp.eq.s32.totalorder %s47, 1
      %p505 = por %p503, %p504
      %p507 = scmp.ne.s32.totalorder %s490, %s506
      %p508 = scmp.eq.s32.totalorder %s47, 0
      %p509 = por %p507, %p508
      %s510 = ssub.s32 %s49, %s56
      %p511 = scmp.eq.s32.totalorder %s510, 0
      %s513 = sadd.s32 %s512, 1
      %s514 = scalar_select %p511, %s512, %s513
      %p517 = pneg %p511
      %p518 = scmp.eq.s32.totalorder %s41, 1
      %p519 = por %p517, %p518
      %p520 = scmp.ne.s32.totalorder %s512, %s515
      %p521 = scmp.eq.s32.totalorder %s41, 0
      %p522 = por %p520, %p521
      %p523 = scmp.ne.s32.totalorder %s512, %s515
      %p524 = scmp.eq.s32.totalorder %s46, 1
      %p525 = por %p523, %p524
      %p526 = scmp.ne.s32.totalorder %s515, %s516
      %p527 = scmp.eq.s32.totalorder %s46, 0
      %p528 = por %p526, %p527
      %p529 = scmp.ne.s32.totalorder %s515, %s516
      %p530 = scmp.eq.s32.totalorder %s47, 1
      %p531 = por %p529, %p530
      %p533 = scmp.ne.s32.totalorder %s516, %s532
      %p534 = scmp.eq.s32.totalorder %s47, 0
      %p535 = por %p533, %p534
      %s536 = ssub.s32 %s49, %s56
      %p537 = scmp.eq.s32.totalorder %s536, 0
      %s539 = sadd.s32 %s538, 1
      %s540 = scalar_select %p537, %s538, %s539
      %p543 = pneg %p537
      %p544 = scmp.eq.s32.totalorder %s41, 1
      %p545 = por %p543, %p544
      %p546 = scmp.ne.s32.totalorder %s538, %s541
      %p547 = scmp.eq.s32.totalorder %s41, 0
      %p548 = por %p546, %p547
      %p549 = scmp.ne.s32.totalorder %s538, %s541
      %p550 = scmp.eq.s32.totalorder %s46, 1
      %p551 = por %p549, %p550
      %p552 = scmp.ne.s32.totalorder %s541, %s542
      %p553 = scmp.eq.s32.totalorder %s46, 0
      %p554 = por %p552, %p553
      %p555 = scmp.ne.s32.totalorder %s541, %s542
      %p556 = scmp.eq.s32.totalorder %s47, 1
      %p557 = por %p555, %p556
      %p559 = scmp.ne.s32.totalorder %s542, %s558
      %p560 = scmp.eq.s32.totalorder %s47, 0
      %p561 = por %p559, %p560
      %s562 = ssub.s32 %s48, %s60
      %p563 = scmp.eq.s32.totalorder %s562, 0
      %s565 = sadd.s32 %s564, 1
      %s566 = scalar_select %p563, %s564, %s565
      %p569 = pneg %p563
      %p570 = scmp.eq.s32.totalorder %s41, 1
      %p571 = por %p569, %p570
      %p572 = scmp.ne.s32.totalorder %s564, %s567
      %p573 = scmp.eq.s32.totalorder %s41, 0
      %p574 = por %p572, %p573
      %p575 = scmp.ne.s32.totalorder %s564, %s567
      %p576 = scmp.eq.s32.totalorder %s46, 1
      %p577 = por %p575, %p576
      %p578 = scmp.ne.s32.totalorder %s567, %s568
      %p579 = scmp.eq.s32.totalorder %s46, 0
      %p580 = por %p578, %p579
      %p581 = scmp.ne.s32.totalorder %s567, %s568
      %p582 = scmp.eq.s32.totalorder %s47, 1
      %p583 = por %p581, %p582
      %p585 = scmp.ne.s32.totalorder %s568, %s584
      %p586 = scmp.eq.s32.totalorder %s47, 0
      %p587 = por %p585, %p586
      %s589 = sadd.s32 %s588, 1
      %p592 = scmp.eq.s32.totalorder %s41, 1
      %p593 = scmp.ne.s32.totalorder %s588, %s590
      %p594 = scmp.eq.s32.totalorder %s41, 0
      %p595 = por %p593, %p594
      %p596 = scmp.ne.s32.totalorder %s588, %s590
      %p597 = scmp.eq.s32.totalorder %s46, 1
      %p598 = por %p596, %p597
      %p599 = scmp.ne.s32.totalorder %s590, %s591
      %p600 = scmp.eq.s32.totalorder %s46, 0
      %p601 = por %p599, %p600
      %p602 = scmp.ne.s32.totalorder %s590, %s591
      %p603 = scmp.eq.s32.totalorder %s47, 1
      %p604 = por %p602, %p603
      %p606 = scmp.ne.s32.totalorder %s591, %s605
      %p607 = scmp.eq.s32.totalorder %s47, 0
      %p608 = por %p606, %p607
      %s609 = ssub.s32 %s48, %s60
      %p610 = scmp.eq.s32.totalorder %s609, 0
      %s612 = sadd.s32 %s611, 1
      %s613 = scalar_select %p610, %s611, %s612
      %p616 = pneg %p610
      %p617 = scmp.eq.s32.totalorder %s41, 1
      %p618 = por %p616, %p617
      %p619 = scmp.ne.s32.totalorder %s611, %s614
      %p620 = scmp.eq.s32.totalorder %s41, 0
      %p621 = por %p619, %p620
      %p622 = scmp.ne.s32.totalorder %s611, %s614
      %p623 = scmp.eq.s32.totalorder %s46, 1
      %p624 = por %p622, %p623
      %p625 = scmp.ne.s32.totalorder %s614, %s615
      %p626 = scmp.eq.s32.totalorder %s46, 0
      %p627 = por %p625, %p626
      %p628 = scmp.ne.s32.totalorder %s614, %s615
      %p629 = scmp.eq.s32.totalorder %s47, 1
      %p630 = por %p628, %p629
      %p632 = scmp.ne.s32.totalorder %s615, %s631
      %p633 = scmp.eq.s32.totalorder %s47, 0
      %p634 = por %p632, %p633
      %s635 = ssub.s32 %s49, %s56
      %p636 = scmp.eq.s32.totalorder %s635, 0
      %s638 = sadd.s32 %s637, 1
      %s639 = scalar_select %p636, %s637, %s638
      %p642 = pneg %p636
      %p643 = scmp.eq.s32.totalorder %s41, 1
      %p644 = por %p642, %p643
      %p645 = scmp.ne.s32.totalorder %s637, %s640
      %p646 = scmp.eq.s32.totalorder %s41, 0
      %p647 = por %p645, %p646
      %p648 = scmp.ne.s32.totalorder %s637, %s640
      %p649 = scmp.eq.s32.totalorder %s46, 1
      %p650 = por %p648, %p649
      %p651 = scmp.ne.s32.totalorder %s640, %s641
      %p652 = scmp.eq.s32.totalorder %s46, 0
      %p653 = por %p651, %p652
      %p654 = scmp.ne.s32.totalorder %s640, %s641
      %p655 = scmp.eq.s32.totalorder %s47, 1
      %p656 = por %p654, %p655
      %p658 = scmp.ne.s32.totalorder %s641, %s657
      %p659 = scmp.eq.s32.totalorder %s47, 0
      %p660 = por %p658, %p659
      %s661 = ssub.s32 %s48, %s60
      %p662 = scmp.eq.s32.totalorder %s661, 0
      %s664 = sadd.s32 %s663, 1
      %s665 = scalar_select %p662, %s663, %s664
      %p668 = pneg %p662
      %p669 = scmp.eq.s32.totalorder %s41, 1
      %p670 = por %p668, %p669
      %p671 = scmp.ne.s32.totalorder %s663, %s666
      %p672 = scmp.eq.s32.totalorder %s41, 0
      %p673 = por %p671, %p672
      %p674 = scmp.ne.s32.totalorder %s663, %s666
      %p675 = scmp.eq.s32.totalorder %s46, 1
      %p676 = por %p674, %p675
      %p677 = scmp.ne.s32.totalorder %s666, %s667
      %p678 = scmp.eq.s32.totalorder %s46, 0
      %p679 = por %p677, %p678
      %p680 = scmp.ne.s32.totalorder %s666, %s667
      %p681 = scmp.eq.s32.totalorder %s47, 1
      %p682 = por %p680, %p681
      %p684 = scmp.ne.s32.totalorder %s667, %s683
      %p685 = scmp.eq.s32.totalorder %s47, 0
      %p686 = por %p684, %p685
      %s687 = ssub.s32 %s48, %s60
      %p688 = scmp.eq.s32.totalorder %s687, 0
      %s690 = sadd.s32 %s689, 1
      %s691 = scalar_select %p688, %s689, %s690
      %p694 = pneg %p688
      %p695 = scmp.eq.s32.totalorder %s41, 1
      %p696 = por %p694, %p695
      %p697 = scmp.ne.s32.totalorder %s689, %s692
      %p698 = scmp.eq.s32.totalorder %s41, 0
      %p699 = por %p697, %p698
      %p700 = scmp.ne.s32.totalorder %s689, %s692
      %p701 = scmp.eq.s32.totalorder %s46, 1
      %p702 = por %p700, %p701
      %p703 = scmp.ne.s32.totalorder %s692, %s693
      %p704 = scmp.eq.s32.totalorder %s46, 0
      %p705 = por %p703, %p704
      %p706 = scmp.ne.s32.totalorder %s692, %s693
      %p707 = scmp.eq.s32.totalorder %s47, 1
      %p708 = por %p706, %p707
      %p710 = scmp.ne.s32.totalorder %s693, %s709
      %p711 = scmp.eq.s32.totalorder %s47, 0
      %p712 = por %p710, %p711
      %p713 = scmp.le.s32.totalorder 1, %s41
      %p714 = scmp.lt.s32.totalorder %s41, 3
      %p715 = pnand %p713, %p714
      %p716 = pneg %p715
      // Predicated region
      $region9: #{decoder_transformer_forward.1} parent=5 // pred_check
        _
      $region10: #{decoder_transformer_forward.1} parent=5 // pred_check_branch
        %718 = sbr.rel (%p715) target = $region12
      $region11: #{decoder_transformer_forward.1} parent=5 // pred_region
        %s719 = ssub.s32 %s41, 1
        // Predicated region
        $region13: #{decoder_transformer_forward.1} parent=11 // pred_check
          %p720 = pneg %p256
        $region14: #{decoder_transformer_forward.1} parent=11 // pred_check_branch
          %722 = sbr.rel (%p720) target = $region16
        $region15: #{decoder_transformer_forward.1} parent=11 // pred_region
          %s724 = ssub.s32 16, 16
          %725 = vsyncadd [#allocation8], %s724
          %s727 = sshll.u32 [#allocation9], 4
          %s728 = int_to_ptr.vmem [resolvable:$true] %s727
          %730 = dma.hbm_to_vmem [thread:$0]  %s7, 16, %s728, [#allocation8]
        $region16: #{decoder_transformer_forward.1} parent=11 // pred_fallthru
          _
        // Predicated region
        $region17: #{decoder_transformer_forward.1} parent=11 // pred_check
          %p731 = pneg %p277
        $region18: #{decoder_transformer_forward.1} parent=11 // pred_check_branch
          %733 = sbr.rel (%p731) target = $region20
        $region19: #{decoder_transformer_forward.1} parent=11 // pred_region
          _
        $region20: #{decoder_transformer_forward.1} parent=11 // pred_fallthru
          _
        // Predicated region
        $region21: #{decoder_transformer_forward.1} parent=11 // pred_check
          %p734 = pneg %p298
        $region22: #{decoder_transformer_forward.1} parent=11 // pred_check_branch
          %736 = sbr.rel (%p734) target = $region24
        $region23: #{decoder_transformer_forward.1} parent=11 // pred_region
          %s738 = ssub.s32 16, 16
          %739 = vsyncadd [#allocation11], %s738
          %s741 = sshll.u32 [#allocation10], 4
          %s742 = int_to_ptr.vmem [resolvable:$true] %s741
          %744 = dma.hbm_to_vmem [thread:$0]  %s9, 16, %s742, [#allocation11]
        $region24: #{decoder_transformer_forward.1} parent=11 // pred_fallthru
          _
        // Predicated region
        $region25: #{decoder_transformer_forward.1} parent=11 // pred_check
          %p745 = pneg %p319
        $region26: #{decoder_transformer_forward.1} parent=11 // pred_check_branch
          %747 = sbr.rel (%p745) target = $region28
        $region27: #{decoder_transformer_forward.1} parent=11 // pred_region
          %s749 = ssub.s32 32, 32
          %750 = vsyncadd [#allocation11], %s749
          %s752 = sshll.u32 [#allocation12], 4
          %s753 = int_to_ptr.vmem [resolvable:$true] %s752
          %755 = dma.hbm_to_vmem [thread:$0]  %s10, 32, %s753, [#allocation11]
        $region28: #{decoder_transformer_forward.1} parent=11 // pred_fallthru
          _
        // Predicated region
        $region29: #{decoder_transformer_forward.1} parent=11 // pred_check
          %p756 = pneg %p340
        $region30: #{decoder_transformer_forward.1} parent=11 // pred_check_branch
          %758 = sbr.rel (%p756) target = $region32
        $region31: #{decoder_transformer_forward.1} parent=11 // pred_region
          %s760 = ssub.s32 16, 16
          %761 = vsyncadd [#allocation14], %s760
          %s763 = sshll.u32 [#allocation13], 4
          %s764 = int_to_ptr.vmem [resolvable:$true] %s763
          %766 = dma.hbm_to_vmem [thread:$0]  %s11, 16, %s764, [#allocation14]
        $region32: #{decoder_transformer_forward.1} parent=11 // pred_fallthru
          _
        // Predicated region
        $region33: #{decoder_transformer_forward.1} parent=11 // pred_check
          %p767 = pneg %p361
        $region34: #{decoder_transformer_forward.1} parent=11 // pred_check_branch
          %769 = sbr.rel (%p767) target = $region36
        $region35: #{decoder_transformer_forward.1} parent=11 // pred_region
          _
        $region36: #{decoder_transformer_forward.1} parent=11 // pred_fallthru
          _
        // Predicated region
        $region37: #{decoder_transformer_forward.1} parent=11 // pred_check
          %p770 = pneg %p382
        $region38: #{decoder_transformer_forward.1} parent=11 // pred_check_branch
          %772 = sbr.rel (%p770) target = $region40
        $region39: #{decoder_transformer_forward.1} parent=11 // pred_region
          _
        $region40: #{decoder_transformer_forward.1} parent=11 // pred_fallthru
          _
        // Predicated region
        $region41: #{decoder_transformer_forward.1} parent=11 // pred_check
          %p773 = pneg %p403
        $region42: #{decoder_transformer_forward.1} parent=11 // pred_check_branch
          %775 = sbr.rel (%p773) target = $region44
        $region43: #{decoder_transformer_forward.1} parent=11 // pred_region
          _
        $region44: #{decoder_transformer_forward.1} parent=11 // pred_fallthru
          _
        // Predicated region
        $region45: #{decoder_transformer_forward.1} parent=11 // pred_check
          %p776 = pneg %p424
        $region46: #{decoder_transformer_forward.1} parent=11 // pred_check_branch
          %778 = sbr.rel (%p776) target = $region48
        $region47: #{decoder_transformer_forward.1} parent=11 // pred_region
          _
        $region48: #{decoder_transformer_forward.1} parent=11 // pred_fallthru
          _
        // Predicated region
        $region49: #{decoder_transformer_forward.1} parent=11 // pred_check
          %p779 = pneg %p450
        $region50: #{decoder_transformer_forward.1} parent=11 // pred_check_branch
          %781 = sbr.rel (%p779) target = $region52
        $region51: #{decoder_transformer_forward.1} parent=11 // pred_region
          %s782 = smul.u32 2, %s50
          %p783 = scmp.lt.s32.totalorder %s782, 1
          %s784 = scalar_select %p783, %s782, 1
          %s785 = scalar_lea.vmem %s16, %s784
          %s786 = smul.u32 2, %s50
        $region52: #{decoder_transformer_forward.1} parent=11 // pred_fallthru
          _
        // Predicated region
        $region53: #{decoder_transformer_forward.1} parent=11 // pred_check
          %p787 = pneg %p476
        $region54: #{decoder_transformer_forward.1} parent=11 // pred_check_branch
          %789 = sbr.rel (%p787) target = $region56
        $region55: #{decoder_transformer_forward.1} parent=11 // pred_region
          %s790 = smul.u32 2, %s50
          %p791 = scmp.lt.s32.totalorder %s790, 1
          %s792 = scalar_select %p791, %s790, 1
          %s793 = scalar_lea.vmem %s17, %s792
          %s794 = smul.u32 2, %s50
        $region56: #{decoder_transformer_forward.1} parent=11 // pred_fallthru
          _
        // Predicated region
        $region57: #{decoder_transformer_forward.1} parent=11 // pred_check
          %p795 = pneg %p580
        $region58: #{decoder_transformer_forward.1} parent=11 // pred_check_branch
          %797 = sbr.rel (%p795) target = $region60
        $region59: #{decoder_transformer_forward.1} parent=11 // pred_region
          %s798 = smul.u32 2, %s50
          %p799 = scmp.lt.s32.totalorder %s798, 1
          %s800 = scalar_select %p799, %s798, 1
          %s801 = smul.addr %s800, 8
          %s802 = scalar_lea.vmem %s21, %s801
          %s803 = smul.u32 2, %s50
        $region60: #{decoder_transformer_forward.1} parent=11 // pred_fallthru
          _
        // Predicated region
        $region61: #{decoder_transformer_forward.1} parent=11 // pred_check
          %p804 = pneg %p601
        $region62: #{decoder_transformer_forward.1} parent=11 // pred_check_branch
          %806 = sbr.rel (%p804) target = $region64
        $region63: #{decoder_transformer_forward.1} parent=11 // pred_region
          _
        $region64: #{decoder_transformer_forward.1} parent=11 // pred_fallthru
          _
        // Predicated region
        $region65: #{decoder_transformer_forward.1} parent=11 // pred_check
          %p807 = pneg %p627
        $region66: #{decoder_transformer_forward.1} parent=11 // pred_check_branch
          %809 = sbr.rel (%p807) target = $region68
        $region67: #{decoder_transformer_forward.1} parent=11 // pred_region
          %s810 = smul.u32 2, %s50
          %p811 = scmp.lt.s32.totalorder %s810, 1
          %s812 = scalar_select %p811, %s810, 1
          %s813 = scalar_lea.vmem %s23, %s812
          %s814 = smul.u32 2, %s50
        $region68: #{decoder_transformer_forward.1} parent=11 // pred_fallthru
          _
        // Predicated region
        $region69: #{decoder_transformer_forward.1} parent=11 // pred_check
          %p815 = pneg %p679
        $region70: #{decoder_transformer_forward.1} parent=11 // pred_check_branch
          %817 = sbr.rel (%p815) target = $region72
        $region71: #{decoder_transformer_forward.1} parent=11 // pred_region
          %s818 = smul.u32 2, %s50
          %p819 = scmp.lt.s32.totalorder %s818, 1
          %s820 = scalar_select %p819, %s818, 1
          %s821 = smul.addr %s820, 8
          %s822 = scalar_lea.vmem %s25, %s821
          %s823 = smul.u32 2, %s50
        $region72: #{decoder_transformer_forward.1} parent=11 // pred_fallthru
          _
      $region12: #{decoder_transformer_forward.1} parent=5 // pred_fallthru
        _
      %p824 = scmp.lt.s32.totalorder %s41, 2
      // Predicated region
      $region73: #{decoder_transformer_forward.1} parent=5 // pred_check
        %p825 = pneg %p824
      $region74: #{decoder_transformer_forward.1} parent=5 // pred_check_branch
        %827 = sbr.rel (%p825) target = $region76
      $region75: #{decoder_transformer_forward.1} parent=5 // pred_region
        // Predicated region
        $region77: #{decoder_transformer_forward.1} parent=75 // pred_check
          %p828 = pneg %p73
        $region78: #{decoder_transformer_forward.1} parent=75 // pred_check_branch
          %830 = sbr.rel (%p828) target = $region80
        $region79: #{decoder_transformer_forward.1} parent=75 // pred_region
          %s831 = sand.u32 %s63, 1
          %s832 = scalar_lea.sflag [#allocation5], %s831
          %s833 = sand.u32 %s63, 1
          %s834 = scalar_lea.vmem [#allocation4], %s833
          %s836 = ssub.s32 16, 16
          %837 = vsyncadd %s832, %s836
          %s838 = smul.addr %s49, 16
          %s839 = scalar_lea.hbm %s0, %s838
          %s841 = sshll.u32 %s834, 4
          %s842 = int_to_ptr.vmem [resolvable:$true] %s841
          %844 = dma.hbm_to_vmem [thread:$0]  %s839, 16, %s842, %s832
        $region80: #{decoder_transformer_forward.1} parent=75 // pred_fallthru
          _
        // Predicated region
        $region81: #{decoder_transformer_forward.1} parent=75 // pred_check
          %p845 = pneg %p99
        $region82: #{decoder_transformer_forward.1} parent=75 // pred_check_branch
          %847 = sbr.rel (%p845) target = $region84
        $region83: #{decoder_transformer_forward.1} parent=75 // pred_region
          %p848 = scmp.lt.s32.totalorder %s49, 1
          %s849 = scalar_select %p848, %s49, 1
          %s850 = smul.addr %s849, 4
          %s851 = smul.addr %s850, 4
          %s852 = scalar_lea.vmem %s1, %s851
        $region84: #{decoder_transformer_forward.1} parent=75 // pred_fallthru
          _
        // Predicated region
        $region85: #{decoder_transformer_forward.1} parent=75 // pred_check
          %p853 = pneg %p125
        $region86: #{decoder_transformer_forward.1} parent=75 // pred_check_branch
          %855 = sbr.rel (%p853) target = $region88
        $region87: #{decoder_transformer_forward.1} parent=75 // pred_region
          %p856 = scmp.lt.s32.totalorder %s49, 1
          %s857 = scalar_select %p856, %s49, 1
          %s858 = smul.addr %s857, 4
          %s859 = smul.addr %s858, 4
          %s860 = scalar_lea.vmem %s2, %s859
        $region88: #{decoder_transformer_forward.1} parent=75 // pred_fallthru
          _
        // Predicated region
        $region89: #{decoder_transformer_forward.1} parent=75 // pred_check
          %p861 = pneg %p151
        $region90: #{decoder_transformer_forward.1} parent=75 // pred_check_branch
          %863 = sbr.rel (%p861) target = $region92
        $region91: #{decoder_transformer_forward.1} parent=75 // pred_region
          %p864 = scmp.lt.s32.totalorder %s49, 1
          %s865 = scalar_select %p864, %s49, 1
          %s866 = smul.addr %s865, 4
          %s867 = smul.addr %s866, 4
          %s868 = scalar_lea.vmem %s3, %s867
        $region92: #{decoder_transformer_forward.1} parent=75 // pred_fallthru
          _
        // Predicated region
        $region93: #{decoder_transformer_forward.1} parent=75 // pred_check
          %p869 = pneg %p177
        $region94: #{decoder_transformer_forward.1} parent=75 // pred_check_branch
          %871 = sbr.rel (%p869) target = $region96
        $region95: #{decoder_transformer_forward.1} parent=75 // pred_region
          %s872 = sand.u32 %s41, 1
          %s873 = scalar_lea.sflag [#allocation8], %s872
          %s874 = sand.u32 %s167, 1
          %s875 = scalar_lea.vmem [#allocation7], %s874
          %s877 = ssub.s32 16, 16
          %878 = vsyncadd %s873, %s877
          %s879 = smul.addr %s49, 16
          %s880 = scalar_lea.hbm %s4, %s879
          %s882 = sshll.u32 %s875, 4
          %s883 = int_to_ptr.vmem [resolvable:$true] %s882
          %885 = dma.hbm_to_vmem [thread:$0]  %s880, 16, %s883, %s873
        $region96: #{decoder_transformer_forward.1} parent=75 // pred_fallthru
          _
        // Predicated region
        $region97: #{decoder_transformer_forward.1} parent=75 // pred_check
          %p886 = pneg %p203
        $region98: #{decoder_transformer_forward.1} parent=75 // pred_check_branch
          %888 = sbr.rel (%p886) target = $region100
        $region99: #{decoder_transformer_forward.1} parent=75 // pred_region
          %p889 = scmp.lt.s32.totalorder %s49, 1
          %s890 = scalar_select %p889, %s49, 1
          %s891 = smul.addr %s890, 4
          %s892 = smul.addr %s891, 4
          %s893 = scalar_lea.vmem %s5, %s892
        $region100: #{decoder_transformer_forward.1} parent=75 // pred_fallthru
          _
        // Predicated region
        $region101: #{decoder_transformer_forward.1} parent=75 // pred_check
          %p894 = pneg %p229
        $region102: #{decoder_transformer_forward.1} parent=75 // pred_check_branch
          %896 = sbr.rel (%p894) target = $region104
        $region103: #{decoder_transformer_forward.1} parent=75 // pred_region
          %p897 = scmp.lt.s32.totalorder %s49, 1
          %s898 = scalar_select %p897, %s49, 1
          %s899 = smul.addr %s898, 16
          %s900 = smul.addr %s899, 4
          %s901 = scalar_lea.vmem %s6, %s900
        $region104: #{decoder_transformer_forward.1} parent=75 // pred_fallthru
          _
        // Predicated region
        $region105: #{decoder_transformer_forward.1} parent=75 // pred_check
          %p902 = pneg %p496
        $region106: #{decoder_transformer_forward.1} parent=75 // pred_check_branch
          %904 = sbr.rel (%p902) target = $region108
        $region107: #{decoder_transformer_forward.1} parent=75 // pred_region
          %p905 = scmp.lt.s32.totalorder %s49, 1
          %s906 = scalar_select %p905, %s49, 1
          %s907 = scalar_lea.vmem %s18, %s906
        $region108: #{decoder_transformer_forward.1} parent=75 // pred_fallthru
          _
        // Predicated region
        $region109: #{decoder_transformer_forward.1} parent=75 // pred_check
          %p908 = pneg %p522
        $region110: #{decoder_transformer_forward.1} parent=75 // pred_check_branch
          %910 = sbr.rel (%p908) target = $region112
        $region111: #{decoder_transformer_forward.1} parent=75 // pred_region
          %p911 = scmp.lt.s32.totalorder %s49, 1
          %s912 = scalar_select %p911, %s49, 1
          %s913 = smul.addr %s912, 4
          %s914 = smul.addr %s913, 4
          %s915 = scalar_lea.vmem %s19, %s914
        $region112: #{decoder_transformer_forward.1} parent=75 // pred_fallthru
          _
        // Predicated region
        $region113: #{decoder_transformer_forward.1} parent=75 // pred_check
          %p916 = pneg %p548
        $region114: #{decoder_transformer_forward.1} parent=75 // pred_check_branch
          %918 = sbr.rel (%p916) target = $region116
        $region115: #{decoder_transformer_forward.1} parent=75 // pred_region
          %p919 = scmp.lt.s32.totalorder %s49, 1
          %s920 = scalar_select %p919, %s49, 1
          %s921 = smul.addr %s920, 4
          %s922 = smul.addr %s921, 4
          %s923 = scalar_lea.vmem %s20, %s922
        $region116: #{decoder_transformer_forward.1} parent=75 // pred_fallthru
          _
        // Predicated region
        $region117: #{decoder_transformer_forward.1} parent=75 // pred_check
          %p924 = pneg %p647
        $region118: #{decoder_transformer_forward.1} parent=75 // pred_check_branch
          %926 = sbr.rel (%p924) target = $region120
        $region119: #{decoder_transformer_forward.1} parent=75 // pred_region
          %p927 = scmp.lt.s32.totalorder %s49, 1
          %s928 = scalar_select %p927, %s49, 1
          %s929 = smul.addr %s928, 2
          %s930 = smul.addr %s929, 8
          %s931 = scalar_lea.vmem %s24, %s930
        $region120: #{decoder_transformer_forward.1} parent=75 // pred_fallthru
          _
      $region76: #{decoder_transformer_forward.1} parent=5 // pred_fallthru
        _
      %p932 = scmp.le.s32.totalorder 1, %s41
      %p933 = scmp.lt.s32.totalorder %s41, 3
      %p934 = pnand %p932, %p933
      %p935 = pneg %p934
      // Predicated region
      $region121: #{decoder_transformer_forward.1} parent=5 // pred_check
        _
      $region122: #{decoder_transformer_forward.1} parent=5 // pred_check_branch
        %937 = sbr.rel (%p934) target = $region124
      $region123: #{decoder_transformer_forward.1} parent=5 // pred_region
        %s938 = ssub.s32 %s41, 1
        %s939 = sand.u32 %s66, 1
        %s940 = scalar_lea.sflag [#allocation5], %s939
        %s941 = sand.u32 %s66, 1
        %s942 = scalar_lea.vmem [#allocation4], %s941
        // Predicated region
        $region125: #{decoder_transformer_forward.1} parent=123 // pred_check
          %p943 = pneg %p79
        $region126: #{decoder_transformer_forward.1} parent=123 // pred_check_branch
          %945 = sbr.rel (%p943) target = $region128
        $region127: #{decoder_transformer_forward.1} parent=123 // pred_region
          %946 = dma.done %s940, 16
        $region128: #{decoder_transformer_forward.1} parent=123 // pred_fallthru
          _
        %s947 = sand.u32 %s46, 1
        %s948 = scalar_lea.sflag [#allocation8], %s947
        %s949 = sand.u32 %s170, 1
        %s950 = scalar_lea.vmem [#allocation7], %s949
        // Predicated region
        $region129: #{decoder_transformer_forward.1} parent=123 // pred_check
          %p951 = pneg %p183
        $region130: #{decoder_transformer_forward.1} parent=123 // pred_check_branch
          %953 = sbr.rel (%p951) target = $region132
        $region131: #{decoder_transformer_forward.1} parent=123 // pred_region
          %954 = dma.done %s948, 16
        $region132: #{decoder_transformer_forward.1} parent=123 // pred_fallthru
          _
        // Predicated region
        $region133: #{decoder_transformer_forward.1} parent=123 // pred_check
          %p955 = pneg %p256
        $region134: #{decoder_transformer_forward.1} parent=123 // pred_check_branch
          %957 = sbr.rel (%p955) target = $region136
        $region135: #{decoder_transformer_forward.1} parent=123 // pred_region
          %958 = dma.done [#allocation8], 16
        $region136: #{decoder_transformer_forward.1} parent=123 // pred_fallthru
          _
        // Predicated region
        $region137: #{decoder_transformer_forward.1} parent=123 // pred_check
          %p959 = pneg %p298
        $region138: #{decoder_transformer_forward.1} parent=123 // pred_check_branch
          %961 = sbr.rel (%p959) target = $region140
        $region139: #{decoder_transformer_forward.1} parent=123 // pred_region
          %962 = dma.done [#allocation11], 16
        $region140: #{decoder_transformer_forward.1} parent=123 // pred_fallthru
          _
        // Predicated region
        $region141: #{decoder_transformer_forward.1} parent=123 // pred_check
          %p963 = pneg %p319
        $region142: #{decoder_transformer_forward.1} parent=123 // pred_check_branch
          %965 = sbr.rel (%p963) target = $region144
        $region143: #{decoder_transformer_forward.1} parent=123 // pred_region
          %966 = dma.done [#allocation11], 32
        $region144: #{decoder_transformer_forward.1} parent=123 // pred_fallthru
          _
        // Predicated region
        $region145: #{decoder_transformer_forward.1} parent=123 // pred_check
          %p967 = pneg %p340
        $region146: #{decoder_transformer_forward.1} parent=123 // pred_check_branch
          %969 = sbr.rel (%p967) target = $region148
        $region147: #{decoder_transformer_forward.1} parent=123 // pred_region
          %970 = dma.done [#allocation14], 16
        $region148: #{decoder_transformer_forward.1} parent=123 // pred_fallthru
          _
        %s971 = sand.u32 %s66, 1
        %s972 = scalar_lea.sflag [#allocation5], %s971
        %s973 = sand.u32 %s66, 1
        %s974 = scalar_lea.vmem [#allocation4], %s973
        %p975 = pneg %p79
        %p976 = pneg %p76
        %p977 = scmp.lt.s32.totalorder %s51, 1
        %s978 = scalar_select %p977, %s51, 1
        %s979 = smul.addr %s978, 4
        %s980 = smul.addr %s979, 4
        %s981 = scalar_lea.vmem %s1, %s980
        %p982 = pneg %p105
        %p983 = pneg %p102
        %p984 = scmp.lt.s32.totalorder %s51, 1
        %s985 = scalar_select %p984, %s51, 1
        %s986 = smul.addr %s985, 4
        %s987 = smul.addr %s986, 4
        %s988 = scalar_lea.vmem %s2, %s987
        %p989 = pneg %p131
        %p990 = pneg %p128
        %p991 = scmp.lt.s32.totalorder %s51, 1
        %s992 = scalar_select %p991, %s51, 1
        %s993 = smul.addr %s992, 4
        %s994 = smul.addr %s993, 4
        %s995 = scalar_lea.vmem %s3, %s994
        %p996 = pneg %p157
        %p997 = pneg %p154
        %s998 = sand.u32 %s46, 1
        %s999 = scalar_lea.sflag [#allocation8], %s998
        %s1000 = sand.u32 %s170, 1
        %s1001 = scalar_lea.vmem [#allocation7], %s1000
        %p1002 = pneg %p183
        %p1003 = pneg %p180
        %p1004 = scmp.lt.s32.totalorder %s51, 1
        %s1005 = scalar_select %p1004, %s51, 1
        %s1006 = smul.addr %s1005, 4
        %s1007 = smul.addr %s1006, 4
        %s1008 = scalar_lea.vmem %s5, %s1007
        %p1009 = pneg %p209
        %p1010 = pneg %p206
        %p1011 = scmp.lt.s32.totalorder %s51, 1
        %s1012 = scalar_select %p1011, %s51, 1
        %s1013 = smul.addr %s1012, 16
        %s1014 = smul.addr %s1013, 4
        %s1015 = scalar_lea.vmem %s6, %s1014
        %p1016 = pneg %p235
        %p1017 = pneg %p232
        %p1018 = pneg %p256
        %p1019 = pneg %p253
        %p1020 = pneg %p277
        %p1021 = pneg %p274
        %p1022 = pneg %p298
        %p1023 = pneg %p295
        %p1024 = pneg %p319
        %p1025 = pneg %p316
        %p1026 = pneg %p340
        %p1027 = pneg %p337
        %p1028 = pneg %p361
        %p1029 = pneg %p358
        %p1030 = pneg %p382
        %p1031 = pneg %p379
        %p1032 = pneg %p403
        %p1033 = pneg %p400
        %p1034 = pneg %p424
        %p1035 = pneg %p421
        %s1036 = smul.u32 2, %s50
        %p1037 = scmp.lt.s32.totalorder %s1036, 1
        %s1038 = scalar_select %p1037, %s1036, 1
        %s1039 = scalar_lea.vmem %s16, %s1038
        %p1040 = pneg %p450
        %p1041 = pneg %p447
        %s1042 = smul.u32 2, %s50
        %p1043 = scmp.lt.s32.totalorder %s1042, 1
        %s1044 = scalar_select %p1043, %s1042, 1
        %s1045 = scalar_lea.vmem %s17, %s1044
        %p1046 = pneg %p476
        %p1047 = pneg %p473
        %p1048 = scmp.lt.s32.totalorder %s51, 1
        %s1049 = scalar_select %p1048, %s51, 1
        %s1050 = scalar_lea.vmem %s18, %s1049
        %p1051 = pneg %p502
        %p1052 = pneg %p499
        %p1053 = scmp.lt.s32.totalorder %s51, 1
        %s1054 = scalar_select %p1053, %s51, 1
        %s1055 = smul.addr %s1054, 4
        %s1056 = smul.addr %s1055, 4
        %s1057 = scalar_lea.vmem %s19, %s1056
        %p1058 = pneg %p528
        %p1059 = pneg %p525
        %p1060 = scmp.lt.s32.totalorder %s51, 1
        %s1061 = scalar_select %p1060, %s51, 1
        %s1062 = smul.addr %s1061, 4
        %s1063 = smul.addr %s1062, 4
        %s1064 = scalar_lea.vmem %s20, %s1063
        %p1065 = pneg %p554
        %p1066 = pneg %p551
        %s1067 = smul.u32 2, %s50
        %p1068 = scmp.lt.s32.totalorder %s1067, 1
        %s1069 = scalar_select %p1068, %s1067, 1
        %s1070 = smul.addr %s1069, 8
        %s1071 = scalar_lea.vmem %s21, %s1070
        %p1072 = pneg %p580
        %p1073 = pneg %p577
        %p1074 = pneg %p601
        %p1075 = pneg %p598
        %s1076 = smul.u32 2, %s50
        %p1077 = scmp.lt.s32.totalorder %s1076, 1
        %s1078 = scalar_select %p1077, %s1076, 1
        %s1079 = scalar_lea.vmem %s23, %s1078
        %p1080 = pneg %p627
        %p1081 = pneg %p624
        %p1082 = scmp.lt.s32.totalorder %s51, 1
        %s1083 = scalar_select %p1082, %s51, 1
        %s1084 = smul.addr %s1083, 2
        %s1085 = smul.addr %s1084, 8
        %s1086 = scalar_lea.vmem %s24, %s1085
        %p1087 = pneg %p653
        %p1088 = pneg %p650
        %s1089 = smul.u32 2, %s50
        %p1090 = scmp.lt.s32.totalorder %s1089, 1
        %s1091 = scalar_select %p1090, %s1089, 1
        %s1092 = smul.addr %s1091, 8
        %s1093 = scalar_lea.vmem %s25, %s1092
        %p1094 = pneg %p679
        %p1095 = pneg %p676
        %p1096 = pneg %p705
        %p1097 = pneg %p702
        %p1098 = scmp.lt.s32.totalorder %s51, 1
        %s1099 = scalar_select %p1098, %s51, 1
        %s1100 = smul.addr %s1099, 4
        %s1101 = smul.addr %s1100, 4
        %s1102 = scalar_lea.vmem %s1, %s1101
        %p1103 = scmp.lt.s32.totalorder %s51, 1
        %s1104 = scalar_select %p1103, %s51, 1
        %s1105 = smul.addr %s1104, 4
        %s1106 = smul.addr %s1105, 4
        %s1107 = scalar_lea.vmem %s2, %s1106
        %p1108 = scmp.lt.s32.totalorder %s51, 1
        %s1109 = scalar_select %p1108, %s51, 1
        %s1110 = smul.addr %s1109, 4
        %s1111 = smul.addr %s1110, 4
        %s1112 = scalar_lea.vmem %s3, %s1111
        %p1113 = scmp.lt.s32.totalorder %s51, 1
        %s1114 = scalar_select %p1113, %s51, 1
        %s1115 = smul.addr %s1114, 4
        %s1116 = smul.addr %s1115, 4
        %s1117 = scalar_lea.vmem %s5, %s1116
        %p1118 = scmp.lt.s32.totalorder %s51, 1
        %s1119 = scalar_select %p1118, %s51, 1
        %s1120 = smul.addr %s1119, 16
        %s1121 = smul.addr %s1120, 4
        %s1122 = scalar_lea.vmem %s6, %s1121
        %s1123 = smul.u32 2, %s50
        %p1124 = scmp.lt.s32.totalorder %s1123, 1
        %s1125 = scalar_select %p1124, %s1123, 1
        %s1126 = scalar_lea.vmem %s16, %s1125
        %s1127 = smul.u32 2, %s50
        %s1128 = smul.u32 2, %s50
        %p1129 = scmp.lt.s32.totalorder %s1128, 1
        %s1130 = scalar_select %p1129, %s1128, 1
        %s1131 = scalar_lea.vmem %s17, %s1130
        %s1132 = smul.u32 2, %s50
        %p1133 = scmp.lt.s32.totalorder %s51, 1
        %s1134 = scalar_select %p1133, %s51, 1
        %s1135 = scalar_lea.vmem %s18, %s1134
        %p1136 = scmp.lt.s32.totalorder %s51, 1
        %s1137 = scalar_select %p1136, %s51, 1
        %s1138 = smul.addr %s1137, 4
        %s1139 = smul.addr %s1138, 4
        %s1140 = scalar_lea.vmem %s19, %s1139
        %p1141 = scmp.lt.s32.totalorder %s51, 1
        %s1142 = scalar_select %p1141, %s51, 1
        %s1143 = smul.addr %s1142, 4
        %s1144 = smul.addr %s1143, 4
        %s1145 = scalar_lea.vmem %s20, %s1144
        %s1146 = smul.u32 2, %s50
        %p1147 = scmp.lt.s32.totalorder %s1146, 1
        %s1148 = scalar_select %p1147, %s1146, 1
        %s1149 = smul.addr %s1148, 8
        %s1150 = scalar_lea.vmem %s21, %s1149
        %s1151 = smul.u32 2, %s50
        %s1152 = smul.u32 2, %s50
        %p1153 = scmp.lt.s32.totalorder %s1152, 1
        %s1154 = scalar_select %p1153, %s1152, 1
        %s1155 = scalar_lea.vmem %s23, %s1154
        %s1156 = smul.u32 2, %s50
        %p1157 = scmp.lt.s32.totalorder %s51, 1
        %s1158 = scalar_select %p1157, %s51, 1
        %s1159 = smul.addr %s1158, 2
        %s1160 = smul.addr %s1159, 8
        %s1161 = scalar_lea.vmem %s24, %s1160
        %s1162 = smul.u32 2, %s50
        %p1163 = scmp.lt.s32.totalorder %s1162, 1
        %s1164 = scalar_select %p1163, %s1162, 1
        %s1165 = smul.addr %s1164, 8
        %s1166 = scalar_lea.vmem %s25, %s1165
        %s1167 = smul.u32 2, %s50
        %s1168 = smul.u32 2, %s50
        %p1170 = scmp.eq.s32.totalorder %s51, 0
        // Predicated region
        $region149: #{decoder_transformer_forward.1} parent=123 // pred_check
          %p1171 = pneg %p1170
        $region150: #{decoder_transformer_forward.1} parent=123 // pred_check_branch
          %1173 = sbr.rel (%p1171) target = $region152
        $region151: #{decoder_transformer_forward.1} parent=123 // pred_region
          %v1174 = vld [vmem:[%s1150] sm:$0xff]
          %v1175 = vld [vmem:[%s1150 + $0x8] sm:$0xff]
          %v1176 = vld [vmem:[%s1131] sm:$0x1]
          %v1177 = vld [vmem:[%s1131 + $0x1] sm:$0x1]
          %v1180 = vlaneseq
          %v1181 = vshrl.u32 %v1180, 7
          %v1182 = vsub.s32 0, %v1181
          %v1183 = vrot.slane %v1176, %v1182
          %v1184 = vlaneseq
          %v1185 = vshrl.u32 %v1184, 7
          %v1186 = vsub.s32 0, %v1185
          %v1187 = vrot.slane %v1177, %v1186
          %v1190 = vadd.f32 %v1174, %v1183
          %v1191 = vadd.f32 %v1175, %v1187
          %vm1192 = vcmask 261120
          %1193 = vst.msk [vmem:[#allocation2] sm:$0xff] %vm1192, %v1190
          %1194 = vst.msk [vmem:[#allocation2 + $0x8] sm:$0xff] %vm1192, %v1191
          %v1195 = vld [vmem:[%s1166] sm:$0xff]
          %v1196 = vld [vmem:[%s1166 + $0x8] sm:$0xff]
          %v1197 = vld [vmem:[%s8] sm:$0xf]
          %v1198 = vld [vmem:[%s8 + $0x4] sm:$0xf]
          %v1199 = vpack.c.bf16 %v1196, %v1195
          %v1200 = vld [vmem:[#allocation9] sm:$0x1]
          %v1202 = vlaneseq
          %v1203 = vshrl.u32 %v1202, 7
          %v1204 = vsub.s32 0, %v1203
          %v1205 = vrot.slane %v1200, %v1204
          %v1209 = vunpack.c.l.b16 %v1197
          %v1210 = vunpack.c.l.b16 %v1198
          %v1211 = vpack.c.b16 %v1210, %v1209
          %vm1213 = vcmask 130048
          %v1215 = vsel %vm1213, %v1199, 0
          %1217 = vmatprep.subr.bf16.mxu0 0
          %1218 = vmatpush1.bf16.msra.mxu0 0
          %1219 = vmatprep.subr.bf16.mxu0 0
          %1220 = vmatpush1.bf16.msra.mxu0 0
          %1221 = vmatprep.subr.bf16.mxu0 0
          %1222 = vmatpush1.bf16.msra.mxu0 0
          %1223 = vmatprep.subr.bf16.mxu0 0
          %1224 = vmatpush1.bf16.msra.mxu0 0
          %1225 = vmatprep.subr.bf16.mxu0 0
          %1226 = vmatpush1.bf16.msra.mxu0 0
          %1227 = vmatprep.subr.bf16.mxu0 0
          %1228 = vmatpush1.bf16.msra.mxu0 0
          %1229 = vmatprep.subr.bf16.mxu0 0
          %1230 = vmatpush1.bf16.msra.mxu0 0
          %1231 = vmatprep.subr.bf16.mxu0 0
          %1232 = vmatpush1.bf16.msra.mxu0 %v1211
          %1233 = vmatprep.subr.bf16.mxu0 0
          %1234 = vmatpush2.bf16.msra.mxu0 0
          %1235 = vmatprep.subr.bf16.mxu0 0
          %1236 = vmatpush2.bf16.msra.mxu0 0
          %1237 = vmatprep.subr.bf16.mxu0 0
          %1238 = vmatpush2.bf16.msra.mxu0 0
          %1239 = vmatprep.subr.bf16.mxu0 0
          %1240 = vmatpush2.bf16.msra.mxu0 0
          %1241 = vmatprep.subr.bf16.mxu0 0
          %1242 = vmatpush2.bf16.msra.mxu0 0
          %1243 = vmatprep.subr.bf16.mxu0 0
          %1244 = vmatpush2.bf16.msra.mxu0 0
          %1245 = vmatprep.subr.bf16.mxu0 0
          %1246 = vmatpush2.bf16.msra.mxu0 0
          %1247 = vmatprep.subr.bf16.mxu0 0
          %1248 = vmatpush2.bf16.msra.mxu0 0
          %1249 = vmatprep.mubr.bf16.mxu0 0
          %1250 = vmatmul.mubr.bf16.gmra.mxu0 %v1215
          %v1251 = vpop.f32.mrf.mxu0
          %v1252 = vadd.f32 %v1205, %v1251
          %v1253 = vpop.f32.mrf.mxu0
          %v1254 = vpop.f32.mrf.mxu0
          %v1255 = vadd.f32 %v1205, %v1254
          %v1256 = vpop.f32.mrf.mxu0
          %1257 = vdwg.mxu0
          %v1258 = vmul.f32 %v1252, 0.5
          %v1259 = vmul.f32 %v1255, 0.5
          %v1260 = vmul.f32 %v1252, 0.70710677
          %v1261 = vmul.f32 %v1255, 0.70710677
          %v1262 = vand.u32 2147483647, %v1260
          %v1263 = vand.u32 2147483647, %v1261
          %v1264 = vmul.f32 %v1262, 0.3275911
          %v1265 = vmul.f32 %v1263, 0.3275911
          %v1266 = vadd.f32 %v1264, 1.0
          %v1267 = vadd.f32 %v1265, 1.0
          %v1268 = vrcp.pop %v1266
          %v1269 = vmul.f32 1.0, %v1268
          %v1270 = vrcp.pop %v1267
          %v1271 = vmul.f32 1.0, %v1270
          %v1272 = vmul.f32 %v1269, 1.0614054
          %v1273 = vmul.f32 %v1271, 1.0614054
          %v1274 = vadd.f32 %v1272, -1.4531521
          %v1275 = vadd.f32 %v1273, -1.4531521
          %v1276 = vmul.f32 %v1269, %v1274
          %v1277 = vmul.f32 %v1271, %v1275
          %v1278 = vadd.f32 %v1276, 1.4214138
          %v1279 = vadd.f32 %v1277, 1.4214138
          %v1280 = vmul.f32 %v1269, %v1278
          %v1281 = vmul.f32 %v1271, %v1279
          %v1282 = vadd.f32 %v1280, -0.28449672
          %v1283 = vadd.f32 %v1281, -0.28449672
          %v1284 = vmul.f32 %v1269, %v1282
          %v1285 = vmul.f32 %v1271, %v1283
          %v1286 = vadd.f32 %v1284, 0.2548296
          %v1287 = vadd.f32 %v1285, 0.2548296
          %v1288 = vmul.f32 %v1269, %v1286
          %v1289 = vmul.f32 %v1271, %v1287
          %v1290 = vsub.f32 0.0, %v1262
          %v1291 = vsub.f32 0.0, %v1263
          %v1292 = vmul.f32 %v1290, %v1262
          %v1293 = vmul.f32 %v1291, %v1263
          %v1294 = vmul.f32 %v1292, 1.442695
          %v1295 = vpow.pop %v1294
          %v1296 = vmul.f32 %v1293, 1.442695
          %v1297 = vpow.pop %v1296
          %v1298 = vmul.f32 %v1288, %v1295
          %v1299 = vmul.f32 %v1289, %v1297
          %v1300 = vsub.f32 1.0, %v1298
          %v1301 = vsub.f32 1.0, %v1299
          %vm1302 = vcmp.ge.f32.partialorder %v1260, 0.0
          %vm1303 = vcmp.ge.f32.partialorder %v1261, 0.0
          %v1304 = vsub.f32 0.0, %v1300
          %v1305 = vsub.f32 0.0, %v1301
          %v1306 = vsel %vm1302, %v1300, %v1304
          %v1307 = vsel %vm1303, %v1301, %v1305
          %v1308 = vadd.f32 %v1306, 1.0
          %v1309 = vadd.f32 %v1307, 1.0
          %v1310 = vmul.f32 %v1258, %v1308
          %v1311 = vmul.f32 %v1259, %v1309
          %v1312 = vld [vmem:[#allocation12] sm:$0x3]
          %v1313 = vpack.c.bf16 %v1311, %v1310
          %v1314 = vld [vmem:[#allocation10] sm:$0x1]
          %v1316 = vlaneseq
          %v1317 = vshrl.u32 %v1316, 7
          %v1318 = vsub.s32 0, %v1317
          %v1319 = vrot.slane %v1314, %v1318
          %vm1321 = vcmask 31744
          %v1323 = vsel %vm1321, %v1313, 0
          %vm1325 = vcmask 1041408
          %v1327 = vsel %vm1325, %v1312, 0
          %1329 = vmatprep.subr.bf16.mxu0 0
          %1330 = vmatpush1.bf16.msra.mxu0 0
          %1331 = vmatprep.subr.bf16.mxu0 0
          %1332 = vmatpush1.bf16.msra.mxu0 0
          %1333 = vmatprep.subr.bf16.mxu0 0
          %1334 = vmatpush1.bf16.msra.mxu0 0
          %1335 = vmatprep.subr.bf16.mxu0 0
          %1336 = vmatpush1.bf16.msra.mxu0 0
          %1337 = vmatprep.subr.bf16.mxu0 0
          %1338 = vmatpush1.bf16.msra.mxu0 0
          %1339 = vmatprep.subr.bf16.mxu0 0
          %1340 = vmatpush1.bf16.msra.mxu0 0
          %1341 = vmatprep.subr.bf16.mxu0 0
          %1342 = vmatpush1.bf16.msra.mxu0 0
          %1343 = vmatprep.subr.bf16.mxu0 0
          %1344 = vmatpush1.bf16.msra.mxu0 %v1327
          %1345 = vmatprep.subr.bf16.mxu0 0
          %1346 = vmatpush2.bf16.msra.mxu0 0
          %1347 = vmatprep.subr.bf16.mxu0 0
          %1348 = vmatpush2.bf16.msra.mxu0 0
          %1349 = vmatprep.subr.bf16.mxu0 0
          %1350 = vmatpush2.bf16.msra.mxu0 0
          %1351 = vmatprep.subr.bf16.mxu0 0
          %1352 = vmatpush2.bf16.msra.mxu0 0
          %1353 = vmatprep.subr.bf16.mxu0 0
          %1354 = vmatpush2.bf16.msra.mxu0 0
          %1355 = vmatprep.subr.bf16.mxu0 0
          %1356 = vmatpush2.bf16.msra.mxu0 0
          %1357 = vmatprep.subr.bf16.mxu0 0
          %1358 = vmatpush2.bf16.msra.mxu0 0
          %1359 = vmatprep.subr.bf16.mxu0 0
          %1360 = vmatpush2.bf16.msra.mxu0 0
          %1361 = vmatprep.mubr.bf16.mxu0 0
          %1362 = vmatmul.mubr.bf16.gmra.mxu0 %v1323
          %v1363 = vpop.f32.mrf.mxu0
          %v1364 = vadd.f32 %v1319, %v1363
          %v1365 = vpop.f32.mrf.mxu0
          %v1366 = vpop.f32.mrf.mxu0
          %v1367 = vadd.f32 %v1319, %v1366
          %v1368 = vpop.f32.mrf.mxu0
          %1369 = vdwg.mxu0
          %1370 = vst.msk [vmem:[#allocation3] sm:$0xff] %vm1192, %v1364
          %1371 = vst.msk [vmem:[#allocation3 + $0x8] sm:$0xff] %vm1192, %v1367
        $region152: #{decoder_transformer_forward.1} parent=123 // pred_fallthru
          _
        %v1372 = vld [vmem:[%s22] sm:$0xff]
        %v1373 = vld [vmem:[%s1155] sm:$0x1]
        %v1374 = vld [vmem:[%s1155 + $0x1] sm:$0x1]
        %vm1375 = vcmp.gt.f32.partialorder %v1373, 0.5
        %vm1376 = vcmp.gt.f32.partialorder %v1374, 0.5
        %v1377 = vsel %vm1375, -1e+30, 0.0
        %v1378 = vsel %vm1376, -1e+30, 0.0
        %v1381 = vlaneseq
        %v1382 = vshrl.u32 %v1381, 7
        %v1383 = vsub.s32 0, %v1382
        %v1384 = vrot.slane %v1377, %v1383
        %v1385 = vlaneseq
        %v1386 = vshrl.u32 %v1385, 7
        %v1387 = vsub.s32 0, %v1386
        %v1388 = vrot.slane %v1378, %v1387
        %v1391 = vadd.f32 %v1372, %v1384
        %v1392 = vadd.f32 %v1372, %v1388
        %v1393 = vld [vmem:[%s15] sm:$0xff]
        %v1394 = vld [vmem:[%s1126] sm:$0x1]
        %v1395 = vld [vmem:[%s1126 + $0x1] sm:$0x1]
        %vm1396 = vcmp.gt.f32.partialorder %v1394, 0.5
        %vm1397 = vcmp.gt.f32.partialorder %v1395, 0.5
        %v1398 = vsel %vm1396, -1e+30, 0.0
        %v1399 = vsel %vm1397, -1e+30, 0.0
        %v1402 = vlaneseq
        %v1403 = vshrl.u32 %v1402, 7
        %v1404 = vsub.s32 0, %v1403
        %v1405 = vrot.slane %v1398, %v1404
        %v1406 = vlaneseq
        %v1407 = vshrl.u32 %v1406, 7
        %v1408 = vsub.s32 0, %v1407
        %v1409 = vrot.slane %v1399, %v1408
        %v1412 = vadd.f32 %v1393, %v1405
        %v1413 = vadd.f32 %v1393, %v1409
        %v1414 = vld [vmem:[#allocation2] sm:$0xff]
        %v1415 = vld [vmem:[#allocation2 + $0x8] sm:$0xff]
        %v1416 = vld [vmem:[#allocation3] sm:$0xff]
        %v1417 = vld [vmem:[#allocation3 + $0x8] sm:$0xff]
        %v1418 = vld [vmem:[%s1161] sm:$0xff]
        %v1419 = vld [vmem:[%s1161 + $0x8] sm:$0x3]
        %v1420 = vld [vmem:[%s1145] sm:$0xf]
        %v1421 = vld [vmem:[%s1145 + $0x4] sm:$0xf]
        %v1422 = vld [vmem:[%s1145 + $0x8] sm:$0xf]
        %v1423 = vld [vmem:[%s1145 + $0xc] sm:$0xf]
        %v1424 = vpack.c.bf16 %v1415, %v1414
        %v1425 = vld [vmem:[%s1135] sm:$0x1]
        %v1427 = vlaneseq
        %v1428 = vshrl.u32 %v1427, 7
        %v1429 = vsub.s32 0, %v1428
        %v1430 = vrot.slane %v1425, %v1429
        %v1436 = vunpack.c.l.b16 %v1420
        %v1437 = vunpack.c.l.b16 %v1421
        %v1438 = vunpack.c.l.b16 %v1422
        %v1439 = vunpack.c.l.b16 %v1423
        %v1440 = vpack.c.b16 %v1437, %v1436
        %v1441 = vpack.c.b16 %v1439, %v1438
        %vm1444 = vcmask 261120
        %v1446 = vsel %vm1444, %v1424, 0
        %1448 = vmatprep.subr.bf16.mxu0 0
        %1449 = vmatpush1.bf16.msra.mxu0 0
        %1450 = vmatprep.subr.bf16.mxu0 0
        %1451 = vmatpush1.bf16.msra.mxu0 0
        %1452 = vmatprep.subr.bf16.mxu0 0
        %1453 = vmatpush1.bf16.msra.mxu0 0
        %1454 = vmatprep.subr.bf16.mxu0 0
        %1455 = vmatpush1.bf16.msra.mxu0 0
        %1456 = vmatprep.subr.bf16.mxu0 0
        %1457 = vmatpush1.bf16.msra.mxu0 0
        %1458 = vmatprep.subr.bf16.mxu0 0
        %1459 = vmatpush1.bf16.msra.mxu0 0
        %1460 = vmatprep.subr.bf16.mxu0 0
        %1461 = vmatpush1.bf16.msra.mxu0 %v1441
        %1462 = vmatprep.subr.bf16.mxu0 0
        %1463 = vmatpush1.bf16.msra.mxu0 %v1440
        %1464 = vmatprep.subr.bf16.mxu0 0
        %1465 = vmatpush2.bf16.msra.mxu0 0
        %1466 = vmatprep.subr.bf16.mxu0 0
        %1467 = vmatpush2.bf16.msra.mxu0 0
        %1468 = vmatprep.subr.bf16.mxu0 0
        %1469 = vmatpush2.bf16.msra.mxu0 0
        %1470 = vmatprep.subr.bf16.mxu0 0
        %1471 = vmatpush2.bf16.msra.mxu0 0
        %1472 = vmatprep.subr.bf16.mxu0 0
        %1473 = vmatpush2.bf16.msra.mxu0 0
        %1474 = vmatprep.subr.bf16.mxu0 0
        %1475 = vmatpush2.bf16.msra.mxu0 0
        %1476 = vmatprep.subr.bf16.mxu0 0
        %1477 = vmatpush2.bf16.msra.mxu0 0
        %1478 = vmatprep.subr.bf16.mxu0 0
        %1479 = vmatpush2.bf16.msra.mxu0 0
        %1480 = vmatprep.mubr.bf16.mxu0 0
        %1481 = vmatmul.mubr.bf16.gmra.mxu0 %v1446
        %v1482 = vpop.f32.mrf.mxu0
        %v1483 = vadd.f32 %v1430, %v1482
        %v1484 = vpop.f32.mrf.mxu0
        %v1485 = vpop.f32.mrf.mxu0
        %v1486 = vadd.f32 %v1430, %v1485
        %v1487 = vpop.f32.mrf.mxu0
        %1488 = vdwg.mxu0
        %v1489 = vld [vmem:[%s1140] sm:$0xf]
        %v1490 = vld [vmem:[%s1140 + $0x4] sm:$0xf]
        %v1491 = vld [vmem:[%s1140 + $0x8] sm:$0xf]
        %v1492 = vld [vmem:[%s1140 + $0xc] sm:$0xf]
        %v1493 = vpack.c.bf16 %v1483, %v1483
        %v1494 = vpack.c.bf16 %v1486, %v1486
        %1496 = vrot.lane.b32.xlu0 %v1493, 96
        %v1497 = vpop.permute.xlu0 %1496
        %vm1498 = vcmask 64512
        %v1500 = vsel %vm1498, %v1493, 0
        %v1503 = vsel %vm1498, %v1497, 0
        %1505 = vmatprep.subr.bf16.mxu0 0
        %1506 = vmatpush1.bf16.xpose.msra.mxu0 0
        %1507 = vmatprep.subr.bf16.mxu0 0
        %1508 = vmatpush1.bf16.xpose.msra.mxu0 0
        %1509 = vmatprep.subr.bf16.mxu0 0
        %1510 = vmatpush1.bf16.xpose.msra.mxu0 0
        %1511 = vmatprep.subr.bf16.mxu0 0
        %1512 = vmatpush1.bf16.xpose.msra.mxu0 0
        %1513 = vmatprep.subr.bf16.mxu0 0
        %1514 = vmatpush1.bf16.xpose.msra.mxu0 0
        %1515 = vmatprep.subr.bf16.mxu0 0
        %1516 = vmatpush1.bf16.xpose.msra.mxu0 0
        %1517 = vmatprep.subr.bf16.mxu0 0
        %1518 = vmatpush1.bf16.xpose.msra.mxu0 0
        %1519 = vmatprep.subr.bf16.mxu0 0
        %1520 = vmatpush1.bf16.xpose.msra.mxu0 %v1503
        %1521 = vmatprep.subr.bf16.mxu0 0
        %1522 = vmatpush2.bf16.xpose.msra.mxu0 0
        %1523 = vmatprep.subr.bf16.mxu0 0
        %1524 = vmatpush2.bf16.xpose.msra.mxu0 0
        %1525 = vmatprep.subr.bf16.mxu0 0
        %1526 = vmatpush2.bf16.xpose.msra.mxu0 0
        %1527 = vmatprep.subr.bf16.mxu0 0
        %1528 = vmatpush2.bf16.xpose.msra.mxu0 0
        %1529 = vmatprep.subr.bf16.mxu0 0
        %1530 = vmatpush2.bf16.xpose.msra.mxu0 0
        %1531 = vmatprep.subr.bf16.mxu0 0
        %1532 = vmatpush2.bf16.xpose.msra.mxu0 0
        %1533 = vmatprep.subr.bf16.mxu0 0
        %1534 = vmatpush2.bf16.xpose.msra.mxu0 0
        %1535 = vmatprep.subr.bf16.mxu0 0
        %1536 = vmatpush2.bf16.xpose.msra.mxu0 0
        %1537 = vmatprep.mubr.bf16.mxu0 0
        %1538 = vmatmul.mubr.bf16.gmra.mxu0 %v1500
        %v1539 = vpop.f32.mrf.mxu0
        %v1540 = vadd.f32 %v1391, %v1539
        %v1541 = vpop.f32.mrf.mxu0
        %v1542 = vpop.f32.mrf.mxu0
        %v1543 = vpop.f32.mrf.mxu0
        %1544 = vdwg.mxu0
        %1546 = vrot.lane.b32.xlu0 %v1494, 96
        %v1547 = vpop.permute.xlu0 %1546
        %v1549 = vsel %vm1498, %v1494, 0
        %v1552 = vsel %vm1498, %v1547, 0
        %1554 = vmatprep.subr.bf16.mxu0 0
        %1555 = vmatpush1.bf16.xpose.msra.mxu0 0
        %1556 = vmatprep.subr.bf16.mxu0 0
        %1557 = vmatpush1.bf16.xpose.msra.mxu0 0
        %1558 = vmatprep.subr.bf16.mxu0 0
        %1559 = vmatpush1.bf16.xpose.msra.mxu0 0
        %1560 = vmatprep.subr.bf16.mxu0 0
        %1561 = vmatpush1.bf16.xpose.msra.mxu0 0
        %1562 = vmatprep.subr.bf16.mxu0 0
        %1563 = vmatpush1.bf16.xpose.msra.mxu0 0
        %1564 = vmatprep.subr.bf16.mxu0 0
        %1565 = vmatpush1.bf16.xpose.msra.mxu0 0
        %1566 = vmatprep.subr.bf16.mxu0 0
        %1567 = vmatpush1.bf16.xpose.msra.mxu0 0
        %1568 = vmatprep.subr.bf16.mxu0 0
        %1569 = vmatpush1.bf16.xpose.msra.mxu0 %v1552
        %1570 = vmatprep.subr.bf16.mxu0 0
        %1571 = vmatpush2.bf16.xpose.msra.mxu0 0
        %1572 = vmatprep.subr.bf16.mxu0 0
        %1573 = vmatpush2.bf16.xpose.msra.mxu0 0
        %1574 = vmatprep.subr.bf16.mxu0 0
        %1575 = vmatpush2.bf16.xpose.msra.mxu0 0
        %1576 = vmatprep.subr.bf16.mxu0 0
        %1577 = vmatpush2.bf16.xpose.msra.mxu0 0
        %1578 = vmatprep.subr.bf16.mxu0 0
        %1579 = vmatpush2.bf16.xpose.msra.mxu0 0
        %1580 = vmatprep.subr.bf16.mxu0 0
        %1581 = vmatpush2.bf16.xpose.msra.mxu0 0
        %1582 = vmatprep.subr.bf16.mxu0 0
        %1583 = vmatpush2.bf16.xpose.msra.mxu0 0
        %1584 = vmatprep.subr.bf16.mxu0 0
        %1585 = vmatpush2.bf16.xpose.msra.mxu0 0
        %1586 = vmatprep.mubr.bf16.mxu0 0
        %1587 = vmatmul.mubr.bf16.gmra.mxu0 %v1549
        %v1588 = vpop.f32.mrf.mxu0
        %v1589 = vadd.f32 %v1392, %v1588
        %v1590 = vpop.f32.mrf.mxu0
        %v1591 = vpop.f32.mrf.mxu0
        %v1592 = vpop.f32.mrf.mxu0
        %1593 = vdwg.mxu0
        %v1594 = vsel %vm1498, %v1540, -inf
        %1595 = vmax.xlane.f32.xlu0 %v1594
        %v1596 = vpop.xlane.xlu0 %1595
        %v1597 = vsel %vm1498, %v1589, -inf
        %1598 = vmax.xlane.f32.xlu0 %v1597
        %v1599 = vpop.xlane.xlu0 %1598
        %v1600 = vsub.f32 %v1540, %v1596
        %v1601 = vsub.f32 %v1589, %v1599
        %v1602 = vmul.f32 %v1600, 1.442695
        %v1603 = vpow.pop %v1602
        %v1604 = vmul.f32 %v1601, 1.442695
        %v1605 = vpow.pop %v1604
        %v1606 = vsel %vm1498, %v1603, 0.0
        %1607 = vadd.xlane.f32.xlu0 %v1606
        %v1608 = vpop.xlane.xlu0 %1607
        %v1609 = vsel %vm1498, %v1605, 0.0
        %1610 = vadd.xlane.f32.xlu0 %v1609
        %v1611 = vpop.xlane.xlu0 %1610
        %v1612 = vrcp.pop %v1608
        %v1613 = vmul.f32 %v1603, %v1612
        %v1614 = vrcp.pop %v1611
        %v1615 = vmul.f32 %v1605, %v1614
        %v1616 = vpack.c.bf16 %v1613, %v1613
        %v1617 = vpack.c.bf16 %v1615, %v1615
        %1618 = vrot.lane.b32.xlu0 %v1493, 64
        %v1619 = vpop.permute.xlu0 %1618
        %v1621 = vsel %vm1498, %v1616, 0
        %vm1623 = vcmask 1043456
        %v1625 = vsel %vm1623, %v1619, 0
        %1627 = vmatprep.subr.bf16.mxu0 0
        %1628 = vmatpush1.bf16.msra.mxu0 0
        %1629 = vmatprep.subr.bf16.mxu0 0
        %1630 = vmatpush1.bf16.msra.mxu0 0
        %1631 = vmatprep.subr.bf16.mxu0 0
        %1632 = vmatpush1.bf16.msra.mxu0 0
        %1633 = vmatprep.subr.bf16.mxu0 0
        %1634 = vmatpush1.bf16.msra.mxu0 0
        %1635 = vmatprep.subr.bf16.mxu0 0
        %1636 = vmatpush1.bf16.msra.mxu0 0
        %1637 = vmatprep.subr.bf16.mxu0 0
        %1638 = vmatpush1.bf16.msra.mxu0 0
        %1639 = vmatprep.subr.bf16.mxu0 0
        %1640 = vmatpush1.bf16.msra.mxu0 0
        %1641 = vmatprep.subr.bf16.mxu0 0
        %1642 = vmatpush1.bf16.msra.mxu0 %v1625
        %1643 = vmatprep.subr.bf16.mxu0 0
        %1644 = vmatpush2.bf16.msra.mxu0 0
        %1645 = vmatprep.subr.bf16.mxu0 0
        %1646 = vmatpush2.bf16.msra.mxu0 0
        %1647 = vmatprep.subr.bf16.mxu0 0
        %1648 = vmatpush2.bf16.msra.mxu0 0
        %1649 = vmatprep.subr.bf16.mxu0 0
        %1650 = vmatpush2.bf16.msra.mxu0 0
        %1651 = vmatprep.subr.bf16.mxu0 0
        %1652 = vmatpush2.bf16.msra.mxu0 0
        %1653 = vmatprep.subr.bf16.mxu0 0
        %1654 = vmatpush2.bf16.msra.mxu0 0
        %1655 = vmatprep.subr.bf16.mxu0 0
        %1656 = vmatpush2.bf16.msra.mxu0 0
        %1657 = vmatprep.subr.bf16.mxu0 0
        %1658 = vmatpush2.bf16.msra.mxu0 0
        %1659 = vmatprep.mubr.bf16.mxu0 0
        %1660 = vmatmul.mubr.bf16.gmra.mxu0 %v1621
        %v1661 = vpop.f32.mrf.mxu0
        %v1662 = vadd.f32 0.0, %v1661
        %v1663 = vpop.f32.mrf.mxu0
        %v1664 = vpop.f32.mrf.mxu0
        %v1665 = vpop.f32.mrf.mxu0
        %1666 = vdwg.mxu0
        %1667 = vrot.lane.b32.xlu0 %v1494, 64
        %v1668 = vpop.permute.xlu0 %1667
        %v1670 = vsel %vm1498, %v1617, 0
        %v1673 = vsel %vm1623, %v1668, 0
        %1675 = vmatprep.subr.bf16.mxu0 0
        %1676 = vmatpush1.bf16.msra.mxu0 0
        %1677 = vmatprep.subr.bf16.mxu0 0
        %1678 = vmatpush1.bf16.msra.mxu0 0
        %1679 = vmatprep.subr.bf16.mxu0 0
        %1680 = vmatpush1.bf16.msra.mxu0 0
        %1681 = vmatprep.subr.bf16.mxu0 0
        %1682 = vmatpush1.bf16.msra.mxu0 0
        %1683 = vmatprep.subr.bf16.mxu0 0
        %1684 = vmatpush1.bf16.msra.mxu0 0
        %1685 = vmatprep.subr.bf16.mxu0 0
        %1686 = vmatpush1.bf16.msra.mxu0 0
        %1687 = vmatprep.subr.bf16.mxu0 0
        %1688 = vmatpush1.bf16.msra.mxu0 0
        %1689 = vmatprep.subr.bf16.mxu0 0
        %1690 = vmatpush1.bf16.msra.mxu0 %v1673
        %1691 = vmatprep.subr.bf16.mxu0 0
        %1692 = vmatpush2.bf16.msra.mxu0 0
        %1693 = vmatprep.subr.bf16.mxu0 0
        %1694 = vmatpush2.bf16.msra.mxu0 0
        %1695 = vmatprep.subr.bf16.mxu0 0
        %1696 = vmatpush2.bf16.msra.mxu0 0
        %1697 = vmatprep.subr.bf16.mxu0 0
        %1698 = vmatpush2.bf16.msra.mxu0 0
        %1699 = vmatprep.subr.bf16.mxu0 0
        %1700 = vmatpush2.bf16.msra.mxu0 0
        %1701 = vmatprep.subr.bf16.mxu0 0
        %1702 = vmatpush2.bf16.msra.mxu0 0
        %1703 = vmatprep.subr.bf16.mxu0 0
        %1704 = vmatpush2.bf16.msra.mxu0 0
        %1705 = vmatprep.subr.bf16.mxu0 0
        %1706 = vmatpush2.bf16.msra.mxu0 0
        %1707 = vmatprep.mubr.bf16.mxu0 0
        %1708 = vmatmul.mubr.bf16.gmra.mxu0 %v1670
        %v1709 = vpop.f32.mrf.mxu0
        %v1710 = vadd.f32 0.0, %v1709
        %v1711 = vpop.f32.mrf.mxu0
        %v1712 = vpop.f32.mrf.mxu0
        %v1713 = vpop.f32.mrf.mxu0
        %1714 = vdwg.mxu0
        %1715 = vrot.lane.b32.xlu0 %v1493, 120
        %v1716 = vpop.permute.xlu0 %1715
        %1717 = vrot.lane.b32.xlu0 %v1493, 88
        %v1718 = vpop.permute.xlu0 %1717
        %v1720 = vsel %vm1498, %v1716, 0
        %v1723 = vsel %vm1498, %v1718, 0
        %1725 = vmatprep.subr.bf16.mxu0 0
        %1726 = vmatpush1.bf16.xpose.msra.mxu0 0
        %1727 = vmatprep.subr.bf16.mxu0 0
        %1728 = vmatpush1.bf16.xpose.msra.mxu0 0
        %1729 = vmatprep.subr.bf16.mxu0 0
        %1730 = vmatpush1.bf16.xpose.msra.mxu0 0
        %1731 = vmatprep.subr.bf16.mxu0 0
        %1732 = vmatpush1.bf16.xpose.msra.mxu0 0
        %1733 = vmatprep.subr.bf16.mxu0 0
        %1734 = vmatpush1.bf16.xpose.msra.mxu0 0
        %1735 = vmatprep.subr.bf16.mxu0 0
        %1736 = vmatpush1.bf16.xpose.msra.mxu0 0
        %1737 = vmatprep.subr.bf16.mxu0 0
        %1738 = vmatpush1.bf16.xpose.msra.mxu0 0
        %1739 = vmatprep.subr.bf16.mxu0 0
        %1740 = vmatpush1.bf16.xpose.msra.mxu0 %v1723
        %1741 = vmatprep.subr.bf16.mxu0 0
        %1742 = vmatpush2.bf16.xpose.msra.mxu0 0
        %1743 = vmatprep.subr.bf16.mxu0 0
        %1744 = vmatpush2.bf16.xpose.msra.mxu0 0
        %1745 = vmatprep.subr.bf16.mxu0 0
        %1746 = vmatpush2.bf16.xpose.msra.mxu0 0
        %1747 = vmatprep.subr.bf16.mxu0 0
        %1748 = vmatpush2.bf16.xpose.msra.mxu0 0
        %1749 = vmatprep.subr.bf16.mxu0 0
        %1750 = vmatpush2.bf16.xpose.msra.mxu0 0
        %1751 = vmatprep.subr.bf16.mxu0 0
        %1752 = vmatpush2.bf16.xpose.msra.mxu0 0
        %1753 = vmatprep.subr.bf16.mxu0 0
        %1754 = vmatpush2.bf16.xpose.msra.mxu0 0
        %1755 = vmatprep.subr.bf16.mxu0 0
        %1756 = vmatpush2.bf16.xpose.msra.mxu0 0
        %1757 = vmatprep.mubr.bf16.mxu0 0
        %1758 = vmatmul.mubr.bf16.gmra.mxu0 %v1720
        %v1759 = vpop.f32.mrf.mxu0
        %v1760 = vadd.f32 %v1391, %v1759
        %v1761 = vpop.f32.mrf.mxu0
        %v1762 = vpop.f32.mrf.mxu0
        %v1763 = vpop.f32.mrf.mxu0
        %1764 = vdwg.mxu0
        %1765 = vrot.lane.b32.xlu0 %v1494, 120
        %v1766 = vpop.permute.xlu0 %1765
        %1767 = vrot.lane.b32.xlu0 %v1494, 88
        %v1768 = vpop.permute.xlu0 %1767
        %v1770 = vsel %vm1498, %v1766, 0
        %v1773 = vsel %vm1498, %v1768, 0
        %1775 = vmatprep.subr.bf16.mxu0 0
        %1776 = vmatpush1.bf16.xpose.msra.mxu0 0
        %1777 = vmatprep.subr.bf16.mxu0 0
        %1778 = vmatpush1.bf16.xpose.msra.mxu0 0
        %1779 = vmatprep.subr.bf16.mxu0 0
        %1780 = vmatpush1.bf16.xpose.msra.mxu0 0
        %1781 = vmatprep.subr.bf16.mxu0 0
        %1782 = vmatpush1.bf16.xpose.msra.mxu0 0
        %1783 = vmatprep.subr.bf16.mxu0 0
        %1784 = vmatpush1.bf16.xpose.msra.mxu0 0
        %1785 = vmatprep.subr.bf16.mxu0 0
        %1786 = vmatpush1.bf16.xpose.msra.mxu0 0
        %1787 = vmatprep.subr.bf16.mxu0 0
        %1788 = vmatpush1.bf16.xpose.msra.mxu0 0
        %1789 = vmatprep.subr.bf16.mxu0 0
        %1790 = vmatpush1.bf16.xpose.msra.mxu0 %v1773
        %1791 = vmatprep.subr.bf16.mxu0 0
        %1792 = vmatpush2.bf16.xpose.msra.mxu0 0
        %1793 = vmatprep.subr.bf16.mxu0 0
        %1794 = vmatpush2.bf16.xpose.msra.mxu0 0
        %1795 = vmatprep.subr.bf16.mxu0 0
        %1796 = vmatpush2.bf16.xpose.msra.mxu0 0
        %1797 = vmatprep.subr.bf16.mxu0 0
        %1798 = vmatpush2.bf16.xpose.msra.mxu0 0
        %1799 = vmatprep.subr.bf16.mxu0 0
        %1800 = vmatpush2.bf16.xpose.msra.mxu0 0
        %1801 = vmatprep.subr.bf16.mxu0 0
        %1802 = vmatpush2.bf16.xpose.msra.mxu0 0
        %1803 = vmatprep.subr.bf16.mxu0 0
        %1804 = vmatpush2.bf16.xpose.msra.mxu0 0
        %1805 = vmatprep.subr.bf16.mxu0 0
        %1806 = vmatpush2.bf16.xpose.msra.mxu0 0
        %1807 = vmatprep.mubr.bf16.mxu0 0
        %1808 = vmatmul.mubr.bf16.gmra.mxu0 %v1770
        %v1809 = vpop.f32.mrf.mxu0
        %v1810 = vadd.f32 %v1392, %v1809
        %v1811 = vpop.f32.mrf.mxu0
        %v1812 = vpop.f32.mrf.mxu0
        %v1813 = vpop.f32.mrf.mxu0
        %1814 = vdwg.mxu0
        %v1815 = vsel %vm1498, %v1760, -inf
        %1816 = vmax.xlane.f32.xlu0 %v1815
        %v1817 = vpop.xlane.xlu0 %1816
        %v1818 = vsel %vm1498, %v1810, -inf
        %1819 = vmax.xlane.f32.xlu0 %v1818
        %v1820 = vpop.xlane.xlu0 %1819
        %v1821 = vsub.f32 %v1760, %v1817
        %v1822 = vsub.f32 %v1810, %v1820
        %v1823 = vmul.f32 %v1821, 1.442695
        %v1824 = vpow.pop %v1823
        %v1825 = vmul.f32 %v1822, 1.442695
        %v1826 = vpow.pop %v1825
        %v1827 = vsel %vm1498, %v1824, 0.0
        %1828 = vadd.xlane.f32.xlu0 %v1827
        %v1829 = vpop.xlane.xlu0 %1828
        %v1830 = vsel %vm1498, %v1826, 0.0
        %1831 = vadd.xlane.f32.xlu0 %v1830
        %v1832 = vpop.xlane.xlu0 %1831
        %v1833 = vrcp.pop %v1829
        %v1834 = vmul.f32 %v1824, %v1833
        %v1835 = vrcp.pop %v1832
        %v1836 = vmul.f32 %v1826, %v1835
        %v1837 = vpack.c.bf16 %v1834, %v1834
        %v1838 = vpack.c.bf16 %v1836, %v1836
        %1839 = vrot.lane.b32.xlu0 %v1493, 56
        %v1840 = vpop.permute.xlu0 %1839
        %v1842 = vsel %vm1498, %v1837, 0
        %v1845 = vsel %vm1623, %v1840, 0
        %1847 = vmatprep.subr.bf16.mxu0 0
        %1848 = vmatpush1.bf16.msra.mxu0 0
        %1849 = vmatprep.subr.bf16.mxu0 0
        %1850 = vmatpush1.bf16.msra.mxu0 0
        %1851 = vmatprep.subr.bf16.mxu0 0
        %1852 = vmatpush1.bf16.msra.mxu0 0
        %1853 = vmatprep.subr.bf16.mxu0 0
        %1854 = vmatpush1.bf16.msra.mxu0 0
        %1855 = vmatprep.subr.bf16.mxu0 0
        %1856 = vmatpush1.bf16.msra.mxu0 0
        %1857 = vmatprep.subr.bf16.mxu0 0
        %1858 = vmatpush1.bf16.msra.mxu0 0
        %1859 = vmatprep.subr.bf16.mxu0 0
        %1860 = vmatpush1.bf16.msra.mxu0 0
        %1861 = vmatprep.subr.bf16.mxu0 0
        %1862 = vmatpush1.bf16.msra.mxu0 %v1845
        %1863 = vmatprep.subr.bf16.mxu0 0
        %1864 = vmatpush2.bf16.msra.mxu0 0
        %1865 = vmatprep.subr.bf16.mxu0 0
        %1866 = vmatpush2.bf16.msra.mxu0 0
        %1867 = vmatprep.subr.bf16.mxu0 0
        %1868 = vmatpush2.bf16.msra.mxu0 0
        %1869 = vmatprep.subr.bf16.mxu0 0
        %1870 = vmatpush2.bf16.msra.mxu0 0
        %1871 = vmatprep.subr.bf16.mxu0 0
        %1872 = vmatpush2.bf16.msra.mxu0 0
        %1873 = vmatprep.subr.bf16.mxu0 0
        %1874 = vmatpush2.bf16.msra.mxu0 0
        %1875 = vmatprep.subr.bf16.mxu0 0
        %1876 = vmatpush2.bf16.msra.mxu0 0
        %1877 = vmatprep.subr.bf16.mxu0 0
        %1878 = vmatpush2.bf16.msra.mxu0 0
        %1879 = vmatprep.mubr.bf16.mxu0 0
        %1880 = vmatmul.mubr.bf16.gmra.mxu0 %v1842
        %v1881 = vpop.f32.mrf.mxu0
        %v1882 = vadd.f32 0.0, %v1881
        %v1883 = vpop.f32.mrf.mxu0
        %v1884 = vpop.f32.mrf.mxu0
        %v1885 = vpop.f32.mrf.mxu0
        %1886 = vdwg.mxu0
        %1887 = vrot.lane.b32.xlu0 %v1494, 56
        %v1888 = vpop.permute.xlu0 %1887
        %v1890 = vsel %vm1498, %v1838, 0
        %v1893 = vsel %vm1623, %v1888, 0
        %1895 = vmatprep.subr.bf16.mxu0 0
        %1896 = vmatpush1.bf16.msra.mxu0 0
        %1897 = vmatprep.subr.bf16.mxu0 0
        %1898 = vmatpush1.bf16.msra.mxu0 0
        %1899 = vmatprep.subr.bf16.mxu0 0
        %1900 = vmatpush1.bf16.msra.mxu0 0
        %1901 = vmatprep.subr.bf16.mxu0 0
        %1902 = vmatpush1.bf16.msra.mxu0 0
        %1903 = vmatprep.subr.bf16.mxu0 0
        %1904 = vmatpush1.bf16.msra.mxu0 0
        %1905 = vmatprep.subr.bf16.mxu0 0
        %1906 = vmatpush1.bf16.msra.mxu0 0
        %1907 = vmatprep.subr.bf16.mxu0 0
        %1908 = vmatpush1.bf16.msra.mxu0 0
        %1909 = vmatprep.subr.bf16.mxu0 0
        %1910 = vmatpush1.bf16.msra.mxu0 %v1893
        %1911 = vmatprep.subr.bf16.mxu0 0
        %1912 = vmatpush2.bf16.msra.mxu0 0
        %1913 = vmatprep.subr.bf16.mxu0 0
        %1914 = vmatpush2.bf16.msra.mxu0 0
        %1915 = vmatprep.subr.bf16.mxu0 0
        %1916 = vmatpush2.bf16.msra.mxu0 0
        %1917 = vmatprep.subr.bf16.mxu0 0
        %1918 = vmatpush2.bf16.msra.mxu0 0
        %1919 = vmatprep.subr.bf16.mxu0 0
        %1920 = vmatpush2.bf16.msra.mxu0 0
        %1921 = vmatprep.subr.bf16.mxu0 0
        %1922 = vmatpush2.bf16.msra.mxu0 0
        %1923 = vmatprep.subr.bf16.mxu0 0
        %1924 = vmatpush2.bf16.msra.mxu0 0
        %1925 = vmatprep.subr.bf16.mxu0 0
        %1926 = vmatpush2.bf16.msra.mxu0 0
        %1927 = vmatprep.mubr.bf16.mxu0 0
        %1928 = vmatmul.mubr.bf16.gmra.mxu0 %v1890
        %v1929 = vpop.f32.mrf.mxu0
        %v1930 = vadd.f32 0.0, %v1929
        %v1931 = vpop.f32.mrf.mxu0
        %v1932 = vpop.f32.mrf.mxu0
        %v1933 = vpop.f32.mrf.mxu0
        %1934 = vdwg.mxu0
        %1935 = vrot.lane.b32.xlu0 %v1493, 112
        %v1936 = vpop.permute.xlu0 %1935
        %1937 = vrot.lane.b32.xlu0 %v1493, 80
        %v1938 = vpop.permute.xlu0 %1937
        %v1940 = vsel %vm1498, %v1936, 0
        %v1943 = vsel %vm1498, %v1938, 0
        %1945 = vmatprep.subr.bf16.mxu0 0
        %1946 = vmatpush1.bf16.xpose.msra.mxu0 0
        %1947 = vmatprep.subr.bf16.mxu0 0
        %1948 = vmatpush1.bf16.xpose.msra.mxu0 0
        %1949 = vmatprep.subr.bf16.mxu0 0
        %1950 = vmatpush1.bf16.xpose.msra.mxu0 0
        %1951 = vmatprep.subr.bf16.mxu0 0
        %1952 = vmatpush1.bf16.xpose.msra.mxu0 0
        %1953 = vmatprep.subr.bf16.mxu0 0
        %1954 = vmatpush1.bf16.xpose.msra.mxu0 0
        %1955 = vmatprep.subr.bf16.mxu0 0
        %1956 = vmatpush1.bf16.xpose.msra.mxu0 0
        %1957 = vmatprep.subr.bf16.mxu0 0
        %1958 = vmatpush1.bf16.xpose.msra.mxu0 0
        %1959 = vmatprep.subr.bf16.mxu0 0
        %1960 = vmatpush1.bf16.xpose.msra.mxu0 %v1943
        %1961 = vmatprep.subr.bf16.mxu0 0
        %1962 = vmatpush2.bf16.xpose.msra.mxu0 0
        %1963 = vmatprep.subr.bf16.mxu0 0
        %1964 = vmatpush2.bf16.xpose.msra.mxu0 0
        %1965 = vmatprep.subr.bf16.mxu0 0
        %1966 = vmatpush2.bf16.xpose.msra.mxu0 0
        %1967 = vmatprep.subr.bf16.mxu0 0
        %1968 = vmatpush2.bf16.xpose.msra.mxu0 0
        %1969 = vmatprep.subr.bf16.mxu0 0
        %1970 = vmatpush2.bf16.xpose.msra.mxu0 0
        %1971 = vmatprep.subr.bf16.mxu0 0
        %1972 = vmatpush2.bf16.xpose.msra.mxu0 0
        %1973 = vmatprep.subr.bf16.mxu0 0
        %1974 = vmatpush2.bf16.xpose.msra.mxu0 0
        %1975 = vmatprep.subr.bf16.mxu0 0
        %1976 = vmatpush2.bf16.xpose.msra.mxu0 0
        %1977 = vmatprep.mubr.bf16.mxu0 0
        %1978 = vmatmul.mubr.bf16.gmra.mxu0 %v1940
        %v1979 = vpop.f32.mrf.mxu0
        %v1980 = vadd.f32 %v1391, %v1979
        %v1981 = vpop.f32.mrf.mxu0
        %v1982 = vpop.f32.mrf.mxu0
        %v1983 = vpop.f32.mrf.mxu0
        %1984 = vdwg.mxu0
        %1985 = vrot.lane.b32.xlu0 %v1494, 112
        %v1986 = vpop.permute.xlu0 %1985
        %1987 = vrot.lane.b32.xlu0 %v1494, 80
        %v1988 = vpop.permute.xlu0 %1987
        %v1990 = vsel %vm1498, %v1986, 0
        %v1993 = vsel %vm1498, %v1988, 0
        %1995 = vmatprep.subr.bf16.mxu0 0
        %1996 = vmatpush1.bf16.xpose.msra.mxu0 0
        %1997 = vmatprep.subr.bf16.mxu0 0
        %1998 = vmatpush1.bf16.xpose.msra.mxu0 0
        %1999 = vmatprep.subr.bf16.mxu0 0
        %2000 = vmatpush1.bf16.xpose.msra.mxu0 0
        %2001 = vmatprep.subr.bf16.mxu0 0
        %2002 = vmatpush1.bf16.xpose.msra.mxu0 0
        %2003 = vmatprep.subr.bf16.mxu0 0
        %2004 = vmatpush1.bf16.xpose.msra.mxu0 0
        %2005 = vmatprep.subr.bf16.mxu0 0
        %2006 = vmatpush1.bf16.xpose.msra.mxu0 0
        %2007 = vmatprep.subr.bf16.mxu0 0
        %2008 = vmatpush1.bf16.xpose.msra.mxu0 0
        %2009 = vmatprep.subr.bf16.mxu0 0
        %2010 = vmatpush1.bf16.xpose.msra.mxu0 %v1993
        %2011 = vmatprep.subr.bf16.mxu0 0
        %2012 = vmatpush2.bf16.xpose.msra.mxu0 0
        %2013 = vmatprep.subr.bf16.mxu0 0
        %2014 = vmatpush2.bf16.xpose.msra.mxu0 0
        %2015 = vmatprep.subr.bf16.mxu0 0
        %2016 = vmatpush2.bf16.xpose.msra.mxu0 0
        %2017 = vmatprep.subr.bf16.mxu0 0
        %2018 = vmatpush2.bf16.xpose.msra.mxu0 0
        %2019 = vmatprep.subr.bf16.mxu0 0
        %2020 = vmatpush2.bf16.xpose.msra.mxu0 0
        %2021 = vmatprep.subr.bf16.mxu0 0
        %2022 = vmatpush2.bf16.xpose.msra.mxu0 0
        %2023 = vmatprep.subr.bf16.mxu0 0
        %2024 = vmatpush2.bf16.xpose.msra.mxu0 0
        %2025 = vmatprep.subr.bf16.mxu0 0
        %2026 = vmatpush2.bf16.xpose.msra.mxu0 0
        %2027 = vmatprep.mubr.bf16.mxu0 0
        %2028 = vmatmul.mubr.bf16.gmra.mxu0 %v1990
        %v2029 = vpop.f32.mrf.mxu0
        %v2030 = vadd.f32 %v1392, %v2029
        %v2031 = vpop.f32.mrf.mxu0
        %v2032 = vpop.f32.mrf.mxu0
        %v2033 = vpop.f32.mrf.mxu0
        %2034 = vdwg.mxu0
        %v2035 = vsel %vm1498, %v1980, -inf
        %2036 = vmax.xlane.f32.xlu0 %v2035
        %v2037 = vpop.xlane.xlu0 %2036
        %v2038 = vsel %vm1498, %v2030, -inf
        %2039 = vmax.xlane.f32.xlu0 %v2038
        %v2040 = vpop.xlane.xlu0 %2039
        %v2041 = vsub.f32 %v1980, %v2037
        %v2042 = vsub.f32 %v2030, %v2040
        %v2043 = vmul.f32 %v2041, 1.442695
        %v2044 = vpow.pop %v2043
        %v2045 = vmul.f32 %v2042, 1.442695
        %v2046 = vpow.pop %v2045
        %v2047 = vsel %vm1498, %v2044, 0.0
        %2048 = vadd.xlane.f32.xlu0 %v2047
        %v2049 = vpop.xlane.xlu0 %2048
        %v2050 = vsel %vm1498, %v2046, 0.0
        %2051 = vadd.xlane.f32.xlu0 %v2050
        %v2052 = vpop.xlane.xlu0 %2051
        %v2053 = vrcp.pop %v2049
        %v2054 = vmul.f32 %v2044, %v2053
        %v2055 = vrcp.pop %v2052
        %v2056 = vmul.f32 %v2046, %v2055
        %v2057 = vpack.c.bf16 %v2054, %v2054
        %v2058 = vpack.c.bf16 %v2056, %v2056
        %2059 = vrot.lane.b32.xlu0 %v1493, 48
        %v2060 = vpop.permute.xlu0 %2059
        %v2062 = vsel %vm1498, %v2057, 0
        %v2065 = vsel %vm1623, %v2060, 0
        %2067 = vmatprep.subr.bf16.mxu0 0
        %2068 = vmatpush1.bf16.msra.mxu0 0
        %2069 = vmatprep.subr.bf16.mxu0 0
        %2070 = vmatpush1.bf16.msra.mxu0 0
        %2071 = vmatprep.subr.bf16.mxu0 0
        %2072 = vmatpush1.bf16.msra.mxu0 0
        %2073 = vmatprep.subr.bf16.mxu0 0
        %2074 = vmatpush1.bf16.msra.mxu0 0
        %2075 = vmatprep.subr.bf16.mxu0 0
        %2076 = vmatpush1.bf16.msra.mxu0 0
        %2077 = vmatprep.subr.bf16.mxu0 0
        %2078 = vmatpush1.bf16.msra.mxu0 0
        %2079 = vmatprep.subr.bf16.mxu0 0
        %2080 = vmatpush1.bf16.msra.mxu0 0
        %2081 = vmatprep.subr.bf16.mxu0 0
        %2082 = vmatpush1.bf16.msra.mxu0 %v2065
        %2083 = vmatprep.subr.bf16.mxu0 0
        %2084 = vmatpush2.bf16.msra.mxu0 0
        %2085 = vmatprep.subr.bf16.mxu0 0
        %2086 = vmatpush2.bf16.msra.mxu0 0
        %2087 = vmatprep.subr.bf16.mxu0 0
        %2088 = vmatpush2.bf16.msra.mxu0 0
        %2089 = vmatprep.subr.bf16.mxu0 0
        %2090 = vmatpush2.bf16.msra.mxu0 0
        %2091 = vmatprep.subr.bf16.mxu0 0
        %2092 = vmatpush2.bf16.msra.mxu0 0
        %2093 = vmatprep.subr.bf16.mxu0 0
        %2094 = vmatpush2.bf16.msra.mxu0 0
        %2095 = vmatprep.subr.bf16.mxu0 0
        %2096 = vmatpush2.bf16.msra.mxu0 0
        %2097 = vmatprep.subr.bf16.mxu0 0
        %2098 = vmatpush2.bf16.msra.mxu0 0
        %2099 = vmatprep.mubr.bf16.mxu0 0
        %2100 = vmatmul.mubr.bf16.gmra.mxu0 %v2062
        %v2101 = vpop.f32.mrf.mxu0
        %v2102 = vadd.f32 0.0, %v2101
        %v2103 = vpop.f32.mrf.mxu0
        %v2104 = vpop.f32.mrf.mxu0
        %v2105 = vpop.f32.mrf.mxu0
        %2106 = vdwg.mxu0
        %2107 = vrot.lane.b32.xlu0 %v1494, 48
        %v2108 = vpop.permute.xlu0 %2107
        %v2110 = vsel %vm1498, %v2058, 0
        %v2113 = vsel %vm1623, %v2108, 0
        %2115 = vmatprep.subr.bf16.mxu0 0
        %2116 = vmatpush1.bf16.msra.mxu0 0
        %2117 = vmatprep.subr.bf16.mxu0 0
        %2118 = vmatpush1.bf16.msra.mxu0 0
        %2119 = vmatprep.subr.bf16.mxu0 0
        %2120 = vmatpush1.bf16.msra.mxu0 0
        %2121 = vmatprep.subr.bf16.mxu0 0
        %2122 = vmatpush1.bf16.msra.mxu0 0
        %2123 = vmatprep.subr.bf16.mxu0 0
        %2124 = vmatpush1.bf16.msra.mxu0 0
        %2125 = vmatprep.subr.bf16.mxu0 0
        %2126 = vmatpush1.bf16.msra.mxu0 0
        %2127 = vmatprep.subr.bf16.mxu0 0
        %2128 = vmatpush1.bf16.msra.mxu0 0
        %2129 = vmatprep.subr.bf16.mxu0 0
        %2130 = vmatpush1.bf16.msra.mxu0 %v2113
        %2131 = vmatprep.subr.bf16.mxu0 0
        %2132 = vmatpush2.bf16.msra.mxu0 0
        %2133 = vmatprep.subr.bf16.mxu0 0
        %2134 = vmatpush2.bf16.msra.mxu0 0
        %2135 = vmatprep.subr.bf16.mxu0 0
        %2136 = vmatpush2.bf16.msra.mxu0 0
        %2137 = vmatprep.subr.bf16.mxu0 0
        %2138 = vmatpush2.bf16.msra.mxu0 0
        %2139 = vmatprep.subr.bf16.mxu0 0
        %2140 = vmatpush2.bf16.msra.mxu0 0
        %2141 = vmatprep.subr.bf16.mxu0 0
        %2142 = vmatpush2.bf16.msra.mxu0 0
        %2143 = vmatprep.subr.bf16.mxu0 0
        %2144 = vmatpush2.bf16.msra.mxu0 0
        %2145 = vmatprep.subr.bf16.mxu0 0
        %2146 = vmatpush2.bf16.msra.mxu0 0
        %2147 = vmatprep.mubr.bf16.mxu0 0
        %2148 = vmatmul.mubr.bf16.gmra.mxu0 %v2110
        %v2149 = vpop.f32.mrf.mxu0
        %v2150 = vadd.f32 0.0, %v2149
        %v2151 = vpop.f32.mrf.mxu0
        %v2152 = vpop.f32.mrf.mxu0
        %v2153 = vpop.f32.mrf.mxu0
        %2154 = vdwg.mxu0
        %2155 = vrot.lane.b32.xlu0 %v1493, 104
        %v2156 = vpop.permute.xlu0 %2155
        %2157 = vrot.lane.b32.xlu0 %v1493, 72
        %v2158 = vpop.permute.xlu0 %2157
        %v2160 = vsel %vm1498, %v2156, 0
        %v2163 = vsel %vm1498, %v2158, 0
        %2165 = vmatprep.subr.bf16.mxu0 0
        %2166 = vmatpush1.bf16.xpose.msra.mxu0 0
        %2167 = vmatprep.subr.bf16.mxu0 0
        %2168 = vmatpush1.bf16.xpose.msra.mxu0 0
        %2169 = vmatprep.subr.bf16.mxu0 0
        %2170 = vmatpush1.bf16.xpose.msra.mxu0 0
        %2171 = vmatprep.subr.bf16.mxu0 0
        %2172 = vmatpush1.bf16.xpose.msra.mxu0 0
        %2173 = vmatprep.subr.bf16.mxu0 0
        %2174 = vmatpush1.bf16.xpose.msra.mxu0 0
        %2175 = vmatprep.subr.bf16.mxu0 0
        %2176 = vmatpush1.bf16.xpose.msra.mxu0 0
        %2177 = vmatprep.subr.bf16.mxu0 0
        %2178 = vmatpush1.bf16.xpose.msra.mxu0 0
        %2179 = vmatprep.subr.bf16.mxu0 0
        %2180 = vmatpush1.bf16.xpose.msra.mxu0 %v2163
        %2181 = vmatprep.subr.bf16.mxu0 0
        %2182 = vmatpush2.bf16.xpose.msra.mxu0 0
        %2183 = vmatprep.subr.bf16.mxu0 0
        %2184 = vmatpush2.bf16.xpose.msra.mxu0 0
        %2185 = vmatprep.subr.bf16.mxu0 0
        %2186 = vmatpush2.bf16.xpose.msra.mxu0 0
        %2187 = vmatprep.subr.bf16.mxu0 0
        %2188 = vmatpush2.bf16.xpose.msra.mxu0 0
        %2189 = vmatprep.subr.bf16.mxu0 0
        %2190 = vmatpush2.bf16.xpose.msra.mxu0 0
        %2191 = vmatprep.subr.bf16.mxu0 0
        %2192 = vmatpush2.bf16.xpose.msra.mxu0 0
        %2193 = vmatprep.subr.bf16.mxu0 0
        %2194 = vmatpush2.bf16.xpose.msra.mxu0 0
        %2195 = vmatprep.subr.bf16.mxu0 0
        %2196 = vmatpush2.bf16.xpose.msra.mxu0 0
        %2197 = vmatprep.mubr.bf16.mxu0 0
        %2198 = vmatmul.mubr.bf16.gmra.mxu0 %v2160
        %v2199 = vpop.f32.mrf.mxu0
        %v2200 = vadd.f32 %v1391, %v2199
        %v2201 = vpop.f32.mrf.mxu0
        %v2202 = vpop.f32.mrf.mxu0
        %v2203 = vpop.f32.mrf.mxu0
        %2204 = vdwg.mxu0
        %2205 = vrot.lane.b32.xlu0 %v1494, 104
        %v2206 = vpop.permute.xlu0 %2205
        %2207 = vrot.lane.b32.xlu0 %v1494, 72
        %v2208 = vpop.permute.xlu0 %2207
        %v2210 = vsel %vm1498, %v2206, 0
        %v2213 = vsel %vm1498, %v2208, 0
        %2215 = vmatprep.subr.bf16.mxu0 0
        %2216 = vmatpush1.bf16.xpose.msra.mxu0 0
        %2217 = vmatprep.subr.bf16.mxu0 0
        %2218 = vmatpush1.bf16.xpose.msra.mxu0 0
        %2219 = vmatprep.subr.bf16.mxu0 0
        %2220 = vmatpush1.bf16.xpose.msra.mxu0 0
        %2221 = vmatprep.subr.bf16.mxu0 0
        %2222 = vmatpush1.bf16.xpose.msra.mxu0 0
        %2223 = vmatprep.subr.bf16.mxu0 0
        %2224 = vmatpush1.bf16.xpose.msra.mxu0 0
        %2225 = vmatprep.subr.bf16.mxu0 0
        %2226 = vmatpush1.bf16.xpose.msra.mxu0 0
        %2227 = vmatprep.subr.bf16.mxu0 0
        %2228 = vmatpush1.bf16.xpose.msra.mxu0 0
        %2229 = vmatprep.subr.bf16.mxu0 0
        %2230 = vmatpush1.bf16.xpose.msra.mxu0 %v2213
        %2231 = vmatprep.subr.bf16.mxu0 0
        %2232 = vmatpush2.bf16.xpose.msra.mxu0 0
        %2233 = vmatprep.subr.bf16.mxu0 0
        %2234 = vmatpush2.bf16.xpose.msra.mxu0 0
        %2235 = vmatprep.subr.bf16.mxu0 0
        %2236 = vmatpush2.bf16.xpose.msra.mxu0 0
        %2237 = vmatprep.subr.bf16.mxu0 0
        %2238 = vmatpush2.bf16.xpose.msra.mxu0 0
        %2239 = vmatprep.subr.bf16.mxu0 0
        %2240 = vmatpush2.bf16.xpose.msra.mxu0 0
        %2241 = vmatprep.subr.bf16.mxu0 0
        %2242 = vmatpush2.bf16.xpose.msra.mxu0 0
        %2243 = vmatprep.subr.bf16.mxu0 0
        %2244 = vmatpush2.bf16.xpose.msra.mxu0 0
        %2245 = vmatprep.subr.bf16.mxu0 0
        %2246 = vmatpush2.bf16.xpose.msra.mxu0 0
        %2247 = vmatprep.mubr.bf16.mxu0 0
        %2248 = vmatmul.mubr.bf16.gmra.mxu0 %v2210
        %v2249 = vpop.f32.mrf.mxu0
        %v2250 = vadd.f32 %v1392, %v2249
        %v2251 = vpop.f32.mrf.mxu0
        %v2252 = vpop.f32.mrf.mxu0
        %v2253 = vpop.f32.mrf.mxu0
        %2254 = vdwg.mxu0
        %v2255 = vsel %vm1498, %v2200, -inf
        %2256 = vmax.xlane.f32.xlu0 %v2255
        %v2257 = vpop.xlane.xlu0 %2256
        %v2258 = vsel %vm1498, %v2250, -inf
        %2259 = vmax.xlane.f32.xlu0 %v2258
        %v2260 = vpop.xlane.xlu0 %2259
        %v2261 = vsub.f32 %v2200, %v2257
        %v2262 = vsub.f32 %v2250, %v2260
        %v2263 = vmul.f32 %v2261, 1.442695
        %v2264 = vpow.pop %v2263
        %v2265 = vmul.f32 %v2262, 1.442695
        %v2266 = vpow.pop %v2265
        %v2267 = vsel %vm1498, %v2264, 0.0
        %2268 = vadd.xlane.f32.xlu0 %v2267
        %v2269 = vpop.xlane.xlu0 %2268
        %v2270 = vsel %vm1498, %v2266, 0.0
        %2271 = vadd.xlane.f32.xlu0 %v2270
        %v2272 = vpop.xlane.xlu0 %2271
        %v2273 = vrcp.pop %v2269
        %v2274 = vmul.f32 %v2264, %v2273
        %v2275 = vrcp.pop %v2272
        %v2276 = vmul.f32 %v2266, %v2275
        %v2277 = vpack.c.bf16 %v2274, %v2274
        %v2278 = vpack.c.bf16 %v2276, %v2276
        %2279 = vrot.lane.b32.xlu0 %v1493, 40
        %v2280 = vpop.permute.xlu0 %2279
        %v2282 = vsel %vm1498, %v2277, 0
        %v2285 = vsel %vm1623, %v2280, 0
        %2287 = vmatprep.subr.bf16.mxu0 0
        %2288 = vmatpush1.bf16.msra.mxu0 0
        %2289 = vmatprep.subr.bf16.mxu0 0
        %2290 = vmatpush1.bf16.msra.mxu0 0
        %2291 = vmatprep.subr.bf16.mxu0 0
        %2292 = vmatpush1.bf16.msra.mxu0 0
        %2293 = vmatprep.subr.bf16.mxu0 0
        %2294 = vmatpush1.bf16.msra.mxu0 0
        %2295 = vmatprep.subr.bf16.mxu0 0
        %2296 = vmatpush1.bf16.msra.mxu0 0
        %2297 = vmatprep.subr.bf16.mxu0 0
        %2298 = vmatpush1.bf16.msra.mxu0 0
        %2299 = vmatprep.subr.bf16.mxu0 0
        %2300 = vmatpush1.bf16.msra.mxu0 0
        %2301 = vmatprep.subr.bf16.mxu0 0
        %2302 = vmatpush1.bf16.msra.mxu0 %v2285
        %2303 = vmatprep.subr.bf16.mxu0 0
        %2304 = vmatpush2.bf16.msra.mxu0 0
        %2305 = vmatprep.subr.bf16.mxu0 0
        %2306 = vmatpush2.bf16.msra.mxu0 0
        %2307 = vmatprep.subr.bf16.mxu0 0
        %2308 = vmatpush2.bf16.msra.mxu0 0
        %2309 = vmatprep.subr.bf16.mxu0 0
        %2310 = vmatpush2.bf16.msra.mxu0 0
        %2311 = vmatprep.subr.bf16.mxu0 0
        %2312 = vmatpush2.bf16.msra.mxu0 0
        %2313 = vmatprep.subr.bf16.mxu0 0
        %2314 = vmatpush2.bf16.msra.mxu0 0
        %2315 = vmatprep.subr.bf16.mxu0 0
        %2316 = vmatpush2.bf16.msra.mxu0 0
        %2317 = vmatprep.subr.bf16.mxu0 0
        %2318 = vmatpush2.bf16.msra.mxu0 0
        %2319 = vmatprep.mubr.bf16.mxu0 0
        %2320 = vmatmul.mubr.bf16.gmra.mxu0 %v2282
        %v2321 = vpop.f32.mrf.mxu0
        %v2322 = vadd.f32 0.0, %v2321
        %v2323 = vpop.f32.mrf.mxu0
        %v2324 = vpop.f32.mrf.mxu0
        %v2325 = vpop.f32.mrf.mxu0
        %2326 = vdwg.mxu0
        %2327 = vrot.lane.b32.xlu0 %v1494, 40
        %v2328 = vpop.permute.xlu0 %2327
        %v2330 = vsel %vm1498, %v2278, 0
        %v2333 = vsel %vm1623, %v2328, 0
        %2335 = vmatprep.subr.bf16.mxu0 0
        %2336 = vmatpush1.bf16.msra.mxu0 0
        %2337 = vmatprep.subr.bf16.mxu0 0
        %2338 = vmatpush1.bf16.msra.mxu0 0
        %2339 = vmatprep.subr.bf16.mxu0 0
        %2340 = vmatpush1.bf16.msra.mxu0 0
        %2341 = vmatprep.subr.bf16.mxu0 0
        %2342 = vmatpush1.bf16.msra.mxu0 0
        %2343 = vmatprep.subr.bf16.mxu0 0
        %2344 = vmatpush1.bf16.msra.mxu0 0
        %2345 = vmatprep.subr.bf16.mxu0 0
        %2346 = vmatpush1.bf16.msra.mxu0 0
        %2347 = vmatprep.subr.bf16.mxu0 0
        %2348 = vmatpush1.bf16.msra.mxu0 0
        %2349 = vmatprep.subr.bf16.mxu0 0
        %2350 = vmatpush1.bf16.msra.mxu0 %v2333
        %2351 = vmatprep.subr.bf16.mxu0 0
        %2352 = vmatpush2.bf16.msra.mxu0 0
        %2353 = vmatprep.subr.bf16.mxu0 0
        %2354 = vmatpush2.bf16.msra.mxu0 0
        %2355 = vmatprep.subr.bf16.mxu0 0
        %2356 = vmatpush2.bf16.msra.mxu0 0
        %2357 = vmatprep.subr.bf16.mxu0 0
        %2358 = vmatpush2.bf16.msra.mxu0 0
        %2359 = vmatprep.subr.bf16.mxu0 0
        %2360 = vmatpush2.bf16.msra.mxu0 0
        %2361 = vmatprep.subr.bf16.mxu0 0
        %2362 = vmatpush2.bf16.msra.mxu0 0
        %2363 = vmatprep.subr.bf16.mxu0 0
        %2364 = vmatpush2.bf16.msra.mxu0 0
        %2365 = vmatprep.subr.bf16.mxu0 0
        %2366 = vmatpush2.bf16.msra.mxu0 0
        %2367 = vmatprep.mubr.bf16.mxu0 0
        %2368 = vmatmul.mubr.bf16.gmra.mxu0 %v2330
        %v2369 = vpop.f32.mrf.mxu0
        %v2370 = vadd.f32 0.0, %v2369
        %v2371 = vpop.f32.mrf.mxu0
        %v2372 = vpop.f32.mrf.mxu0
        %v2373 = vpop.f32.mrf.mxu0
        %2374 = vdwg.mxu0
        %2377 = vrot.lane.b32.xlu0 %v1882, 8
        %v2378 = vpop.permute.xlu0 %2377
        %2379 = vrot.lane.b32.xlu0 %v1930, 8
        %v2380 = vpop.permute.xlu0 %2379
        %2385 = vrot.lane.b32.xlu0 %v2102, 16
        %v2386 = vpop.permute.xlu0 %2385
        %2387 = vrot.lane.b32.xlu0 %v2150, 16
        %v2388 = vpop.permute.xlu0 %2387
        %2393 = vrot.lane.b32.xlu0 %v2322, 24
        %v2394 = vpop.permute.xlu0 %2393
        %2395 = vrot.lane.b32.xlu0 %v2370, 24
        %v2396 = vpop.permute.xlu0 %2395
        %v2399 = vsel %vm1498, %v1662, %v2378
        %v2400 = vsel %vm1498, %v1710, %v2380
        %vm2401 = vcmask 130048
        %v2402 = vsel %vm2401, %v2399, %v2386
        %v2403 = vsel %vm2401, %v2400, %v2388
        %vm2404 = vcmask 195584
        %v2405 = vsel %vm2404, %v2402, %v2394
        %v2406 = vsel %vm2404, %v2403, %v2396
        %v2407 = vpack.c.bf16 %v2406, %v2405
        %v2408 = vlaneseq
        %v2409 = vshrl.u32 %v2408, 7
        %v2410 = vsub.s32 1, %v2409
        %v2411 = vrot.slane %v1418, %v2410
        %v2416 = vunpack.c.l.b16 %v1489
        %v2417 = vunpack.c.l.b16 %v1490
        %v2418 = vunpack.c.l.b16 %v1491
        %v2419 = vunpack.c.l.b16 %v1492
        %v2420 = vpack.c.b16 %v2417, %v2416
        %v2421 = vpack.c.b16 %v2419, %v2418
        %v2425 = vsel %vm1444, %v2407, 0
        %2427 = vmatprep.subr.bf16.mxu0 0
        %2428 = vmatpush1.bf16.msra.mxu0 0
        %2429 = vmatprep.subr.bf16.mxu0 0
        %2430 = vmatpush1.bf16.msra.mxu0 0
        %2431 = vmatprep.subr.bf16.mxu0 0
        %2432 = vmatpush1.bf16.msra.mxu0 0
        %2433 = vmatprep.subr.bf16.mxu0 0
        %2434 = vmatpush1.bf16.msra.mxu0 0
        %2435 = vmatprep.subr.bf16.mxu0 0
        %2436 = vmatpush1.bf16.msra.mxu0 0
        %2437 = vmatprep.subr.bf16.mxu0 0
        %2438 = vmatpush1.bf16.msra.mxu0 0
        %2439 = vmatprep.subr.bf16.mxu0 0
        %2440 = vmatpush1.bf16.msra.mxu0 %v2421
        %2441 = vmatprep.subr.bf16.mxu0 0
        %2442 = vmatpush1.bf16.msra.mxu0 %v2420
        %2443 = vmatprep.subr.bf16.mxu0 0
        %2444 = vmatpush2.bf16.msra.mxu0 0
        %2445 = vmatprep.subr.bf16.mxu0 0
        %2446 = vmatpush2.bf16.msra.mxu0 0
        %2447 = vmatprep.subr.bf16.mxu0 0
        %2448 = vmatpush2.bf16.msra.mxu0 0
        %2449 = vmatprep.subr.bf16.mxu0 0
        %2450 = vmatpush2.bf16.msra.mxu0 0
        %2451 = vmatprep.subr.bf16.mxu0 0
        %2452 = vmatpush2.bf16.msra.mxu0 0
        %2453 = vmatprep.subr.bf16.mxu0 0
        %2454 = vmatpush2.bf16.msra.mxu0 0
        %2455 = vmatprep.subr.bf16.mxu0 0
        %2456 = vmatpush2.bf16.msra.mxu0 0
        %2457 = vmatprep.subr.bf16.mxu0 0
        %2458 = vmatpush2.bf16.msra.mxu0 0
        %2459 = vmatprep.mubr.bf16.mxu0 0
        %2460 = vmatmul.mubr.bf16.gmra.mxu0 %v2425
        %v2461 = vpop.f32.mrf.mxu0
        %v2462 = vadd.f32 %v2411, %v2461
        %v2463 = vpop.f32.mrf.mxu0
        %v2464 = vpop.f32.mrf.mxu0
        %v2465 = vadd.f32 %v2411, %v2464
        %v2466 = vpop.f32.mrf.mxu0
        %2467 = vdwg.mxu0
        %v2468 = vadd.f32 %v1414, %v2462
        %v2469 = vadd.f32 %v1415, %v2465
        %v2470 = vsel %vm1444, %v2468, 0.0
        %2471 = vadd.xlane.f32.xlu0 %v2470
        %v2472 = vpop.xlane.xlu0 %2471
        %v2473 = vsel %vm1444, %v2469, 0.0
        %2474 = vadd.xlane.f32.xlu0 %v2473
        %v2475 = vpop.xlane.xlu0 %2474
        %v2476 = vrcp.pop 32.0
        %v2477 = vmul.f32 %v2472, %v2476
        %v2478 = vmul.f32 %v2475, %v2476
        %v2479 = vsub.f32 %v2468, %v2477
        %v2480 = vsub.f32 %v2469, %v2478
        %v2481 = vmul.f32 %v2479, %v2479
        %v2482 = vmul.f32 %v2480, %v2480
        %v2483 = vsel %vm1444, %v2481, 0.0
        %2484 = vadd.xlane.f32.xlu0 %v2483
        %v2485 = vpop.xlane.xlu0 %2484
        %v2486 = vsel %vm1444, %v2482, 0.0
        %2487 = vadd.xlane.f32.xlu0 %v2486
        %v2488 = vpop.xlane.xlu0 %2487
        %v2489 = vmul.f32 %v2485, %v2476
        %v2490 = vmul.f32 %v2488, %v2476
        %v2491 = vadd.f32 %v2489, 1e-05
        %v2492 = vadd.f32 %v2490, 1e-05
        %v2493 = vrsqrt.pop %v2491
        %v2494 = vrsqrt.pop %v2492
        %v2495 = vmul.f32 %v2479, %v2493
        %v2496 = vmul.f32 %v2480, %v2494
        %v2497 = vlaneseq
        %v2498 = vshrl.u32 %v2497, 7
        %v2499 = vsub.s32 4, %v2498
        %v2500 = vrot.slane %v1418, %v2499
        %v2501 = vmul.f32 %v2495, %v2500
        %v2502 = vmul.f32 %v2496, %v2500
        %v2503 = vlaneseq
        %v2504 = vshrl.u32 %v2503, 7
        %v2505 = vsub.s32 5, %v2504
        %v2506 = vrot.slane %v1418, %v2505
        %v2507 = vadd.f32 %v2501, %v2506
        %v2508 = vadd.f32 %v2502, %v2506
        %v2509 = vld [vmem:[%s1112] sm:$0xf]
        %v2510 = vld [vmem:[%s1112 + $0x4] sm:$0xf]
        %v2511 = vld [vmem:[%s1112 + $0x8] sm:$0xf]
        %v2512 = vld [vmem:[%s1112 + $0xc] sm:$0xf]
        %v2513 = vpack.c.bf16 %v2508, %v2507
        %v2514 = vlaneseq
        %v2515 = vshrl.u32 %v2514, 7
        %v2516 = vsub.s32 0, %v2515
        %v2517 = vrot.slane %v1418, %v2516
        %v2522 = vunpack.c.l.b16 %v2509
        %v2523 = vunpack.c.l.b16 %v2510
        %v2524 = vunpack.c.l.b16 %v2511
        %v2525 = vunpack.c.l.b16 %v2512
        %v2526 = vpack.c.b16 %v2523, %v2522
        %v2527 = vpack.c.b16 %v2525, %v2524
        %v2531 = vsel %vm1444, %v2513, 0
        %2533 = vmatprep.subr.bf16.mxu0 0
        %2534 = vmatpush1.bf16.msra.mxu0 0
        %2535 = vmatprep.subr.bf16.mxu0 0
        %2536 = vmatpush1.bf16.msra.mxu0 0
        %2537 = vmatprep.subr.bf16.mxu0 0
        %2538 = vmatpush1.bf16.msra.mxu0 0
        %2539 = vmatprep.subr.bf16.mxu0 0
        %2540 = vmatpush1.bf16.msra.mxu0 0
        %2541 = vmatprep.subr.bf16.mxu0 0
        %2542 = vmatpush1.bf16.msra.mxu0 0
        %2543 = vmatprep.subr.bf16.mxu0 0
        %2544 = vmatpush1.bf16.msra.mxu0 0
        %2545 = vmatprep.subr.bf16.mxu0 0
        %2546 = vmatpush1.bf16.msra.mxu0 %v2527
        %2547 = vmatprep.subr.bf16.mxu0 0
        %2548 = vmatpush1.bf16.msra.mxu0 %v2526
        %2549 = vmatprep.subr.bf16.mxu0 0
        %2550 = vmatpush2.bf16.msra.mxu0 0
        %2551 = vmatprep.subr.bf16.mxu0 0
        %2552 = vmatpush2.bf16.msra.mxu0 0
        %2553 = vmatprep.subr.bf16.mxu0 0
        %2554 = vmatpush2.bf16.msra.mxu0 0
        %2555 = vmatprep.subr.bf16.mxu0 0
        %2556 = vmatpush2.bf16.msra.mxu0 0
        %2557 = vmatprep.subr.bf16.mxu0 0
        %2558 = vmatpush2.bf16.msra.mxu0 0
        %2559 = vmatprep.subr.bf16.mxu0 0
        %2560 = vmatpush2.bf16.msra.mxu0 0
        %2561 = vmatprep.subr.bf16.mxu0 0
        %2562 = vmatpush2.bf16.msra.mxu0 0
        %2563 = vmatprep.subr.bf16.mxu0 0
        %2564 = vmatpush2.bf16.msra.mxu0 0
        %2565 = vmatprep.mubr.bf16.mxu0 0
        %2566 = vmatmul.mubr.bf16.gmra.mxu0 %v2531
        %v2567 = vpop.f32.mrf.mxu0
        %v2568 = vadd.f32 %v2517, %v2567
        %v2569 = vpop.f32.mrf.mxu0
        %v2570 = vpop.f32.mrf.mxu0
        %v2571 = vadd.f32 %v2517, %v2570
        %v2572 = vpop.f32.mrf.mxu0
        %2573 = vdwg.mxu0
        %v2574 = vld [vmem:[%s1102] sm:$0xf]
        %v2575 = vld [vmem:[%s1102 + $0x4] sm:$0xf]
        %v2576 = vld [vmem:[%s1102 + $0x8] sm:$0xf]
        %v2577 = vld [vmem:[%s1102 + $0xc] sm:$0xf]
        %v2578 = vpack.c.bf16 %v1417, %v1416
        %v2579 = vld [vmem:[%s942] sm:$0x1]
        %v2581 = vlaneseq
        %v2582 = vshrl.u32 %v2581, 7
        %v2583 = vsub.s32 0, %v2582
        %v2584 = vrot.slane %v2579, %v2583
        %v2590 = vunpack.c.l.b16 %v2574
        %v2591 = vunpack.c.l.b16 %v2575
        %v2592 = vunpack.c.l.b16 %v2576
        %v2593 = vunpack.c.l.b16 %v2577
        %v2594 = vpack.c.b16 %v2591, %v2590
        %v2595 = vpack.c.b16 %v2593, %v2592
        %v2599 = vsel %vm1444, %v2578, 0
        %2601 = vmatprep.subr.bf16.mxu0 0
        %2602 = vmatpush1.bf16.msra.mxu0 0
        %2603 = vmatprep.subr.bf16.mxu0 0
        %2604 = vmatpush1.bf16.msra.mxu0 0
        %2605 = vmatprep.subr.bf16.mxu0 0
        %2606 = vmatpush1.bf16.msra.mxu0 0
        %2607 = vmatprep.subr.bf16.mxu0 0
        %2608 = vmatpush1.bf16.msra.mxu0 0
        %2609 = vmatprep.subr.bf16.mxu0 0
        %2610 = vmatpush1.bf16.msra.mxu0 0
        %2611 = vmatprep.subr.bf16.mxu0 0
        %2612 = vmatpush1.bf16.msra.mxu0 0
        %2613 = vmatprep.subr.bf16.mxu0 0
        %2614 = vmatpush1.bf16.msra.mxu0 %v2595
        %2615 = vmatprep.subr.bf16.mxu0 0
        %2616 = vmatpush1.bf16.msra.mxu0 %v2594
        %2617 = vmatprep.subr.bf16.mxu0 0
        %2618 = vmatpush2.bf16.msra.mxu0 0
        %2619 = vmatprep.subr.bf16.mxu0 0
        %2620 = vmatpush2.bf16.msra.mxu0 0
        %2621 = vmatprep.subr.bf16.mxu0 0
        %2622 = vmatpush2.bf16.msra.mxu0 0
        %2623 = vmatprep.subr.bf16.mxu0 0
        %2624 = vmatpush2.bf16.msra.mxu0 0
        %2625 = vmatprep.subr.bf16.mxu0 0
        %2626 = vmatpush2.bf16.msra.mxu0 0
        %2627 = vmatprep.subr.bf16.mxu0 0
        %2628 = vmatpush2.bf16.msra.mxu0 0
        %2629 = vmatprep.subr.bf16.mxu0 0
        %2630 = vmatpush2.bf16.msra.mxu0 0
        %2631 = vmatprep.subr.bf16.mxu0 0
        %2632 = vmatpush2.bf16.msra.mxu0 0
        %2633 = vmatprep.mubr.bf16.mxu0 0
        %2634 = vmatmul.mubr.bf16.gmra.mxu0 %v2599
        %v2635 = vpop.f32.mrf.mxu0
        %v2636 = vadd.f32 %v2584, %v2635
        %v2637 = vpop.f32.mrf.mxu0
        %v2638 = vpop.f32.mrf.mxu0
        %v2639 = vadd.f32 %v2584, %v2638
        %v2640 = vpop.f32.mrf.mxu0
        %2641 = vdwg.mxu0
        %v2642 = vld [vmem:[%s1107] sm:$0xf]
        %v2643 = vld [vmem:[%s1107 + $0x4] sm:$0xf]
        %v2644 = vld [vmem:[%s1107 + $0x8] sm:$0xf]
        %v2645 = vld [vmem:[%s1107 + $0xc] sm:$0xf]
        %v2646 = vpack.c.bf16 %v2568, %v2568
        %v2647 = vpack.c.bf16 %v2571, %v2571
        %v2648 = vpack.c.bf16 %v2636, %v2636
        %v2649 = vpack.c.bf16 %v2639, %v2639
        %v2651 = vsel %vm1498, %v2646, 0
        %v2654 = vsel %vm1498, %v2648, 0
        %2656 = vmatprep.subr.bf16.mxu0 0
        %2657 = vmatpush1.bf16.xpose.msra.mxu0 0
        %2658 = vmatprep.subr.bf16.mxu0 0
        %2659 = vmatpush1.bf16.xpose.msra.mxu0 0
        %2660 = vmatprep.subr.bf16.mxu0 0
        %2661 = vmatpush1.bf16.xpose.msra.mxu0 0
        %2662 = vmatprep.subr.bf16.mxu0 0
        %2663 = vmatpush1.bf16.xpose.msra.mxu0 0
        %2664 = vmatprep.subr.bf16.mxu0 0
        %2665 = vmatpush1.bf16.xpose.msra.mxu0 0
        %2666 = vmatprep.subr.bf16.mxu0 0
        %2667 = vmatpush1.bf16.xpose.msra.mxu0 0
        %2668 = vmatprep.subr.bf16.mxu0 0
        %2669 = vmatpush1.bf16.xpose.msra.mxu0 0
        %2670 = vmatprep.subr.bf16.mxu0 0
        %2671 = vmatpush1.bf16.xpose.msra.mxu0 %v2654
        %2672 = vmatprep.subr.bf16.mxu0 0
        %2673 = vmatpush2.bf16.xpose.msra.mxu0 0
        %2674 = vmatprep.subr.bf16.mxu0 0
        %2675 = vmatpush2.bf16.xpose.msra.mxu0 0
        %2676 = vmatprep.subr.bf16.mxu0 0
        %2677 = vmatpush2.bf16.xpose.msra.mxu0 0
        %2678 = vmatprep.subr.bf16.mxu0 0
        %2679 = vmatpush2.bf16.xpose.msra.mxu0 0
        %2680 = vmatprep.subr.bf16.mxu0 0
        %2681 = vmatpush2.bf16.xpose.msra.mxu0 0
        %2682 = vmatprep.subr.bf16.mxu0 0
        %2683 = vmatpush2.bf16.xpose.msra.mxu0 0
        %2684 = vmatprep.subr.bf16.mxu0 0
        %2685 = vmatpush2.bf16.xpose.msra.mxu0 0
        %2686 = vmatprep.subr.bf16.mxu0 0
        %2687 = vmatpush2.bf16.xpose.msra.mxu0 0
        %2688 = vmatprep.mubr.bf16.mxu0 0
        %2689 = vmatmul.mubr.bf16.gmra.mxu0 %v2651
        %v2690 = vpop.f32.mrf.mxu0
        %v2691 = vadd.f32 %v1412, %v2690
        %v2692 = vpop.f32.mrf.mxu0
        %v2693 = vpop.f32.mrf.mxu0
        %v2694 = vpop.f32.mrf.mxu0
        %2695 = vdwg.mxu0
        %v2697 = vsel %vm1498, %v2647, 0
        %v2700 = vsel %vm1498, %v2649, 0
        %2702 = vmatprep.subr.bf16.mxu0 0
        %2703 = vmatpush1.bf16.xpose.msra.mxu0 0
        %2704 = vmatprep.subr.bf16.mxu0 0
        %2705 = vmatpush1.bf16.xpose.msra.mxu0 0
        %2706 = vmatprep.subr.bf16.mxu0 0
        %2707 = vmatpush1.bf16.xpose.msra.mxu0 0
        %2708 = vmatprep.subr.bf16.mxu0 0
        %2709 = vmatpush1.bf16.xpose.msra.mxu0 0
        %2710 = vmatprep.subr.bf16.mxu0 0
        %2711 = vmatpush1.bf16.xpose.msra.mxu0 0
        %2712 = vmatprep.subr.bf16.mxu0 0
        %2713 = vmatpush1.bf16.xpose.msra.mxu0 0
        %2714 = vmatprep.subr.bf16.mxu0 0
        %2715 = vmatpush1.bf16.xpose.msra.mxu0 0
        %2716 = vmatprep.subr.bf16.mxu0 0
        %2717 = vmatpush1.bf16.xpose.msra.mxu0 %v2700
        %2718 = vmatprep.subr.bf16.mxu0 0
        %2719 = vmatpush2.bf16.xpose.msra.mxu0 0
        %2720 = vmatprep.subr.bf16.mxu0 0
        %2721 = vmatpush2.bf16.xpose.msra.mxu0 0
        %2722 = vmatprep.subr.bf16.mxu0 0
        %2723 = vmatpush2.bf16.xpose.msra.mxu0 0
        %2724 = vmatprep.subr.bf16.mxu0 0
        %2725 = vmatpush2.bf16.xpose.msra.mxu0 0
        %2726 = vmatprep.subr.bf16.mxu0 0
        %2727 = vmatpush2.bf16.xpose.msra.mxu0 0
        %2728 = vmatprep.subr.bf16.mxu0 0
        %2729 = vmatpush2.bf16.xpose.msra.mxu0 0
        %2730 = vmatprep.subr.bf16.mxu0 0
        %2731 = vmatpush2.bf16.xpose.msra.mxu0 0
        %2732 = vmatprep.subr.bf16.mxu0 0
        %2733 = vmatpush2.bf16.xpose.msra.mxu0 0
        %2734 = vmatprep.mubr.bf16.mxu0 0
        %2735 = vmatmul.mubr.bf16.gmra.mxu0 %v2697
        %v2736 = vpop.f32.mrf.mxu0
        %v2737 = vadd.f32 %v1413, %v2736
        %v2738 = vpop.f32.mrf.mxu0
        %v2739 = vpop.f32.mrf.mxu0
        %v2740 = vpop.f32.mrf.mxu0
        %2741 = vdwg.mxu0
        %v2742 = vsel %vm1498, %v2691, -inf
        %2743 = vmax.xlane.f32.xlu0 %v2742
        %v2744 = vpop.xlane.xlu0 %2743
        %v2745 = vsel %vm1498, %v2737, -inf
        %2746 = vmax.xlane.f32.xlu0 %v2745
        %v2747 = vpop.xlane.xlu0 %2746
        %v2748 = vsub.f32 %v2691, %v2744
        %v2749 = vsub.f32 %v2737, %v2747
        %v2750 = vmul.f32 %v2748, 1.442695
        %v2751 = vpow.pop %v2750
        %v2752 = vmul.f32 %v2749, 1.442695
        %v2753 = vpow.pop %v2752
        %v2754 = vsel %vm1498, %v2751, 0.0
        %2755 = vadd.xlane.f32.xlu0 %v2754
        %v2756 = vpop.xlane.xlu0 %2755
        %v2757 = vsel %vm1498, %v2753, 0.0
        %2758 = vadd.xlane.f32.xlu0 %v2757
        %v2759 = vpop.xlane.xlu0 %2758
        %v2760 = vrcp.pop %v2756
        %v2761 = vmul.f32 %v2751, %v2760
        %v2762 = vrcp.pop %v2759
        %v2763 = vmul.f32 %v2753, %v2762
        %v2764 = vpack.c.bf16 %v2761, %v2761
        %v2765 = vpack.c.bf16 %v2763, %v2763
        %2767 = vrot.lane.b32.xlu0 %v2648, 96
        %v2768 = vpop.permute.xlu0 %2767
        %v2770 = vsel %vm1498, %v2764, 0
        %v2773 = vsel %vm1623, %v2768, 0
        %2775 = vmatprep.subr.bf16.mxu0 0
        %2776 = vmatpush1.bf16.msra.mxu0 0
        %2777 = vmatprep.subr.bf16.mxu0 0
        %2778 = vmatpush1.bf16.msra.mxu0 0
        %2779 = vmatprep.subr.bf16.mxu0 0
        %2780 = vmatpush1.bf16.msra.mxu0 0
        %2781 = vmatprep.subr.bf16.mxu0 0
        %2782 = vmatpush1.bf16.msra.mxu0 0
        %2783 = vmatprep.subr.bf16.mxu0 0
        %2784 = vmatpush1.bf16.msra.mxu0 0
        %2785 = vmatprep.subr.bf16.mxu0 0
        %2786 = vmatpush1.bf16.msra.mxu0 0
        %2787 = vmatprep.subr.bf16.mxu0 0
        %2788 = vmatpush1.bf16.msra.mxu0 0
        %2789 = vmatprep.subr.bf16.mxu0 0
        %2790 = vmatpush1.bf16.msra.mxu0 %v2773
        %2791 = vmatprep.subr.bf16.mxu0 0
        %2792 = vmatpush2.bf16.msra.mxu0 0
        %2793 = vmatprep.subr.bf16.mxu0 0
        %2794 = vmatpush2.bf16.msra.mxu0 0
        %2795 = vmatprep.subr.bf16.mxu0 0
        %2796 = vmatpush2.bf16.msra.mxu0 0
        %2797 = vmatprep.subr.bf16.mxu0 0
        %2798 = vmatpush2.bf16.msra.mxu0 0
        %2799 = vmatprep.subr.bf16.mxu0 0
        %2800 = vmatpush2.bf16.msra.mxu0 0
        %2801 = vmatprep.subr.bf16.mxu0 0
        %2802 = vmatpush2.bf16.msra.mxu0 0
        %2803 = vmatprep.subr.bf16.mxu0 0
        %2804 = vmatpush2.bf16.msra.mxu0 0
        %2805 = vmatprep.subr.bf16.mxu0 0
        %2806 = vmatpush2.bf16.msra.mxu0 0
        %2807 = vmatprep.mubr.bf16.mxu0 0
        %2808 = vmatmul.mubr.bf16.gmra.mxu0 %v2770
        %v2809 = vpop.f32.mrf.mxu0
        %v2810 = vadd.f32 0.0, %v2809
        %v2811 = vpop.f32.mrf.mxu0
        %v2812 = vpop.f32.mrf.mxu0
        %v2813 = vpop.f32.mrf.mxu0
        %2814 = vdwg.mxu0
        %2816 = vrot.lane.b32.xlu0 %v2649, 96
        %v2817 = vpop.permute.xlu0 %2816
        %v2819 = vsel %vm1498, %v2765, 0
        %v2822 = vsel %vm1623, %v2817, 0
        %2824 = vmatprep.subr.bf16.mxu0 0
        %2825 = vmatpush1.bf16.msra.mxu0 0
        %2826 = vmatprep.subr.bf16.mxu0 0
        %2827 = vmatpush1.bf16.msra.mxu0 0
        %2828 = vmatprep.subr.bf16.mxu0 0
        %2829 = vmatpush1.bf16.msra.mxu0 0
        %2830 = vmatprep.subr.bf16.mxu0 0
        %2831 = vmatpush1.bf16.msra.mxu0 0
        %2832 = vmatprep.subr.bf16.mxu0 0
        %2833 = vmatpush1.bf16.msra.mxu0 0
        %2834 = vmatprep.subr.bf16.mxu0 0
        %2835 = vmatpush1.bf16.msra.mxu0 0
        %2836 = vmatprep.subr.bf16.mxu0 0
        %2837 = vmatpush1.bf16.msra.mxu0 0
        %2838 = vmatprep.subr.bf16.mxu0 0
        %2839 = vmatpush1.bf16.msra.mxu0 %v2822
        %2840 = vmatprep.subr.bf16.mxu0 0
        %2841 = vmatpush2.bf16.msra.mxu0 0
        %2842 = vmatprep.subr.bf16.mxu0 0
        %2843 = vmatpush2.bf16.msra.mxu0 0
        %2844 = vmatprep.subr.bf16.mxu0 0
        %2845 = vmatpush2.bf16.msra.mxu0 0
        %2846 = vmatprep.subr.bf16.mxu0 0
        %2847 = vmatpush2.bf16.msra.mxu0 0
        %2848 = vmatprep.subr.bf16.mxu0 0
        %2849 = vmatpush2.bf16.msra.mxu0 0
        %2850 = vmatprep.subr.bf16.mxu0 0
        %2851 = vmatpush2.bf16.msra.mxu0 0
        %2852 = vmatprep.subr.bf16.mxu0 0
        %2853 = vmatpush2.bf16.msra.mxu0 0
        %2854 = vmatprep.subr.bf16.mxu0 0
        %2855 = vmatpush2.bf16.msra.mxu0 0
        %2856 = vmatprep.mubr.bf16.mxu0 0
        %2857 = vmatmul.mubr.bf16.gmra.mxu0 %v2819
        %v2858 = vpop.f32.mrf.mxu0
        %v2859 = vadd.f32 0.0, %v2858
        %v2860 = vpop.f32.mrf.mxu0
        %v2861 = vpop.f32.mrf.mxu0
        %v2862 = vpop.f32.mrf.mxu0
        %2863 = vdwg.mxu0
        %2865 = vrot.lane.b32.xlu0 %v2646, 120
        %v2866 = vpop.permute.xlu0 %2865
        %2867 = vrot.lane.b32.xlu0 %v2648, 120
        %v2868 = vpop.permute.xlu0 %2867
        %v2870 = vsel %vm1498, %v2866, 0
        %v2873 = vsel %vm1498, %v2868, 0
        %2875 = vmatprep.subr.bf16.mxu0 0
        %2876 = vmatpush1.bf16.xpose.msra.mxu0 0
        %2877 = vmatprep.subr.bf16.mxu0 0
        %2878 = vmatpush1.bf16.xpose.msra.mxu0 0
        %2879 = vmatprep.subr.bf16.mxu0 0
        %2880 = vmatpush1.bf16.xpose.msra.mxu0 0
        %2881 = vmatprep.subr.bf16.mxu0 0
        %2882 = vmatpush1.bf16.xpose.msra.mxu0 0
        %2883 = vmatprep.subr.bf16.mxu0 0
        %2884 = vmatpush1.bf16.xpose.msra.mxu0 0
        %2885 = vmatprep.subr.bf16.mxu0 0
        %2886 = vmatpush1.bf16.xpose.msra.mxu0 0
        %2887 = vmatprep.subr.bf16.mxu0 0
        %2888 = vmatpush1.bf16.xpose.msra.mxu0 0
        %2889 = vmatprep.subr.bf16.mxu0 0
        %2890 = vmatpush1.bf16.xpose.msra.mxu0 %v2873
        %2891 = vmatprep.subr.bf16.mxu0 0
        %2892 = vmatpush2.bf16.xpose.msra.mxu0 0
        %2893 = vmatprep.subr.bf16.mxu0 0
        %2894 = vmatpush2.bf16.xpose.msra.mxu0 0
        %2895 = vmatprep.subr.bf16.mxu0 0
        %2896 = vmatpush2.bf16.xpose.msra.mxu0 0
        %2897 = vmatprep.subr.bf16.mxu0 0
        %2898 = vmatpush2.bf16.xpose.msra.mxu0 0
        %2899 = vmatprep.subr.bf16.mxu0 0
        %2900 = vmatpush2.bf16.xpose.msra.mxu0 0
        %2901 = vmatprep.subr.bf16.mxu0 0
        %2902 = vmatpush2.bf16.xpose.msra.mxu0 0
        %2903 = vmatprep.subr.bf16.mxu0 0
        %2904 = vmatpush2.bf16.xpose.msra.mxu0 0
        %2905 = vmatprep.subr.bf16.mxu0 0
        %2906 = vmatpush2.bf16.xpose.msra.mxu0 0
        %2907 = vmatprep.mubr.bf16.mxu0 0
        %2908 = vmatmul.mubr.bf16.gmra.mxu0 %v2870
        %v2909 = vpop.f32.mrf.mxu0
        %v2910 = vadd.f32 %v1412, %v2909
        %v2911 = vpop.f32.mrf.mxu0
        %v2912 = vpop.f32.mrf.mxu0
        %v2913 = vpop.f32.mrf.mxu0
        %2914 = vdwg.mxu0
        %2916 = vrot.lane.b32.xlu0 %v2647, 120
        %v2917 = vpop.permute.xlu0 %2916
        %2918 = vrot.lane.b32.xlu0 %v2649, 120
        %v2919 = vpop.permute.xlu0 %2918
        %v2921 = vsel %vm1498, %v2917, 0
        %v2924 = vsel %vm1498, %v2919, 0
        %2926 = vmatprep.subr.bf16.mxu0 0
        %2927 = vmatpush1.bf16.xpose.msra.mxu0 0
        %2928 = vmatprep.subr.bf16.mxu0 0
        %2929 = vmatpush1.bf16.xpose.msra.mxu0 0
        %2930 = vmatprep.subr.bf16.mxu0 0
        %2931 = vmatpush1.bf16.xpose.msra.mxu0 0
        %2932 = vmatprep.subr.bf16.mxu0 0
        %2933 = vmatpush1.bf16.xpose.msra.mxu0 0
        %2934 = vmatprep.subr.bf16.mxu0 0
        %2935 = vmatpush1.bf16.xpose.msra.mxu0 0
        %2936 = vmatprep.subr.bf16.mxu0 0
        %2937 = vmatpush1.bf16.xpose.msra.mxu0 0
        %2938 = vmatprep.subr.bf16.mxu0 0
        %2939 = vmatpush1.bf16.xpose.msra.mxu0 0
        %2940 = vmatprep.subr.bf16.mxu0 0
        %2941 = vmatpush1.bf16.xpose.msra.mxu0 %v2924
        %2942 = vmatprep.subr.bf16.mxu0 0
        %2943 = vmatpush2.bf16.xpose.msra.mxu0 0
        %2944 = vmatprep.subr.bf16.mxu0 0
        %2945 = vmatpush2.bf16.xpose.msra.mxu0 0
        %2946 = vmatprep.subr.bf16.mxu0 0
        %2947 = vmatpush2.bf16.xpose.msra.mxu0 0
        %2948 = vmatprep.subr.bf16.mxu0 0
        %2949 = vmatpush2.bf16.xpose.msra.mxu0 0
        %2950 = vmatprep.subr.bf16.mxu0 0
        %2951 = vmatpush2.bf16.xpose.msra.mxu0 0
        %2952 = vmatprep.subr.bf16.mxu0 0
        %2953 = vmatpush2.bf16.xpose.msra.mxu0 0
        %2954 = vmatprep.subr.bf16.mxu0 0
        %2955 = vmatpush2.bf16.xpose.msra.mxu0 0
        %2956 = vmatprep.subr.bf16.mxu0 0
        %2957 = vmatpush2.bf16.xpose.msra.mxu0 0
        %2958 = vmatprep.mubr.bf16.mxu0 0
        %2959 = vmatmul.mubr.bf16.gmra.mxu0 %v2921
        %v2960 = vpop.f32.mrf.mxu0
        %v2961 = vadd.f32 %v1413, %v2960
        %v2962 = vpop.f32.mrf.mxu0
        %v2963 = vpop.f32.mrf.mxu0
        %v2964 = vpop.f32.mrf.mxu0
        %2965 = vdwg.mxu0
        %v2966 = vsel %vm1498, %v2910, -inf
        %2967 = vmax.xlane.f32.xlu0 %v2966
        %v2968 = vpop.xlane.xlu0 %2967
        %v2969 = vsel %vm1498, %v2961, -inf
        %2970 = vmax.xlane.f32.xlu0 %v2969
        %v2971 = vpop.xlane.xlu0 %2970
        %v2972 = vsub.f32 %v2910, %v2968
        %v2973 = vsub.f32 %v2961, %v2971
        %v2974 = vmul.f32 %v2972, 1.442695
        %v2975 = vpow.pop %v2974
        %v2976 = vmul.f32 %v2973, 1.442695
        %v2977 = vpow.pop %v2976
        %v2978 = vsel %vm1498, %v2975, 0.0
        %2979 = vadd.xlane.f32.xlu0 %v2978
        %v2980 = vpop.xlane.xlu0 %2979
        %v2981 = vsel %vm1498, %v2977, 0.0
        %2982 = vadd.xlane.f32.xlu0 %v2981
        %v2983 = vpop.xlane.xlu0 %2982
        %v2984 = vrcp.pop %v2980
        %v2985 = vmul.f32 %v2975, %v2984
        %v2986 = vrcp.pop %v2983
        %v2987 = vmul.f32 %v2977, %v2986
        %v2988 = vpack.c.bf16 %v2985, %v2985
        %v2989 = vpack.c.bf16 %v2987, %v2987
        %2990 = vrot.lane.b32.xlu0 %v2648, 88
        %v2991 = vpop.permute.xlu0 %2990
        %v2993 = vsel %vm1498, %v2988, 0
        %v2996 = vsel %vm1623, %v2991, 0
        %2998 = vmatprep.subr.bf16.mxu0 0
        %2999 = vmatpush1.bf16.msra.mxu0 0
        %3000 = vmatprep.subr.bf16.mxu0 0
        %3001 = vmatpush1.bf16.msra.mxu0 0
        %3002 = vmatprep.subr.bf16.mxu0 0
        %3003 = vmatpush1.bf16.msra.mxu0 0
        %3004 = vmatprep.subr.bf16.mxu0 0
        %3005 = vmatpush1.bf16.msra.mxu0 0
        %3006 = vmatprep.subr.bf16.mxu0 0
        %3007 = vmatpush1.bf16.msra.mxu0 0
        %3008 = vmatprep.subr.bf16.mxu0 0
        %3009 = vmatpush1.bf16.msra.mxu0 0
        %3010 = vmatprep.subr.bf16.mxu0 0
        %3011 = vmatpush1.bf16.msra.mxu0 0
        %3012 = vmatprep.subr.bf16.mxu0 0
        %3013 = vmatpush1.bf16.msra.mxu0 %v2996
        %3014 = vmatprep.subr.bf16.mxu0 0
        %3015 = vmatpush2.bf16.msra.mxu0 0
        %3016 = vmatprep.subr.bf16.mxu0 0
        %3017 = vmatpush2.bf16.msra.mxu0 0
        %3018 = vmatprep.subr.bf16.mxu0 0
        %3019 = vmatpush2.bf16.msra.mxu0 0
        %3020 = vmatprep.subr.bf16.mxu0 0
        %3021 = vmatpush2.bf16.msra.mxu0 0
        %3022 = vmatprep.subr.bf16.mxu0 0
        %3023 = vmatpush2.bf16.msra.mxu0 0
        %3024 = vmatprep.subr.bf16.mxu0 0
        %3025 = vmatpush2.bf16.msra.mxu0 0
        %3026 = vmatprep.subr.bf16.mxu0 0
        %3027 = vmatpush2.bf16.msra.mxu0 0
        %3028 = vmatprep.subr.bf16.mxu0 0
        %3029 = vmatpush2.bf16.msra.mxu0 0
        %3030 = vmatprep.mubr.bf16.mxu0 0
        %3031 = vmatmul.mubr.bf16.gmra.mxu0 %v2993
        %v3032 = vpop.f32.mrf.mxu0
        %v3033 = vadd.f32 0.0, %v3032
        %v3034 = vpop.f32.mrf.mxu0
        %v3035 = vpop.f32.mrf.mxu0
        %v3036 = vpop.f32.mrf.mxu0
        %3037 = vdwg.mxu0
        %3038 = vrot.lane.b32.xlu0 %v2649, 88
        %v3039 = vpop.permute.xlu0 %3038
        %v3041 = vsel %vm1498, %v2989, 0
        %v3044 = vsel %vm1623, %v3039, 0
        %3046 = vmatprep.subr.bf16.mxu0 0
        %3047 = vmatpush1.bf16.msra.mxu0 0
        %3048 = vmatprep.subr.bf16.mxu0 0
        %3049 = vmatpush1.bf16.msra.mxu0 0
        %3050 = vmatprep.subr.bf16.mxu0 0
        %3051 = vmatpush1.bf16.msra.mxu0 0
        %3052 = vmatprep.subr.bf16.mxu0 0
        %3053 = vmatpush1.bf16.msra.mxu0 0
        %3054 = vmatprep.subr.bf16.mxu0 0
        %3055 = vmatpush1.bf16.msra.mxu0 0
        %3056 = vmatprep.subr.bf16.mxu0 0
        %3057 = vmatpush1.bf16.msra.mxu0 0
        %3058 = vmatprep.subr.bf16.mxu0 0
        %3059 = vmatpush1.bf16.msra.mxu0 0
        %3060 = vmatprep.subr.bf16.mxu0 0
        %3061 = vmatpush1.bf16.msra.mxu0 %v3044
        %3062 = vmatprep.subr.bf16.mxu0 0
        %3063 = vmatpush2.bf16.msra.mxu0 0
        %3064 = vmatprep.subr.bf16.mxu0 0
        %3065 = vmatpush2.bf16.msra.mxu0 0
        %3066 = vmatprep.subr.bf16.mxu0 0
        %3067 = vmatpush2.bf16.msra.mxu0 0
        %3068 = vmatprep.subr.bf16.mxu0 0
        %3069 = vmatpush2.bf16.msra.mxu0 0
        %3070 = vmatprep.subr.bf16.mxu0 0
        %3071 = vmatpush2.bf16.msra.mxu0 0
        %3072 = vmatprep.subr.bf16.mxu0 0
        %3073 = vmatpush2.bf16.msra.mxu0 0
        %3074 = vmatprep.subr.bf16.mxu0 0
        %3075 = vmatpush2.bf16.msra.mxu0 0
        %3076 = vmatprep.subr.bf16.mxu0 0
        %3077 = vmatpush2.bf16.msra.mxu0 0
        %3078 = vmatprep.mubr.bf16.mxu0 0
        %3079 = vmatmul.mubr.bf16.gmra.mxu0 %v3041
        %v3080 = vpop.f32.mrf.mxu0
        %v3081 = vadd.f32 0.0, %v3080
        %v3082 = vpop.f32.mrf.mxu0
        %v3083 = vpop.f32.mrf.mxu0
        %v3084 = vpop.f32.mrf.mxu0
        %3085 = vdwg.mxu0
        %3086 = vrot.lane.b32.xlu0 %v2646, 112
        %v3087 = vpop.permute.xlu0 %3086
        %3088 = vrot.lane.b32.xlu0 %v2648, 112
        %v3089 = vpop.permute.xlu0 %3088
        %v3091 = vsel %vm1498, %v3087, 0
        %v3094 = vsel %vm1498, %v3089, 0
        %3096 = vmatprep.subr.bf16.mxu0 0
        %3097 = vmatpush1.bf16.xpose.msra.mxu0 0
        %3098 = vmatprep.subr.bf16.mxu0 0
        %3099 = vmatpush1.bf16.xpose.msra.mxu0 0
        %3100 = vmatprep.subr.bf16.mxu0 0
        %3101 = vmatpush1.bf16.xpose.msra.mxu0 0
        %3102 = vmatprep.subr.bf16.mxu0 0
        %3103 = vmatpush1.bf16.xpose.msra.mxu0 0
        %3104 = vmatprep.subr.bf16.mxu0 0
        %3105 = vmatpush1.bf16.xpose.msra.mxu0 0
        %3106 = vmatprep.subr.bf16.mxu0 0
        %3107 = vmatpush1.bf16.xpose.msra.mxu0 0
        %3108 = vmatprep.subr.bf16.mxu0 0
        %3109 = vmatpush1.bf16.xpose.msra.mxu0 0
        %3110 = vmatprep.subr.bf16.mxu0 0
        %3111 = vmatpush1.bf16.xpose.msra.mxu0 %v3094
        %3112 = vmatprep.subr.bf16.mxu0 0
        %3113 = vmatpush2.bf16.xpose.msra.mxu0 0
        %3114 = vmatprep.subr.bf16.mxu0 0
        %3115 = vmatpush2.bf16.xpose.msra.mxu0 0
        %3116 = vmatprep.subr.bf16.mxu0 0
        %3117 = vmatpush2.bf16.xpose.msra.mxu0 0
        %3118 = vmatprep.subr.bf16.mxu0 0
        %3119 = vmatpush2.bf16.xpose.msra.mxu0 0
        %3120 = vmatprep.subr.bf16.mxu0 0
        %3121 = vmatpush2.bf16.xpose.msra.mxu0 0
        %3122 = vmatprep.subr.bf16.mxu0 0
        %3123 = vmatpush2.bf16.xpose.msra.mxu0 0
        %3124 = vmatprep.subr.bf16.mxu0 0
        %3125 = vmatpush2.bf16.xpose.msra.mxu0 0
        %3126 = vmatprep.subr.bf16.mxu0 0
        %3127 = vmatpush2.bf16.xpose.msra.mxu0 0
        %3128 = vmatprep.mubr.bf16.mxu0 0
        %3129 = vmatmul.mubr.bf16.gmra.mxu0 %v3091
        %v3130 = vpop.f32.mrf.mxu0
        %v3131 = vadd.f32 %v1412, %v3130
        %v3132 = vpop.f32.mrf.mxu0
        %v3133 = vpop.f32.mrf.mxu0
        %v3134 = vpop.f32.mrf.mxu0
        %3135 = vdwg.mxu0
        %3136 = vrot.lane.b32.xlu0 %v2647, 112
        %v3137 = vpop.permute.xlu0 %3136
        %3138 = vrot.lane.b32.xlu0 %v2649, 112
        %v3139 = vpop.permute.xlu0 %3138
        %v3141 = vsel %vm1498, %v3137, 0
        %v3144 = vsel %vm1498, %v3139, 0
        %3146 = vmatprep.subr.bf16.mxu0 0
        %3147 = vmatpush1.bf16.xpose.msra.mxu0 0
        %3148 = vmatprep.subr.bf16.mxu0 0
        %3149 = vmatpush1.bf16.xpose.msra.mxu0 0
        %3150 = vmatprep.subr.bf16.mxu0 0
        %3151 = vmatpush1.bf16.xpose.msra.mxu0 0
        %3152 = vmatprep.subr.bf16.mxu0 0
        %3153 = vmatpush1.bf16.xpose.msra.mxu0 0
        %3154 = vmatprep.subr.bf16.mxu0 0
        %3155 = vmatpush1.bf16.xpose.msra.mxu0 0
        %3156 = vmatprep.subr.bf16.mxu0 0
        %3157 = vmatpush1.bf16.xpose.msra.mxu0 0
        %3158 = vmatprep.subr.bf16.mxu0 0
        %3159 = vmatpush1.bf16.xpose.msra.mxu0 0
        %3160 = vmatprep.subr.bf16.mxu0 0
        %3161 = vmatpush1.bf16.xpose.msra.mxu0 %v3144
        %3162 = vmatprep.subr.bf16.mxu0 0
        %3163 = vmatpush2.bf16.xpose.msra.mxu0 0
        %3164 = vmatprep.subr.bf16.mxu0 0
        %3165 = vmatpush2.bf16.xpose.msra.mxu0 0
        %3166 = vmatprep.subr.bf16.mxu0 0
        %3167 = vmatpush2.bf16.xpose.msra.mxu0 0
        %3168 = vmatprep.subr.bf16.mxu0 0
        %3169 = vmatpush2.bf16.xpose.msra.mxu0 0
        %3170 = vmatprep.subr.bf16.mxu0 0
        %3171 = vmatpush2.bf16.xpose.msra.mxu0 0
        %3172 = vmatprep.subr.bf16.mxu0 0
        %3173 = vmatpush2.bf16.xpose.msra.mxu0 0
        %3174 = vmatprep.subr.bf16.mxu0 0
        %3175 = vmatpush2.bf16.xpose.msra.mxu0 0
        %3176 = vmatprep.subr.bf16.mxu0 0
        %3177 = vmatpush2.bf16.xpose.msra.mxu0 0
        %3178 = vmatprep.mubr.bf16.mxu0 0
        %3179 = vmatmul.mubr.bf16.gmra.mxu0 %v3141
        %v3180 = vpop.f32.mrf.mxu0
        %v3181 = vadd.f32 %v1413, %v3180
        %v3182 = vpop.f32.mrf.mxu0
        %v3183 = vpop.f32.mrf.mxu0
        %v3184 = vpop.f32.mrf.mxu0
        %3185 = vdwg.mxu0
        %v3186 = vsel %vm1498, %v3131, -inf
        %3187 = vmax.xlane.f32.xlu0 %v3186
        %v3188 = vpop.xlane.xlu0 %3187
        %v3189 = vsel %vm1498, %v3181, -inf
        %3190 = vmax.xlane.f32.xlu0 %v3189
        %v3191 = vpop.xlane.xlu0 %3190
        %v3192 = vsub.f32 %v3131, %v3188
        %v3193 = vsub.f32 %v3181, %v3191
        %v3194 = vmul.f32 %v3192, 1.442695
        %v3195 = vpow.pop %v3194
        %v3196 = vmul.f32 %v3193, 1.442695
        %v3197 = vpow.pop %v3196
        %v3198 = vsel %vm1498, %v3195, 0.0
        %3199 = vadd.xlane.f32.xlu0 %v3198
        %v3200 = vpop.xlane.xlu0 %3199
        %v3201 = vsel %vm1498, %v3197, 0.0
        %3202 = vadd.xlane.f32.xlu0 %v3201
        %v3203 = vpop.xlane.xlu0 %3202
        %v3204 = vrcp.pop %v3200
        %v3205 = vmul.f32 %v3195, %v3204
        %v3206 = vrcp.pop %v3203
        %v3207 = vmul.f32 %v3197, %v3206
        %v3208 = vpack.c.bf16 %v3205, %v3205
        %v3209 = vpack.c.bf16 %v3207, %v3207
        %3210 = vrot.lane.b32.xlu0 %v2648, 80
        %v3211 = vpop.permute.xlu0 %3210
        %v3213 = vsel %vm1498, %v3208, 0
        %v3216 = vsel %vm1623, %v3211, 0
        %3218 = vmatprep.subr.bf16.mxu0 0
        %3219 = vmatpush1.bf16.msra.mxu0 0
        %3220 = vmatprep.subr.bf16.mxu0 0
        %3221 = vmatpush1.bf16.msra.mxu0 0
        %3222 = vmatprep.subr.bf16.mxu0 0
        %3223 = vmatpush1.bf16.msra.mxu0 0
        %3224 = vmatprep.subr.bf16.mxu0 0
        %3225 = vmatpush1.bf16.msra.mxu0 0
        %3226 = vmatprep.subr.bf16.mxu0 0
        %3227 = vmatpush1.bf16.msra.mxu0 0
        %3228 = vmatprep.subr.bf16.mxu0 0
        %3229 = vmatpush1.bf16.msra.mxu0 0
        %3230 = vmatprep.subr.bf16.mxu0 0
        %3231 = vmatpush1.bf16.msra.mxu0 0
        %3232 = vmatprep.subr.bf16.mxu0 0
        %3233 = vmatpush1.bf16.msra.mxu0 %v3216
        %3234 = vmatprep.subr.bf16.mxu0 0
        %3235 = vmatpush2.bf16.msra.mxu0 0
        %3236 = vmatprep.subr.bf16.mxu0 0
        %3237 = vmatpush2.bf16.msra.mxu0 0
        %3238 = vmatprep.subr.bf16.mxu0 0
        %3239 = vmatpush2.bf16.msra.mxu0 0
        %3240 = vmatprep.subr.bf16.mxu0 0
        %3241 = vmatpush2.bf16.msra.mxu0 0
        %3242 = vmatprep.subr.bf16.mxu0 0
        %3243 = vmatpush2.bf16.msra.mxu0 0
        %3244 = vmatprep.subr.bf16.mxu0 0
        %3245 = vmatpush2.bf16.msra.mxu0 0
        %3246 = vmatprep.subr.bf16.mxu0 0
        %3247 = vmatpush2.bf16.msra.mxu0 0
        %3248 = vmatprep.subr.bf16.mxu0 0
        %3249 = vmatpush2.bf16.msra.mxu0 0
        %3250 = vmatprep.mubr.bf16.mxu0 0
        %3251 = vmatmul.mubr.bf16.gmra.mxu0 %v3213
        %v3252 = vpop.f32.mrf.mxu0
        %v3253 = vadd.f32 0.0, %v3252
        %v3254 = vpop.f32.mrf.mxu0
        %v3255 = vpop.f32.mrf.mxu0
        %v3256 = vpop.f32.mrf.mxu0
        %3257 = vdwg.mxu0
        %3258 = vrot.lane.b32.xlu0 %v2649, 80
        %v3259 = vpop.permute.xlu0 %3258
        %v3261 = vsel %vm1498, %v3209, 0
        %v3264 = vsel %vm1623, %v3259, 0
        %3266 = vmatprep.subr.bf16.mxu0 0
        %3267 = vmatpush1.bf16.msra.mxu0 0
        %3268 = vmatprep.subr.bf16.mxu0 0
        %3269 = vmatpush1.bf16.msra.mxu0 0
        %3270 = vmatprep.subr.bf16.mxu0 0
        %3271 = vmatpush1.bf16.msra.mxu0 0
        %3272 = vmatprep.subr.bf16.mxu0 0
        %3273 = vmatpush1.bf16.msra.mxu0 0
        %3274 = vmatprep.subr.bf16.mxu0 0
        %3275 = vmatpush1.bf16.msra.mxu0 0
        %3276 = vmatprep.subr.bf16.mxu0 0
        %3277 = vmatpush1.bf16.msra.mxu0 0
        %3278 = vmatprep.subr.bf16.mxu0 0
        %3279 = vmatpush1.bf16.msra.mxu0 0
        %3280 = vmatprep.subr.bf16.mxu0 0
        %3281 = vmatpush1.bf16.msra.mxu0 %v3264
        %3282 = vmatprep.subr.bf16.mxu0 0
        %3283 = vmatpush2.bf16.msra.mxu0 0
        %3284 = vmatprep.subr.bf16.mxu0 0
        %3285 = vmatpush2.bf16.msra.mxu0 0
        %3286 = vmatprep.subr.bf16.mxu0 0
        %3287 = vmatpush2.bf16.msra.mxu0 0
        %3288 = vmatprep.subr.bf16.mxu0 0
        %3289 = vmatpush2.bf16.msra.mxu0 0
        %3290 = vmatprep.subr.bf16.mxu0 0
        %3291 = vmatpush2.bf16.msra.mxu0 0
        %3292 = vmatprep.subr.bf16.mxu0 0
        %3293 = vmatpush2.bf16.msra.mxu0 0
        %3294 = vmatprep.subr.bf16.mxu0 0
        %3295 = vmatpush2.bf16.msra.mxu0 0
        %3296 = vmatprep.subr.bf16.mxu0 0
        %3297 = vmatpush2.bf16.msra.mxu0 0
        %3298 = vmatprep.mubr.bf16.mxu0 0
        %3299 = vmatmul.mubr.bf16.gmra.mxu0 %v3261
        %v3300 = vpop.f32.mrf.mxu0
        %v3301 = vadd.f32 0.0, %v3300
        %v3302 = vpop.f32.mrf.mxu0
        %v3303 = vpop.f32.mrf.mxu0
        %v3304 = vpop.f32.mrf.mxu0
        %3305 = vdwg.mxu0
        %3306 = vrot.lane.b32.xlu0 %v2646, 104
        %v3307 = vpop.permute.xlu0 %3306
        %3308 = vrot.lane.b32.xlu0 %v2648, 104
        %v3309 = vpop.permute.xlu0 %3308
        %v3311 = vsel %vm1498, %v3307, 0
        %v3314 = vsel %vm1498, %v3309, 0
        %3316 = vmatprep.subr.bf16.mxu0 0
        %3317 = vmatpush1.bf16.xpose.msra.mxu0 0
        %3318 = vmatprep.subr.bf16.mxu0 0
        %3319 = vmatpush1.bf16.xpose.msra.mxu0 0
        %3320 = vmatprep.subr.bf16.mxu0 0
        %3321 = vmatpush1.bf16.xpose.msra.mxu0 0
        %3322 = vmatprep.subr.bf16.mxu0 0
        %3323 = vmatpush1.bf16.xpose.msra.mxu0 0
        %3324 = vmatprep.subr.bf16.mxu0 0
        %3325 = vmatpush1.bf16.xpose.msra.mxu0 0
        %3326 = vmatprep.subr.bf16.mxu0 0
        %3327 = vmatpush1.bf16.xpose.msra.mxu0 0
        %3328 = vmatprep.subr.bf16.mxu0 0
        %3329 = vmatpush1.bf16.xpose.msra.mxu0 0
        %3330 = vmatprep.subr.bf16.mxu0 0
        %3331 = vmatpush1.bf16.xpose.msra.mxu0 %v3314
        %3332 = vmatprep.subr.bf16.mxu0 0
        %3333 = vmatpush2.bf16.xpose.msra.mxu0 0
        %3334 = vmatprep.subr.bf16.mxu0 0
        %3335 = vmatpush2.bf16.xpose.msra.mxu0 0
        %3336 = vmatprep.subr.bf16.mxu0 0
        %3337 = vmatpush2.bf16.xpose.msra.mxu0 0
        %3338 = vmatprep.subr.bf16.mxu0 0
        %3339 = vmatpush2.bf16.xpose.msra.mxu0 0
        %3340 = vmatprep.subr.bf16.mxu0 0
        %3341 = vmatpush2.bf16.xpose.msra.mxu0 0
        %3342 = vmatprep.subr.bf16.mxu0 0
        %3343 = vmatpush2.bf16.xpose.msra.mxu0 0
        %3344 = vmatprep.subr.bf16.mxu0 0
        %3345 = vmatpush2.bf16.xpose.msra.mxu0 0
        %3346 = vmatprep.subr.bf16.mxu0 0
        %3347 = vmatpush2.bf16.xpose.msra.mxu0 0
        %3348 = vmatprep.mubr.bf16.mxu0 0
        %3349 = vmatmul.mubr.bf16.gmra.mxu0 %v3311
        %v3350 = vpop.f32.mrf.mxu0
        %v3351 = vadd.f32 %v1412, %v3350
        %v3352 = vpop.f32.mrf.mxu0
        %v3353 = vpop.f32.mrf.mxu0
        %v3354 = vpop.f32.mrf.mxu0
        %3355 = vdwg.mxu0
        %3356 = vrot.lane.b32.xlu0 %v2647, 104
        %v3357 = vpop.permute.xlu0 %3356
        %3358 = vrot.lane.b32.xlu0 %v2649, 104
        %v3359 = vpop.permute.xlu0 %3358
        %v3361 = vsel %vm1498, %v3357, 0
        %v3364 = vsel %vm1498, %v3359, 0
        %3366 = vmatprep.subr.bf16.mxu0 0
        %3367 = vmatpush1.bf16.xpose.msra.mxu0 0
        %3368 = vmatprep.subr.bf16.mxu0 0
        %3369 = vmatpush1.bf16.xpose.msra.mxu0 0
        %3370 = vmatprep.subr.bf16.mxu0 0
        %3371 = vmatpush1.bf16.xpose.msra.mxu0 0
        %3372 = vmatprep.subr.bf16.mxu0 0
        %3373 = vmatpush1.bf16.xpose.msra.mxu0 0
        %3374 = vmatprep.subr.bf16.mxu0 0
        %3375 = vmatpush1.bf16.xpose.msra.mxu0 0
        %3376 = vmatprep.subr.bf16.mxu0 0
        %3377 = vmatpush1.bf16.xpose.msra.mxu0 0
        %3378 = vmatprep.subr.bf16.mxu0 0
        %3379 = vmatpush1.bf16.xpose.msra.mxu0 0
        %3380 = vmatprep.subr.bf16.mxu0 0
        %3381 = vmatpush1.bf16.xpose.msra.mxu0 %v3364
        %3382 = vmatprep.subr.bf16.mxu0 0
        %3383 = vmatpush2.bf16.xpose.msra.mxu0 0
        %3384 = vmatprep.subr.bf16.mxu0 0
        %3385 = vmatpush2.bf16.xpose.msra.mxu0 0
        %3386 = vmatprep.subr.bf16.mxu0 0
        %3387 = vmatpush2.bf16.xpose.msra.mxu0 0
        %3388 = vmatprep.subr.bf16.mxu0 0
        %3389 = vmatpush2.bf16.xpose.msra.mxu0 0
        %3390 = vmatprep.subr.bf16.mxu0 0
        %3391 = vmatpush2.bf16.xpose.msra.mxu0 0
        %3392 = vmatprep.subr.bf16.mxu0 0
        %3393 = vmatpush2.bf16.xpose.msra.mxu0 0
        %3394 = vmatprep.subr.bf16.mxu0 0
        %3395 = vmatpush2.bf16.xpose.msra.mxu0 0
        %3396 = vmatprep.subr.bf16.mxu0 0
        %3397 = vmatpush2.bf16.xpose.msra.mxu0 0
        %3398 = vmatprep.mubr.bf16.mxu0 0
        %3399 = vmatmul.mubr.bf16.gmra.mxu0 %v3361
        %v3400 = vpop.f32.mrf.mxu0
        %v3401 = vadd.f32 %v1413, %v3400
        %v3402 = vpop.f32.mrf.mxu0
        %v3403 = vpop.f32.mrf.mxu0
        %v3404 = vpop.f32.mrf.mxu0
        %3405 = vdwg.mxu0
        %v3406 = vsel %vm1498, %v3351, -inf
        %3407 = vmax.xlane.f32.xlu0 %v3406
        %v3408 = vpop.xlane.xlu0 %3407
        %v3409 = vsel %vm1498, %v3401, -inf
        %3410 = vmax.xlane.f32.xlu0 %v3409
        %v3411 = vpop.xlane.xlu0 %3410
        %v3412 = vsub.f32 %v3351, %v3408
        %v3413 = vsub.f32 %v3401, %v3411
        %v3414 = vmul.f32 %v3412, 1.442695
        %v3415 = vpow.pop %v3414
        %v3416 = vmul.f32 %v3413, 1.442695
        %v3417 = vpow.pop %v3416
        %v3418 = vsel %vm1498, %v3415, 0.0
        %3419 = vadd.xlane.f32.xlu0 %v3418
        %v3420 = vpop.xlane.xlu0 %3419
        %v3421 = vsel %vm1498, %v3417, 0.0
        %3422 = vadd.xlane.f32.xlu0 %v3421
        %v3423 = vpop.xlane.xlu0 %3422
        %v3424 = vrcp.pop %v3420
        %v3425 = vmul.f32 %v3415, %v3424
        %v3426 = vrcp.pop %v3423
        %v3427 = vmul.f32 %v3417, %v3426
        %v3428 = vpack.c.bf16 %v3425, %v3425
        %v3429 = vpack.c.bf16 %v3427, %v3427
        %3430 = vrot.lane.b32.xlu0 %v2648, 72
        %v3431 = vpop.permute.xlu0 %3430
        %v3433 = vsel %vm1498, %v3428, 0
        %v3436 = vsel %vm1623, %v3431, 0
        %3438 = vmatprep.subr.bf16.mxu0 0
        %3439 = vmatpush1.bf16.msra.mxu0 0
        %3440 = vmatprep.subr.bf16.mxu0 0
        %3441 = vmatpush1.bf16.msra.mxu0 0
        %3442 = vmatprep.subr.bf16.mxu0 0
        %3443 = vmatpush1.bf16.msra.mxu0 0
        %3444 = vmatprep.subr.bf16.mxu0 0
        %3445 = vmatpush1.bf16.msra.mxu0 0
        %3446 = vmatprep.subr.bf16.mxu0 0
        %3447 = vmatpush1.bf16.msra.mxu0 0
        %3448 = vmatprep.subr.bf16.mxu0 0
        %3449 = vmatpush1.bf16.msra.mxu0 0
        %3450 = vmatprep.subr.bf16.mxu0 0
        %3451 = vmatpush1.bf16.msra.mxu0 0
        %3452 = vmatprep.subr.bf16.mxu0 0
        %3453 = vmatpush1.bf16.msra.mxu0 %v3436
        %3454 = vmatprep.subr.bf16.mxu0 0
        %3455 = vmatpush2.bf16.msra.mxu0 0
        %3456 = vmatprep.subr.bf16.mxu0 0
        %3457 = vmatpush2.bf16.msra.mxu0 0
        %3458 = vmatprep.subr.bf16.mxu0 0
        %3459 = vmatpush2.bf16.msra.mxu0 0
        %3460 = vmatprep.subr.bf16.mxu0 0
        %3461 = vmatpush2.bf16.msra.mxu0 0
        %3462 = vmatprep.subr.bf16.mxu0 0
        %3463 = vmatpush2.bf16.msra.mxu0 0
        %3464 = vmatprep.subr.bf16.mxu0 0
        %3465 = vmatpush2.bf16.msra.mxu0 0
        %3466 = vmatprep.subr.bf16.mxu0 0
        %3467 = vmatpush2.bf16.msra.mxu0 0
        %3468 = vmatprep.subr.bf16.mxu0 0
        %3469 = vmatpush2.bf16.msra.mxu0 0
        %3470 = vmatprep.mubr.bf16.mxu0 0
        %3471 = vmatmul.mubr.bf16.gmra.mxu0 %v3433
        %v3472 = vpop.f32.mrf.mxu0
        %v3473 = vadd.f32 0.0, %v3472
        %v3474 = vpop.f32.mrf.mxu0
        %v3475 = vpop.f32.mrf.mxu0
        %v3476 = vpop.f32.mrf.mxu0
        %3477 = vdwg.mxu0
        %3478 = vrot.lane.b32.xlu0 %v2649, 72
        %v3479 = vpop.permute.xlu0 %3478
        %v3481 = vsel %vm1498, %v3429, 0
        %v3484 = vsel %vm1623, %v3479, 0
        %3486 = vmatprep.subr.bf16.mxu0 0
        %3487 = vmatpush1.bf16.msra.mxu0 0
        %3488 = vmatprep.subr.bf16.mxu0 0
        %3489 = vmatpush1.bf16.msra.mxu0 0
        %3490 = vmatprep.subr.bf16.mxu0 0
        %3491 = vmatpush1.bf16.msra.mxu0 0
        %3492 = vmatprep.subr.bf16.mxu0 0
        %3493 = vmatpush1.bf16.msra.mxu0 0
        %3494 = vmatprep.subr.bf16.mxu0 0
        %3495 = vmatpush1.bf16.msra.mxu0 0
        %3496 = vmatprep.subr.bf16.mxu0 0
        %3497 = vmatpush1.bf16.msra.mxu0 0
        %3498 = vmatprep.subr.bf16.mxu0 0
        %3499 = vmatpush1.bf16.msra.mxu0 0
        %3500 = vmatprep.subr.bf16.mxu0 0
        %3501 = vmatpush1.bf16.msra.mxu0 %v3484
        %3502 = vmatprep.subr.bf16.mxu0 0
        %3503 = vmatpush2.bf16.msra.mxu0 0
        %3504 = vmatprep.subr.bf16.mxu0 0
        %3505 = vmatpush2.bf16.msra.mxu0 0
        %3506 = vmatprep.subr.bf16.mxu0 0
        %3507 = vmatpush2.bf16.msra.mxu0 0
        %3508 = vmatprep.subr.bf16.mxu0 0
        %3509 = vmatpush2.bf16.msra.mxu0 0
        %3510 = vmatprep.subr.bf16.mxu0 0
        %3511 = vmatpush2.bf16.msra.mxu0 0
        %3512 = vmatprep.subr.bf16.mxu0 0
        %3513 = vmatpush2.bf16.msra.mxu0 0
        %3514 = vmatprep.subr.bf16.mxu0 0
        %3515 = vmatpush2.bf16.msra.mxu0 0
        %3516 = vmatprep.subr.bf16.mxu0 0
        %3517 = vmatpush2.bf16.msra.mxu0 0
        %3518 = vmatprep.mubr.bf16.mxu0 0
        %3519 = vmatmul.mubr.bf16.gmra.mxu0 %v3481
        %v3520 = vpop.f32.mrf.mxu0
        %v3521 = vadd.f32 0.0, %v3520
        %v3522 = vpop.f32.mrf.mxu0
        %v3523 = vpop.f32.mrf.mxu0
        %v3524 = vpop.f32.mrf.mxu0
        %3525 = vdwg.mxu0
        %3528 = vrot.lane.b32.xlu0 %v3033, 8
        %v3529 = vpop.permute.xlu0 %3528
        %3530 = vrot.lane.b32.xlu0 %v3081, 8
        %v3531 = vpop.permute.xlu0 %3530
        %3536 = vrot.lane.b32.xlu0 %v3253, 16
        %v3537 = vpop.permute.xlu0 %3536
        %3538 = vrot.lane.b32.xlu0 %v3301, 16
        %v3539 = vpop.permute.xlu0 %3538
        %3544 = vrot.lane.b32.xlu0 %v3473, 24
        %v3545 = vpop.permute.xlu0 %3544
        %3546 = vrot.lane.b32.xlu0 %v3521, 24
        %v3547 = vpop.permute.xlu0 %3546
        %v3550 = vsel %vm1498, %v2810, %v3529
        %v3551 = vsel %vm1498, %v2859, %v3531
        %v3552 = vsel %vm2401, %v3550, %v3537
        %v3553 = vsel %vm2401, %v3551, %v3539
        %v3554 = vsel %vm2404, %v3552, %v3545
        %v3555 = vsel %vm2404, %v3553, %v3547
        %v3556 = vpack.c.bf16 %v3555, %v3554
        %v3557 = vlaneseq
        %v3558 = vshrl.u32 %v3557, 7
        %v3559 = vsub.s32 2, %v3558
        %v3560 = vrot.slane %v1418, %v3559
        %v3565 = vunpack.c.l.b16 %v2642
        %v3566 = vunpack.c.l.b16 %v2643
        %v3567 = vunpack.c.l.b16 %v2644
        %v3568 = vunpack.c.l.b16 %v2645
        %v3569 = vpack.c.b16 %v3566, %v3565
        %v3570 = vpack.c.b16 %v3568, %v3567
        %v3574 = vsel %vm1444, %v3556, 0
        %3576 = vmatprep.subr.bf16.mxu0 0
        %3577 = vmatpush1.bf16.msra.mxu0 0
        %3578 = vmatprep.subr.bf16.mxu0 0
        %3579 = vmatpush1.bf16.msra.mxu0 0
        %3580 = vmatprep.subr.bf16.mxu0 0
        %3581 = vmatpush1.bf16.msra.mxu0 0
        %3582 = vmatprep.subr.bf16.mxu0 0
        %3583 = vmatpush1.bf16.msra.mxu0 0
        %3584 = vmatprep.subr.bf16.mxu0 0
        %3585 = vmatpush1.bf16.msra.mxu0 0
        %3586 = vmatprep.subr.bf16.mxu0 0
        %3587 = vmatpush1.bf16.msra.mxu0 0
        %3588 = vmatprep.subr.bf16.mxu0 0
        %3589 = vmatpush1.bf16.msra.mxu0 %v3570
        %3590 = vmatprep.subr.bf16.mxu0 0
        %3591 = vmatpush1.bf16.msra.mxu0 %v3569
        %3592 = vmatprep.subr.bf16.mxu0 0
        %3593 = vmatpush2.bf16.msra.mxu0 0
        %3594 = vmatprep.subr.bf16.mxu0 0
        %3595 = vmatpush2.bf16.msra.mxu0 0
        %3596 = vmatprep.subr.bf16.mxu0 0
        %3597 = vmatpush2.bf16.msra.mxu0 0
        %3598 = vmatprep.subr.bf16.mxu0 0
        %3599 = vmatpush2.bf16.msra.mxu0 0
        %3600 = vmatprep.subr.bf16.mxu0 0
        %3601 = vmatpush2.bf16.msra.mxu0 0
        %3602 = vmatprep.subr.bf16.mxu0 0
        %3603 = vmatpush2.bf16.msra.mxu0 0
        %3604 = vmatprep.subr.bf16.mxu0 0
        %3605 = vmatpush2.bf16.msra.mxu0 0
        %3606 = vmatprep.subr.bf16.mxu0 0
        %3607 = vmatpush2.bf16.msra.mxu0 0
        %3608 = vmatprep.mubr.bf16.mxu0 0
        %3609 = vmatmul.mubr.bf16.gmra.mxu0 %v3574
        %v3610 = vpop.f32.mrf.mxu0
        %v3611 = vadd.f32 %v3560, %v3610
        %v3612 = vpop.f32.mrf.mxu0
        %v3613 = vpop.f32.mrf.mxu0
        %v3614 = vadd.f32 %v3560, %v3613
        %v3615 = vpop.f32.mrf.mxu0
        %3616 = vdwg.mxu0
        %v3617 = vadd.f32 %v2507, %v3611
        %v3618 = vadd.f32 %v2508, %v3614
        %v3619 = vsel %vm1444, %v3617, 0.0
        %3620 = vadd.xlane.f32.xlu0 %v3619
        %v3621 = vpop.xlane.xlu0 %3620
        %v3622 = vsel %vm1444, %v3618, 0.0
        %3623 = vadd.xlane.f32.xlu0 %v3622
        %v3624 = vpop.xlane.xlu0 %3623
        %v3625 = vmul.f32 %v3621, %v2476
        %v3626 = vmul.f32 %v3624, %v2476
        %v3627 = vsub.f32 %v3617, %v3625
        %v3628 = vsub.f32 %v3618, %v3626
        %v3629 = vmul.f32 %v3627, %v3627
        %v3630 = vmul.f32 %v3628, %v3628
        %v3631 = vsel %vm1444, %v3629, 0.0
        %3632 = vadd.xlane.f32.xlu0 %v3631
        %v3633 = vpop.xlane.xlu0 %3632
        %v3634 = vsel %vm1444, %v3630, 0.0
        %3635 = vadd.xlane.f32.xlu0 %v3634
        %v3636 = vpop.xlane.xlu0 %3635
        %v3637 = vmul.f32 %v3633, %v2476
        %v3638 = vmul.f32 %v3636, %v2476
        %v3639 = vadd.f32 %v3637, 1e-05
        %v3640 = vadd.f32 %v3638, 1e-05
        %v3641 = vrsqrt.pop %v3639
        %v3642 = vrsqrt.pop %v3640
        %v3643 = vmul.f32 %v3627, %v3641
        %v3644 = vmul.f32 %v3628, %v3642
        %v3645 = vlaneseq
        %v3646 = vshrl.u32 %v3645, 7
        %v3647 = vsub.s32 6, %v3646
        %v3648 = vrot.slane %v1418, %v3647
        %v3649 = vmul.f32 %v3643, %v3648
        %v3650 = vmul.f32 %v3644, %v3648
        %v3651 = vlaneseq
        %v3652 = vshrl.u32 %v3651, 7
        %v3653 = vsub.s32 7, %v3652
        %v3654 = vrot.slane %v1418, %v3653
        %v3655 = vadd.f32 %v3649, %v3654
        %v3656 = vadd.f32 %v3650, %v3654
        %v3657 = vld [vmem:[%s1117] sm:$0xf]
        %v3658 = vld [vmem:[%s1117 + $0x4] sm:$0xf]
        %v3659 = vld [vmem:[%s1117 + $0x8] sm:$0xf]
        %v3660 = vld [vmem:[%s1117 + $0xc] sm:$0xf]
        %v3661 = vpack.c.bf16 %v3656, %v3655
        %v3662 = vld [vmem:[%s950] sm:$0x1]
        %v3664 = vlaneseq
        %v3665 = vshrl.u32 %v3664, 7
        %v3666 = vsub.s32 0, %v3665
        %v3667 = vrot.slane %v3662, %v3666
        %v3673 = vunpack.c.l.b16 %v3657
        %v3674 = vunpack.c.l.b16 %v3658
        %v3675 = vunpack.c.l.b16 %v3659
        %v3676 = vunpack.c.l.b16 %v3660
        %v3677 = vpack.c.b16 %v3674, %v3673
        %v3678 = vpack.c.b16 %v3676, %v3675
        %v3682 = vsel %vm1444, %v3661, 0
        %3684 = vmatprep.subr.bf16.mxu0 0
        %3685 = vmatpush1.bf16.msra.mxu0 0
        %3686 = vmatprep.subr.bf16.mxu0 0
        %3687 = vmatpush1.bf16.msra.mxu0 0
        %3688 = vmatprep.subr.bf16.mxu0 0
        %3689 = vmatpush1.bf16.msra.mxu0 0
        %3690 = vmatprep.subr.bf16.mxu0 0
        %3691 = vmatpush1.bf16.msra.mxu0 0
        %3692 = vmatprep.subr.bf16.mxu0 0
        %3693 = vmatpush1.bf16.msra.mxu0 0
        %3694 = vmatprep.subr.bf16.mxu0 0
        %3695 = vmatpush1.bf16.msra.mxu0 0
        %3696 = vmatprep.subr.bf16.mxu0 0
        %3697 = vmatpush1.bf16.msra.mxu0 %v3678
        %3698 = vmatprep.subr.bf16.mxu0 0
        %3699 = vmatpush1.bf16.msra.mxu0 %v3677
        %3700 = vmatprep.subr.bf16.mxu0 0
        %3701 = vmatpush2.bf16.msra.mxu0 0
        %3702 = vmatprep.subr.bf16.mxu0 0
        %3703 = vmatpush2.bf16.msra.mxu0 0
        %3704 = vmatprep.subr.bf16.mxu0 0
        %3705 = vmatpush2.bf16.msra.mxu0 0
        %3706 = vmatprep.subr.bf16.mxu0 0
        %3707 = vmatpush2.bf16.msra.mxu0 0
        %3708 = vmatprep.subr.bf16.mxu0 0
        %3709 = vmatpush2.bf16.msra.mxu0 0
        %3710 = vmatprep.subr.bf16.mxu0 0
        %3711 = vmatpush2.bf16.msra.mxu0 0
        %3712 = vmatprep.subr.bf16.mxu0 0
        %3713 = vmatpush2.bf16.msra.mxu0 0
        %3714 = vmatprep.subr.bf16.mxu0 0
        %3715 = vmatpush2.bf16.msra.mxu0 0
        %3716 = vmatprep.mubr.bf16.mxu0 0
        %3717 = vmatmul.mubr.bf16.gmra.mxu0 %v3682
        %v3718 = vpop.f32.mrf.mxu0
        %v3719 = vadd.f32 %v3667, %v3718
        %v3720 = vpop.f32.mrf.mxu0
        %v3721 = vpop.f32.mrf.mxu0
        %v3722 = vadd.f32 %v3667, %v3721
        %v3723 = vpop.f32.mrf.mxu0
        %3724 = vdwg.mxu0
        %v3725 = vmax.f32 %v3719, 0.0
        %v3726 = vmax.f32 %v3722, 0.0
        %v3727 = vld [vmem:[%s1122] sm:$0xf]
        %v3728 = vld [vmem:[%s1122 + $0x4] sm:$0xf]
        %v3729 = vld [vmem:[%s1122 + $0x8] sm:$0xf]
        %v3730 = vld [vmem:[%s1122 + $0xc] sm:$0xf]
        %v3731 = vld [vmem:[%s1122 + $0x10] sm:$0xf]
        %v3732 = vld [vmem:[%s1122 + $0x14] sm:$0xf]
        %v3733 = vld [vmem:[%s1122 + $0x18] sm:$0xf]
        %v3734 = vld [vmem:[%s1122 + $0x1c] sm:$0xf]
        %v3735 = vld [vmem:[%s1122 + $0x20] sm:$0xf]
        %v3736 = vld [vmem:[%s1122 + $0x24] sm:$0xf]
        %v3737 = vld [vmem:[%s1122 + $0x28] sm:$0xf]
        %v3738 = vld [vmem:[%s1122 + $0x2c] sm:$0xf]
        %v3739 = vld [vmem:[%s1122 + $0x30] sm:$0xf]
        %v3740 = vld [vmem:[%s1122 + $0x34] sm:$0xf]
        %v3741 = vld [vmem:[%s1122 + $0x38] sm:$0xf]
        %v3742 = vld [vmem:[%s1122 + $0x3c] sm:$0xf]
        %v3743 = vpack.c.bf16 %v3726, %v3725
        %v3744 = vlaneseq
        %v3745 = vshrl.u32 %v3744, 7
        %v3746 = vsub.s32 3, %v3745
        %v3747 = vrot.slane %v1418, %v3746
        %v3764 = vunpack.c.l.b16 %v3727
        %v3765 = vunpack.c.l.b16 %v3728
        %v3766 = vunpack.c.l.b16 %v3729
        %v3767 = vunpack.c.l.b16 %v3730
        %v3768 = vunpack.c.l.b16 %v3731
        %v3769 = vunpack.c.l.b16 %v3732
        %v3770 = vunpack.c.l.b16 %v3733
        %v3771 = vunpack.c.l.b16 %v3734
        %v3772 = vunpack.c.l.b16 %v3735
        %v3773 = vunpack.c.l.b16 %v3736
        %v3774 = vunpack.c.l.b16 %v3737
        %v3775 = vunpack.c.l.b16 %v3738
        %v3776 = vunpack.c.l.b16 %v3739
        %v3777 = vunpack.c.l.b16 %v3740
        %v3778 = vunpack.c.l.b16 %v3741
        %v3779 = vunpack.c.l.b16 %v3742
        %v3780 = vpack.c.b16 %v3765, %v3764
        %v3781 = vpack.c.b16 %v3767, %v3766
        %v3782 = vpack.c.b16 %v3769, %v3768
        %v3783 = vpack.c.b16 %v3771, %v3770
        %v3784 = vpack.c.b16 %v3773, %v3772
        %v3785 = vpack.c.b16 %v3775, %v3774
        %v3786 = vpack.c.b16 %v3777, %v3776
        %v3787 = vpack.c.b16 %v3779, %v3778
        %3796 = vmatprep.subr.bf16.mxu0 0
        %3797 = vmatpush1.bf16.msra.mxu0 %v3787
        %3798 = vmatprep.subr.bf16.mxu0 0
        %3799 = vmatpush1.bf16.msra.mxu0 %v3786
        %3800 = vmatprep.subr.bf16.mxu0 0
        %3801 = vmatpush1.bf16.msra.mxu0 %v3785
        %3802 = vmatprep.subr.bf16.mxu0 0
        %3803 = vmatpush1.bf16.msra.mxu0 %v3784
        %3804 = vmatprep.subr.bf16.mxu0 0
        %3805 = vmatpush1.bf16.msra.mxu0 %v3783
        %3806 = vmatprep.subr.bf16.mxu0 0
        %3807 = vmatpush1.bf16.msra.mxu0 %v3782
        %3808 = vmatprep.subr.bf16.mxu0 0
        %3809 = vmatpush1.bf16.msra.mxu0 %v3781
        %3810 = vmatprep.subr.bf16.mxu0 0
        %3811 = vmatpush1.bf16.msra.mxu0 %v3780
        %3812 = vmatprep.subr.bf16.mxu0 0
        %3813 = vmatpush2.bf16.msra.mxu0 0
        %3814 = vmatprep.subr.bf16.mxu0 0
        %3815 = vmatpush2.bf16.msra.mxu0 0
        %3816 = vmatprep.subr.bf16.mxu0 0
        %3817 = vmatpush2.bf16.msra.mxu0 0
        %3818 = vmatprep.subr.bf16.mxu0 0
        %3819 = vmatpush2.bf16.msra.mxu0 0
        %3820 = vmatprep.subr.bf16.mxu0 0
        %3821 = vmatpush2.bf16.msra.mxu0 0
        %3822 = vmatprep.subr.bf16.mxu0 0
        %3823 = vmatpush2.bf16.msra.mxu0 0
        %3824 = vmatprep.subr.bf16.mxu0 0
        %3825 = vmatpush2.bf16.msra.mxu0 0
        %3826 = vmatprep.subr.bf16.mxu0 0
        %3827 = vmatpush2.bf16.msra.mxu0 0
        %3828 = vmatprep.mubr.bf16.mxu0 0
        %3829 = vmatmul.mubr.bf16.gmra.mxu0 %v3743
        %v3830 = vpop.f32.mrf.mxu0
        %v3831 = vadd.f32 %v3747, %v3830
        %v3832 = vpop.f32.mrf.mxu0
        %v3833 = vpop.f32.mrf.mxu0
        %v3834 = vadd.f32 %v3747, %v3833
        %v3835 = vpop.f32.mrf.mxu0
        %3836 = vdwg.mxu0
        %v3837 = vadd.f32 %v3655, %v3831
        %v3838 = vadd.f32 %v3656, %v3834
        %v3839 = vsel %vm1444, %v3837, 0.0
        %3840 = vadd.xlane.f32.xlu0 %v3839
        %v3841 = vpop.xlane.xlu0 %3840
        %v3842 = vsel %vm1444, %v3838, 0.0
        %3843 = vadd.xlane.f32.xlu0 %v3842
        %v3844 = vpop.xlane.xlu0 %3843
        %v3845 = vmul.f32 %v3841, %v2476
        %v3846 = vmul.f32 %v3844, %v2476
        %v3847 = vsub.f32 %v3837, %v3845
        %v3848 = vsub.f32 %v3838, %v3846
        %v3849 = vmul.f32 %v3847, %v3847
        %v3850 = vmul.f32 %v3848, %v3848
        %v3851 = vsel %vm1444, %v3849, 0.0
        %3852 = vadd.xlane.f32.xlu0 %v3851
        %v3853 = vpop.xlane.xlu0 %3852
        %v3854 = vsel %vm1444, %v3850, 0.0
        %3855 = vadd.xlane.f32.xlu0 %v3854
        %v3856 = vpop.xlane.xlu0 %3855
        %v3857 = vmul.f32 %v3853, %v2476
        %v3858 = vmul.f32 %v3856, %v2476
        %v3859 = vadd.f32 %v3857, 1e-05
        %v3860 = vadd.f32 %v3858, 1e-05
        %v3861 = vrsqrt.pop %v3859
        %v3862 = vrsqrt.pop %v3860
        %v3863 = vmul.f32 %v3847, %v3861
        %v3864 = vmul.f32 %v3848, %v3862
        %v3865 = vlaneseq
        %v3866 = vshrl.u32 %v3865, 7
        %v3867 = vsub.s32 0, %v3866
        %v3868 = vrot.slane %v1419, %v3867
        %v3869 = vmul.f32 %v3863, %v3868
        %v3870 = vmul.f32 %v3864, %v3868
        %v3871 = vlaneseq
        %v3872 = vshrl.u32 %v3871, 7
        %v3873 = vsub.s32 1, %v3872
        %v3874 = vrot.slane %v1419, %v3873
        %v3875 = vadd.f32 %v3869, %v3874
        %v3876 = vadd.f32 %v3870, %v3874
        %3877 = vst.msk [vmem:[#allocation2] sm:$0xff] %vm1444, %v3875
        %3878 = vst.msk [vmem:[#allocation2 + $0x8] sm:$0xff] %vm1444, %v3876
        %p3879 = scmp.eq.s32.totalorder %s51, 1
        // Predicated region
        $region153: #{decoder_transformer_forward.1} parent=123 // pred_check
          %p3880 = pneg %p3879
        $region154: #{decoder_transformer_forward.1} parent=123 // pred_check_branch
          %3882 = sbr.rel (%p3880) target = $region156
        $region155: #{decoder_transformer_forward.1} parent=123 // pred_region
          %v3883 = vld [vmem:[%s12] sm:$0xf]
          %v3884 = vld [vmem:[%s12 + $0x4] sm:$0xf]
          %v3885 = vld [vmem:[%s12 + $0x8] sm:$0xf]
          %v3886 = vld [vmem:[%s12 + $0xc] sm:$0xf]
          %v3887 = vpack.c.bf16 %v3876, %v3875
          %v3888 = vld [vmem:[#allocation13] sm:$0x1]
          %v3890 = vlaneseq
          %v3891 = vshrl.u32 %v3890, 7
          %v3892 = vsub.s32 0, %v3891
          %v3893 = vrot.slane %v3888, %v3892
          %v3899 = vunpack.c.l.b16 %v3883
          %v3900 = vunpack.c.l.b16 %v3884
          %v3901 = vunpack.c.l.b16 %v3885
          %v3902 = vunpack.c.l.b16 %v3886
          %v3903 = vpack.c.b16 %v3900, %v3899
          %v3904 = vpack.c.b16 %v3902, %v3901
          %v3908 = vsel %vm1444, %v3887, 0
          %3910 = vmatprep.subr.bf16.mxu0 0
          %3911 = vmatpush1.bf16.msra.mxu0 0
          %3912 = vmatprep.subr.bf16.mxu0 0
          %3913 = vmatpush1.bf16.msra.mxu0 0
          %3914 = vmatprep.subr.bf16.mxu0 0
          %3915 = vmatpush1.bf16.msra.mxu0 0
          %3916 = vmatprep.subr.bf16.mxu0 0
          %3917 = vmatpush1.bf16.msra.mxu0 0
          %3918 = vmatprep.subr.bf16.mxu0 0
          %3919 = vmatpush1.bf16.msra.mxu0 0
          %3920 = vmatprep.subr.bf16.mxu0 0
          %3921 = vmatpush1.bf16.msra.mxu0 0
          %3922 = vmatprep.subr.bf16.mxu0 0
          %3923 = vmatpush1.bf16.msra.mxu0 %v3904
          %3924 = vmatprep.subr.bf16.mxu0 0
          %3925 = vmatpush1.bf16.msra.mxu0 %v3903
          %3926 = vmatprep.subr.bf16.mxu0 0
          %3927 = vmatpush2.bf16.msra.mxu0 0
          %3928 = vmatprep.subr.bf16.mxu0 0
          %3929 = vmatpush2.bf16.msra.mxu0 0
          %3930 = vmatprep.subr.bf16.mxu0 0
          %3931 = vmatpush2.bf16.msra.mxu0 0
          %3932 = vmatprep.subr.bf16.mxu0 0
          %3933 = vmatpush2.bf16.msra.mxu0 0
          %3934 = vmatprep.subr.bf16.mxu0 0
          %3935 = vmatpush2.bf16.msra.mxu0 0
          %3936 = vmatprep.subr.bf16.mxu0 0
          %3937 = vmatpush2.bf16.msra.mxu0 0
          %3938 = vmatprep.subr.bf16.mxu0 0
          %3939 = vmatpush2.bf16.msra.mxu0 0
          %3940 = vmatprep.subr.bf16.mxu0 0
          %3941 = vmatpush2.bf16.msra.mxu0 0
          %3942 = vmatprep.mubr.bf16.mxu0 0
          %3943 = vmatmul.mubr.bf16.gmra.mxu0 %v3908
          %v3944 = vpop.f32.mrf.mxu0
          %v3945 = vadd.f32 %v3893, %v3944
          %v3946 = vpop.f32.mrf.mxu0
          %v3947 = vpop.f32.mrf.mxu0
          %v3948 = vadd.f32 %v3893, %v3947
          %v3949 = vpop.f32.mrf.mxu0
          %3950 = vdwg.mxu0
          %v3951 = vmul.f32 %v3945, 0.5
          %v3952 = vmul.f32 %v3948, 0.5
          %v3953 = vmul.f32 %v3945, 0.70710677
          %v3954 = vmul.f32 %v3948, 0.70710677
          %v3955 = vand.u32 2147483647, %v3953
          %v3956 = vand.u32 2147483647, %v3954
          %v3957 = vmul.f32 %v3955, 0.3275911
          %v3958 = vmul.f32 %v3956, 0.3275911
          %v3959 = vadd.f32 %v3957, 1.0
          %v3960 = vadd.f32 %v3958, 1.0
          %v3961 = vrcp.pop %v3959
          %v3962 = vmul.f32 1.0, %v3961
          %v3963 = vrcp.pop %v3960
          %v3964 = vmul.f32 1.0, %v3963
          %v3965 = vmul.f32 %v3962, 1.0614054
          %v3966 = vmul.f32 %v3964, 1.0614054
          %v3967 = vadd.f32 %v3965, -1.4531521
          %v3968 = vadd.f32 %v3966, -1.4531521
          %v3969 = vmul.f32 %v3962, %v3967
          %v3970 = vmul.f32 %v3964, %v3968
          %v3971 = vadd.f32 %v3969, 1.4214138
          %v3972 = vadd.f32 %v3970, 1.4214138
          %v3973 = vmul.f32 %v3962, %v3971
          %v3974 = vmul.f32 %v3964, %v3972
          %v3975 = vadd.f32 %v3973, -0.28449672
          %v3976 = vadd.f32 %v3974, -0.28449672
          %v3977 = vmul.f32 %v3962, %v3975
          %v3978 = vmul.f32 %v3964, %v3976
          %v3979 = vadd.f32 %v3977, 0.2548296
          %v3980 = vadd.f32 %v3978, 0.2548296
          %v3981 = vmul.f32 %v3962, %v3979
          %v3982 = vmul.f32 %v3964, %v3980
          %v3983 = vsub.f32 0.0, %v3955
          %v3984 = vsub.f32 0.0, %v3956
          %v3985 = vmul.f32 %v3983, %v3955
          %v3986 = vmul.f32 %v3984, %v3956
          %v3987 = vmul.f32 %v3985, 1.442695
          %v3988 = vpow.pop %v3987
          %v3989 = vmul.f32 %v3986, 1.442695
          %v3990 = vpow.pop %v3989
          %v3991 = vmul.f32 %v3981, %v3988
          %v3992 = vmul.f32 %v3982, %v3990
          %v3993 = vsub.f32 1.0, %v3991
          %v3994 = vsub.f32 1.0, %v3992
          %vm3995 = vcmp.ge.f32.partialorder %v3953, 0.0
          %vm3996 = vcmp.ge.f32.partialorder %v3954, 0.0
          %v3997 = vsub.f32 0.0, %v3993
          %v3998 = vsub.f32 0.0, %v3994
          %v3999 = vsel %vm3995, %v3993, %v3997
          %v4000 = vsel %vm3996, %v3994, %v3998
          %v4001 = vadd.f32 %v3999, 1.0
          %v4002 = vadd.f32 %v4000, 1.0
          %v4003 = vmul.f32 %v3951, %v4001
          %v4004 = vmul.f32 %v3952, %v4002
          %v4005 = vld [vmem:[%s14] sm:$0xf]
          %v4006 = vpack.c.bf16 %v4004, %v4003
          %v4007 = vld [vmem:[%s13] sm:$0x1]
          %v4009 = vlaneseq
          %v4010 = vshrl.u32 %v4009, 7
          %v4011 = vsub.s32 0, %v4010
          %v4012 = vrot.slane %v4007, %v4011
          %v4015 = vsel %vm1498, %v4006, 0
          %v4018 = vsel %vm1623, %v4005, 0
          %4020 = vmatprep.subr.bf16.mxu0 0
          %4021 = vmatpush1.bf16.msra.mxu0 0
          %4022 = vmatprep.subr.bf16.mxu0 0
          %4023 = vmatpush1.bf16.msra.mxu0 0
          %4024 = vmatprep.subr.bf16.mxu0 0
          %4025 = vmatpush1.bf16.msra.mxu0 0
          %4026 = vmatprep.subr.bf16.mxu0 0
          %4027 = vmatpush1.bf16.msra.mxu0 0
          %4028 = vmatprep.subr.bf16.mxu0 0
          %4029 = vmatpush1.bf16.msra.mxu0 0
          %4030 = vmatprep.subr.bf16.mxu0 0
          %4031 = vmatpush1.bf16.msra.mxu0 0
          %4032 = vmatprep.subr.bf16.mxu0 0
          %4033 = vmatpush1.bf16.msra.mxu0 0
          %4034 = vmatprep.subr.bf16.mxu0 0
          %4035 = vmatpush1.bf16.msra.mxu0 %v4018
          %4036 = vmatprep.subr.bf16.mxu0 0
          %4037 = vmatpush2.bf16.msra.mxu0 0
          %4038 = vmatprep.subr.bf16.mxu0 0
          %4039 = vmatpush2.bf16.msra.mxu0 0
          %4040 = vmatprep.subr.bf16.mxu0 0
          %4041 = vmatpush2.bf16.msra.mxu0 0
          %4042 = vmatprep.subr.bf16.mxu0 0
          %4043 = vmatpush2.bf16.msra.mxu0 0
          %4044 = vmatprep.subr.bf16.mxu0 0
          %4045 = vmatpush2.bf16.msra.mxu0 0
          %4046 = vmatprep.subr.bf16.mxu0 0
          %4047 = vmatpush2.bf16.msra.mxu0 0
          %4048 = vmatprep.subr.bf16.mxu0 0
          %4049 = vmatpush2.bf16.msra.mxu0 0
          %4050 = vmatprep.subr.bf16.mxu0 0
          %4051 = vmatpush2.bf16.msra.mxu0 0
          %4052 = vmatprep.mubr.bf16.mxu0 0
          %4053 = vmatmul.mubr.bf16.gmra.mxu0 %v4015
          %v4054 = vpop.f32.mrf.mxu0
          %v4055 = vadd.f32 %v4012, %v4054
          %v4056 = vpop.f32.mrf.mxu0
          %v4057 = vpop.f32.mrf.mxu0
          %v4058 = vadd.f32 %v4012, %v4057
          %v4059 = vpop.f32.mrf.mxu0
          %4060 = vdwg.mxu0
          %4061 = vmax.xlane.f32.xlu0 %v4055
          %v4062 = vpop.xlane.xlu0 %4061
          %4063 = vmax.xlane.f32.xlu0 %v4058
          %v4064 = vpop.xlane.xlu0 %4063
          %v4065 = vsub.f32 %v4055, %v4062
          %v4066 = vsub.f32 %v4058, %v4064
          %v4067 = vmul.f32 %v4065, 1.442695
          %v4068 = vpow.pop %v4067
          %v4069 = vmul.f32 %v4066, 1.442695
          %v4070 = vpow.pop %v4069
          %4071 = vadd.xlane.f32.xlu0 %v4068
          %v4072 = vpop.xlane.xlu0 %4071
          %4073 = vadd.xlane.f32.xlu0 %v4070
          %v4074 = vpop.xlane.xlu0 %4073
          %v4075 = vlog2.pop %v4072
          %v4076 = vmul.f32 %v4075, 0.6931472
          %v4077 = vlog2.pop %v4074
          %v4078 = vmul.f32 %v4077, 0.6931472
          %v4079 = vsub.f32 %v4065, %v4076
          %v4080 = vsub.f32 %v4066, %v4078
          %4081 = vst [vmem:[#allocation15] sm:$0xff] %v4079
          %4082 = vst [vmem:[#allocation15 + $0x8] sm:$0xff] %v4080
        $region156: #{decoder_transformer_forward.1} parent=123 // pred_fallthru
          _
        // Predicated region
        $region157: #{decoder_transformer_forward.1} parent=123 // pred_check
          %p4083 = pneg %p702
        $region158: #{decoder_transformer_forward.1} parent=123 // pred_check_branch
          %4085 = sbr.rel (%p4083) target = $region160
        $region159: #{decoder_transformer_forward.1} parent=123 // pred_region
          %s4086 = smul.u32 2, %s50
          %s4088 = ssub.s32 256, 256
          %4089 = vsyncadd [#allocation6], %s4088
          %s4090 = smul.addr %s4086, 128
          %s4091 = scalar_lea.hbm %s26, %s4090
          %s4092 = sshll.u32 [#allocation15], 4
          %s4093 = int_to_ptr.vmem [resolvable:$true] %s4092
          %4098 = dma.vmem_to_hbm [thread:$0]  %s4093, 256, %s4091, [#allocation6], 128, 128, 8
        $region160: #{decoder_transformer_forward.1} parent=123 // pred_fallthru
          _
        // Predicated region
        $region161: #{decoder_transformer_forward.1} parent=123 // pred_check
          %p4099 = pneg %p702
        $region162: #{decoder_transformer_forward.1} parent=123 // pred_check_branch
          %4101 = sbr.rel (%p4099) target = $region164
        $region163: #{decoder_transformer_forward.1} parent=123 // pred_region
          %4102 = dma.done [#allocation6], 256
        $region164: #{decoder_transformer_forward.1} parent=123 // pred_fallthru
          _
      $region124: #{decoder_transformer_forward.1} parent=5 // pred_fallthru
        _
      %p4103 = scmp.le.s32.totalorder 2, %s41
      // Predicated region
      $region165: #{decoder_transformer_forward.1} parent=5 // pred_check
        %p4104 = pneg %p4103
      $region166: #{decoder_transformer_forward.1} parent=5 // pred_check_branch
        %4106 = sbr.rel (%p4104) target = $region168
      $region167: #{decoder_transformer_forward.1} parent=5 // pred_region
        %s4107 = ssub.s32 %s41, 2
      $region168: #{decoder_transformer_forward.1} parent=5 // pred_fallthru
        _
    $region6: #{decoder_transformer_forward.1} parent=1 // loop_footer
      %s45 = sadd.s32 1, %s41
    $region7: #{decoder_transformer_forward.1} parent=1 // loop_footer_branch
      %40 = sbr.rel target = $region3
    $region8: #{decoder_transformer_forward.1} parent=1 // loop_exit
      _
    %4108 = vsyncpa [#allocation5], 1
    %s4109 = scalar_lea.sflag [#allocation5], 1
    %4110 = vsyncpa %s4109, 1
    %4111 = vsyncpa [#allocation8], 1
    %s4112 = scalar_lea.sflag [#allocation8], 1
    %4113 = vsyncpa %s4112, 1
    %4114 = vsyncpa [#allocation11], 1
    %4115 = vsyncpa [#allocation14], 1
    %4116 = vsyncpa [#allocation6], 1
    %s4117 = scalar_lea.sflag [#allocation6], 1
    %4118 = vsyncpa %s4117, 1

</llo_original>
